<compile_context>
chip_gen: v6e
topology: v6e:2x2x1
jax: 0.10.0
libtpu: 0.0.40
codegen_flags: <defaults>
</compile_context>

<pallas_src>
import numpy as np
import jax
import jax.numpy as jnp
from jax import lax
from jax.experimental import pallas as pl
from jax.experimental.pallas import tpu as pltpu


def _disc_kernel(x_ref, wih_ref, whh_ref, b_ref, wlin_ref, blin_ref, y_ref):
    """Single invocation: full LSTM recurrence + Linear(H,1) + sigmoid head."""
    B, T, D = x_ref.shape
    H = whh_ref.shape[0]

    x = x_ref[...]            # (B, T, D)
    wih = wih_ref[...]        # (D, 4H)
    whh = whh_ref[...]        # (H, 4H)
    bias = b_ref[...]         # (1, 4H)  == b_ih + b_hh
    wlin = wlin_ref[...]      # (1, H)
    blin = blin_ref[0]        # scalar (SMEM)

    # Hoisted input projection for ALL timesteps: one small matmul per batch row
    # (B=2), done once, off the serial recurrence path.  PyTorch gate order
    # [i, f, g, o] is preserved in the 4H axis.
    gx = jnp.stack(
        [jnp.dot(x[b], wih, preferred_element_type=jnp.float32) for b in range(B)],
        axis=1,
    ) + bias                                        # (T, B, 4H), time-major

    # Serial recurrence, fully unrolled (T is small and static).  Only the
    # h @ W_hh^T matmul + gate nonlinearities remain per step.
    h = jnp.zeros((B, H), jnp.float32)
    c = jnp.zeros((B, H), jnp.float32)
    hs = []
    for t in range(T):
        gates = gx[t] + jnp.dot(h, whh, preferred_element_type=jnp.float32)  # (B, 4H)
        i_g = jax.nn.sigmoid(gates[:, 0 * H:1 * H])
        f_g = jax.nn.sigmoid(gates[:, 1 * H:2 * H])
        g_g = jnp.tanh(gates[:, 2 * H:3 * H])
        o_g = jax.nn.sigmoid(gates[:, 3 * H:4 * H])
        c = f_g * c + i_g * g_g
        h = o_g * jnp.tanh(c)
        hs.append(h)

    hs = jnp.stack(hs, axis=1)                       # (B, T, H)

    # Linear(H, 1) + sigmoid head, applied once over all timesteps as a lane
    # reduction (XLU) instead of a 1-column-wide MXU matmul per step.
    logits = jnp.sum(hs * wlin, axis=-1) + blin      # (B, T)
    y_ref[...] = jax.nn.sigmoid(logits)              # single lane-contiguous store


def discriminator_forward(x, params):
    """x: (B, T, D_in) float32 (batch_first, like PyTorch). Returns (B, T, 1)."""
    B, T, D = x.shape
    H = params["w_hh"].shape[1]

    wih_t = jnp.transpose(params["w_ih"], (1, 0))           # (D, 4H)
    whh_t = jnp.transpose(params["w_hh"], (1, 0))           # (H, 4H)
    bias = (params["b_ih"] + params["b_hh"]).reshape(1, 4 * H)
    wlin_row = params["w_lin"].reshape(1, H)                 # (1, H)
    blin = params["b_lin"].reshape(1).astype(jnp.float32)    # (1,) -> SMEM scalar

    y2d = pl.pallas_call(
        _disc_kernel,
        out_shape=jax.ShapeDtypeStruct((B, T), jnp.float32),
        in_specs=[
            pl.BlockSpec(memory_space=pltpu.MemorySpace.VMEM),   # x (B,T,D)
            pl.BlockSpec(memory_space=pltpu.MemorySpace.VMEM),   # W_ih^T (D,4H)
            pl.BlockSpec(memory_space=pltpu.MemorySpace.VMEM),   # W_hh^T (H,4H)
            pl.BlockSpec(memory_space=pltpu.MemorySpace.VMEM),   # fused LSTM bias (1,4H)
            pl.BlockSpec(memory_space=pltpu.MemorySpace.VMEM),   # W_lin row (1,H)
            pl.BlockSpec(memory_space=pltpu.MemorySpace.SMEM),   # b_lin scalar (1,)
        ],
        out_specs=pl.BlockSpec(memory_space=pltpu.MemorySpace.VMEM),
    )(x.astype(jnp.float32), wih_t, whh_t, bias, wlin_row, blin)

    return y2d[..., None]                                        # (B, T, 1)


def reference_forward(x, params):
    """Pure-JAX reference of the PyTorch forward (lax.scan LSTM)."""
    B, T, D = x.shape
    H = params["w_hh"].shape[1]
    w_ih, w_hh = params["w_ih"], params["w_hh"]
    b = params["b_ih"] + params["b_hh"]

    def step(carry, xt):
        h, c = carry
        gates = xt @ w_ih.T + h @ w_hh.T + b
        i_g, f_g, g_g, o_g = jnp.split(gates, 4, axis=-1)
        i_g, f_g, o_g = jax.nn.sigmoid(i_g), jax.nn.sigmoid(f_g), jax.nn.sigmoid(o_g)
        g_g = jnp.tanh(g_g)
        c_new = f_g * c + i_g * g_g
        h_new = o_g * jnp.tanh(c_new)
        return (h_new, c_new), h_new

    h0 = jnp.zeros((B, H), jnp.float32)
    c0 = jnp.zeros((B, H), jnp.float32)
    _, hs = lax.scan(step, (h0, c0), jnp.transpose(x, (1, 0, 2)))  # (T, B, H)
    h = jnp.transpose(hs, (1, 0, 2))                               # (B, T, H)
    logits = h @ params["w_lin"].T + params["b_lin"]
    return jax.nn.sigmoid(logits)


def init_params(key, seq_len, hidden_dim):
    """Deterministic init mimicking PyTorch's U(-1/sqrt(H), 1/sqrt(H))."""
    ks = jax.random.split(key, 6)
    s = 1.0 / np.sqrt(hidden_dim)
    u = lambda k, shape: jax.random.uniform(k, shape, jnp.float32, -s, s)
    return {
        "w_ih": u(ks[0], (4 * hidden_dim, seq_len)),
        "w_hh": u(ks[1], (4 * hidden_dim, hidden_dim)),
        "b_ih": u(ks[2], (4 * hidden_dim,)),
        "b_hh": u(ks[3], (4 * hidden_dim,)),
        "w_lin": u(ks[4], (1, hidden_dim)),
        "b_lin": u(ks[5], (1,)),
    }


if __name__ == "__main__":
    SEQ_LEN = 8      # LSTM input feature size (PyTorch module's `seq_len` arg)
    HIDDEN = 32      # hidden_dim
    BATCH = 2
    TIME = 16        # number of LSTM time steps

    key = jax.random.PRNGKey(0)
    k_param, k_x = jax.random.split(key)
    params = init_params(k_param, SEQ_LEN, HIDDEN)
    x = jax.random.normal(k_x, (BATCH, TIME, SEQ_LEN), jnp.float32)

    y = discriminator_forward(x, params)
    y = jax.block_until_ready(y)

    y_ref = jax.block_until_ready(reference_forward(x, params))
    np.testing.assert_allclose(np.asarray(y), np.asarray(y_ref), rtol=1e-5, atol=1e-5)
    assert y.shape == (BATCH, TIME, 1)

    print("KERNEL_OK")
</pallas_src>

<mosaic_0001>
module attributes {stable_mosaic.version = 11 : i64} {
  func.func @_disc_kernel(%arg0: memref<2x16x8xf32, #tpu.memory_space<vmem>>, %arg1: memref<8x128xf32, #tpu.memory_space<vmem>>, %arg2: memref<32x128xf32, #tpu.memory_space<vmem>>, %arg3: memref<1x128xf32, #tpu.memory_space<vmem>>, %arg4: memref<1x32xf32, #tpu.memory_space<vmem>>, %arg5: memref<1xf32, #tpu.memory_space<smem>>, %arg6: memref<2x16xf32, #tpu.memory_space<vmem>>) attributes {dimension_semantics = [], scalar_prefetch = 0 : i64, scratch_operands = 0 : i64, tpu.core_type = #tpu.core_type<tc>} {
    %c0 = arith.constant 0 : index
    %c0_0 = arith.constant 0 : index
    %c0_1 = arith.constant 0 : index
    %0 = vector.load %arg0[%c0, %c0_0, %c0_1] : memref<2x16x8xf32, #tpu.memory_space<vmem>>, vector<2x16x8xf32>
    %c0_2 = arith.constant 0 : index
    %c0_3 = arith.constant 0 : index
    %1 = vector.load %arg1[%c0_2, %c0_3] : memref<8x128xf32, #tpu.memory_space<vmem>>, vector<8x128xf32>
    %c0_4 = arith.constant 0 : index
    %c0_5 = arith.constant 0 : index
    %2 = vector.load %arg2[%c0_4, %c0_5] : memref<32x128xf32, #tpu.memory_space<vmem>>, vector<32x128xf32>
    %c0_6 = arith.constant 0 : index
    %c0_7 = arith.constant 0 : index
    %3 = vector.load %arg3[%c0_6, %c0_7] : memref<1x128xf32, #tpu.memory_space<vmem>>, vector<1x128xf32>
    %c0_8 = arith.constant 0 : index
    %c0_9 = arith.constant 0 : index
    %4 = vector.load %arg4[%c0_8, %c0_9] : memref<1x32xf32, #tpu.memory_space<vmem>>, vector<1x32xf32>
    %c0_10 = arith.constant 0 : index
    %5 = memref.load %arg5[%c0_10] : memref<1xf32, #tpu.memory_space<smem>>
    %6 = vector.extract_strided_slice %0 {offsets = [0, 0, 0], sizes = [1, 16, 8], strides = [1, 1, 1]} : vector<2x16x8xf32> to vector<1x16x8xf32>
    %7 = vector.shape_cast %6 : vector<1x16x8xf32> to vector<16x8xf32>
    %cst = arith.constant dense<0.000000e+00> : vector<16x128xf32>
    %8 = tpu.matmul %7, %1, %cst {dimension_numbers = #tpu.dot_dimension_numbers<[1], [0], [0], [1], [0, 0, 1, 1], [], []>} : vector<16x8xf32>, vector<8x128xf32>, vector<16x128xf32> -> vector<16x128xf32>
    %9 = vector.extract_strided_slice %0 {offsets = [1, 0, 0], sizes = [1, 16, 8], strides = [1, 1, 1]} : vector<2x16x8xf32> to vector<1x16x8xf32>
    %10 = vector.shape_cast %9 : vector<1x16x8xf32> to vector<16x8xf32>
    %cst_11 = arith.constant dense<0.000000e+00> : vector<16x128xf32>
    %11 = tpu.matmul %10, %1, %cst_11 {dimension_numbers = #tpu.dot_dimension_numbers<[1], [0], [0], [1], [0, 0, 1, 1], [], []>} : vector<16x8xf32>, vector<8x128xf32>, vector<16x128xf32> -> vector<16x128xf32>
    %12 = vector.shape_cast %8 : vector<16x128xf32> to vector<16x1x128xf32>
    %13 = vector.shape_cast %11 : vector<16x128xf32> to vector<16x1x128xf32>
    %14 = tpu.concatenate %12, %13 in 1 : vector<16x1x128xf32>, vector<16x1x128xf32> -> vector<16x2x128xf32>
    %15 = vector.shape_cast %3 : vector<1x128xf32> to vector<1x1x128xf32>
    %16 = vector.broadcast %15 : vector<1x1x128xf32> to vector<16x2x128xf32>
    %17 = arith.addf %14, %16 : vector<16x2x128xf32>
    %cst_12 = arith.constant 0.000000e+00 : f32
    %18 = vector.broadcast %cst_12 : f32 to vector<2x32xf32>
    %cst_13 = arith.constant 0.000000e+00 : f32
    %19 = vector.broadcast %cst_13 : f32 to vector<2x32xf32>
    %20 = vector.extract_strided_slice %17 {offsets = [0, 0, 0], sizes = [1, 2, 128], strides = [1, 1, 1]} : vector<16x2x128xf32> to vector<1x2x128xf32>
    %21 = vector.shape_cast %20 : vector<1x2x128xf32> to vector<2x128xf32>
    %cst_14 = arith.constant dense<0.000000e+00> : vector<2x128xf32>
    %22 = tpu.matmul %18, %2, %cst_14 {dimension_numbers = #tpu.dot_dimension_numbers<[1], [0], [0], [1], [0, 0, 1, 1], [], []>} : vector<2x32xf32>, vector<32x128xf32>, vector<2x128xf32> -> vector<2x128xf32>
    %23 = arith.addf %21, %22 : vector<2x128xf32>
    %24 = vector.extract_strided_slice %23 {offsets = [0, 0], sizes = [2, 32], strides = [1, 1]} : vector<2x128xf32> to vector<2x32xf32>
    %25 = arith.negf %24 : vector<2x32xf32>
    %26 = math.exp %25 : vector<2x32xf32>
    %cst_15 = arith.constant 1.000000e+00 : f32
    %27 = vector.broadcast %cst_15 : f32 to vector<2x32xf32>
    %28 = arith.addf %27, %26 : vector<2x32xf32>
    %29 = arith.divf %27, %28 : vector<2x32xf32>
    %30 = vector.extract_strided_slice %23 {offsets = [0, 32], sizes = [2, 32], strides = [1, 1]} : vector<2x128xf32> to vector<2x32xf32>
    %31 = arith.negf %30 : vector<2x32xf32>
    %32 = math.exp %31 : vector<2x32xf32>
    %cst_16 = arith.constant 1.000000e+00 : f32
    %33 = vector.broadcast %cst_16 : f32 to vector<2x32xf32>
    %34 = arith.addf %33, %32 : vector<2x32xf32>
    %35 = arith.divf %33, %34 : vector<2x32xf32>
    %36 = vector.extract_strided_slice %23 {offsets = [0, 64], sizes = [2, 32], strides = [1, 1]} : vector<2x128xf32> to vector<2x32xf32>
    %37 = math.tanh %36 : vector<2x32xf32>
    %38 = vector.extract_strided_slice %23 {offsets = [0, 96], sizes = [2, 32], strides = [1, 1]} : vector<2x128xf32> to vector<2x32xf32>
    %39 = arith.negf %38 : vector<2x32xf32>
    %40 = math.exp %39 : vector<2x32xf32>
    %cst_17 = arith.constant 1.000000e+00 : f32
    %41 = vector.broadcast %cst_17 : f32 to vector<2x32xf32>
    %42 = arith.addf %41, %40 : vector<2x32xf32>
    %43 = arith.divf %41, %42 : vector<2x32xf32>
    %44 = arith.mulf %35, %19 : vector<2x32xf32>
    %45 = arith.mulf %29, %37 : vector<2x32xf32>
    %46 = arith.addf %44, %45 : vector<2x32xf32>
    %47 = math.tanh %46 : vector<2x32xf32>
    %48 = arith.mulf %43, %47 : vector<2x32xf32>
    %49 = vector.extract_strided_slice %17 {offsets = [1, 0, 0], sizes = [1, 2, 128], strides = [1, 1, 1]} : vector<16x2x128xf32> to vector<1x2x128xf32>
    %50 = vector.shape_cast %49 : vector<1x2x128xf32> to vector<2x128xf32>
    %cst_18 = arith.constant dense<0.000000e+00> : vector<2x128xf32>
    %51 = tpu.matmul %48, %2, %cst_18 {dimension_numbers = #tpu.dot_dimension_numbers<[1], [0], [0], [1], [0, 0, 1, 1], [], []>} : vector<2x32xf32>, vector<32x128xf32>, vector<2x128xf32> -> vector<2x128xf32>
    %52 = arith.addf %50, %51 : vector<2x128xf32>
    %53 = vector.extract_strided_slice %52 {offsets = [0, 0], sizes = [2, 32], strides = [1, 1]} : vector<2x128xf32> to vector<2x32xf32>
    %54 = arith.negf %53 : vector<2x32xf32>
    %55 = math.exp %54 : vector<2x32xf32>
    %cst_19 = arith.constant 1.000000e+00 : f32
    %56 = vector.broadcast %cst_19 : f32 to vector<2x32xf32>
    %57 = arith.addf %56, %55 : vector<2x32xf32>
    %58 = arith.divf %56, %57 : vector<2x32xf32>
    %59 = vector.extract_strided_slice %52 {offsets = [0, 32], sizes = [2, 32], strides = [1, 1]} : vector<2x128xf32> to vector<2x32xf32>
    %60 = arith.negf %59 : vector<2x32xf32>
    %61 = math.exp %60 : vector<2x32xf32>
    %cst_20 = arith.constant 1.000000e+00 : f32
    %62 = vector.broadcast %cst_20 : f32 to vector<2x32xf32>
    %63 = arith.addf %62, %61 : vector<2x32xf32>
    %64 = arith.divf %62, %63 : vector<2x32xf32>
    %65 = vector.extract_strided_slice %52 {offsets = [0, 64], sizes = [2, 32], strides = [1, 1]} : vector<2x128xf32> to vector<2x32xf32>
    %66 = math.tanh %65 : vector<2x32xf32>
    %67 = vector.extract_strided_slice %52 {offsets = [0, 96], sizes = [2, 32], strides = [1, 1]} : vector<2x128xf32> to vector<2x32xf32>
    %68 = arith.negf %67 : vector<2x32xf32>
    %69 = math.exp %68 : vector<2x32xf32>
    %cst_21 = arith.constant 1.000000e+00 : f32
    %70 = vector.broadcast %cst_21 : f32 to vector<2x32xf32>
    %71 = arith.addf %70, %69 : vector<2x32xf32>
    %72 = arith.divf %70, %71 : vector<2x32xf32>
    %73 = arith.mulf %64, %46 : vector<2x32xf32>
    %74 = arith.mulf %58, %66 : vector<2x32xf32>
    %75 = arith.addf %73, %74 : vector<2x32xf32>
    %76 = math.tanh %75 : vector<2x32xf32>
    %77 = arith.mulf %72, %76 : vector<2x32xf32>
    %78 = vector.extract_strided_slice %17 {offsets = [2, 0, 0], sizes = [1, 2, 128], strides = [1, 1, 1]} : vector<16x2x128xf32> to vector<1x2x128xf32>
    %79 = vector.shape_cast %78 : vector<1x2x128xf32> to vector<2x128xf32>
    %cst_22 = arith.constant dense<0.000000e+00> : vector<2x128xf32>
    %80 = tpu.matmul %77, %2, %cst_22 {dimension_numbers = #tpu.dot_dimension_numbers<[1], [0], [0], [1], [0, 0, 1, 1], [], []>} : vector<2x32xf32>, vector<32x128xf32>, vector<2x128xf32> -> vector<2x128xf32>
    %81 = arith.addf %79, %80 : vector<2x128xf32>
    %82 = vector.extract_strided_slice %81 {offsets = [0, 0], sizes = [2, 32], strides = [1, 1]} : vector<2x128xf32> to vector<2x32xf32>
    %83 = arith.negf %82 : vector<2x32xf32>
    %84 = math.exp %83 : vector<2x32xf32>
    %cst_23 = arith.constant 1.000000e+00 : f32
    %85 = vector.broadcast %cst_23 : f32 to vector<2x32xf32>
    %86 = arith.addf %85, %84 : vector<2x32xf32>
    %87 = arith.divf %85, %86 : vector<2x32xf32>
    %88 = vector.extract_strided_slice %81 {offsets = [0, 32], sizes = [2, 32], strides = [1, 1]} : vector<2x128xf32> to vector<2x32xf32>
    %89 = arith.negf %88 : vector<2x32xf32>
    %90 = math.exp %89 : vector<2x32xf32>
    %cst_24 = arith.constant 1.000000e+00 : f32
    %91 = vector.broadcast %cst_24 : f32 to vector<2x32xf32>
    %92 = arith.addf %91, %90 : vector<2x32xf32>
    %93 = arith.divf %91, %92 : vector<2x32xf32>
    %94 = vector.extract_strided_slice %81 {offsets = [0, 64], sizes = [2, 32], strides = [1, 1]} : vector<2x128xf32> to vector<2x32xf32>
    %95 = math.tanh %94 : vector<2x32xf32>
    %96 = vector.extract_strided_slice %81 {offsets = [0, 96], sizes = [2, 32], strides = [1, 1]} : vector<2x128xf32> to vector<2x32xf32>
    %97 = arith.negf %96 : vector<2x32xf32>
    %98 = math.exp %97 : vector<2x32xf32>
    %cst_25 = arith.constant 1.000000e+00 : f32
    %99 = vector.broadcast %cst_25 : f32 to vector<2x32xf32>
    %100 = arith.addf %99, %98 : vector<2x32xf32>
    %101 = arith.divf %99, %100 : vector<2x32xf32>
    %102 = arith.mulf %93, %75 : vector<2x32xf32>
    %103 = arith.mulf %87, %95 : vector<2x32xf32>
    %104 = arith.addf %102, %103 : vector<2x32xf32>
    %105 = math.tanh %104 : vector<2x32xf32>
    %106 = arith.mulf %101, %105 : vector<2x32xf32>
    %107 = vector.extract_strided_slice %17 {offsets = [3, 0, 0], sizes = [1, 2, 128], strides = [1, 1, 1]} : vector<16x2x128xf32> to vector<1x2x128xf32>
    %108 = vector.shape_cast %107 : vector<1x2x128xf32> to vector<2x128xf32>
    %cst_26 = arith.constant dense<0.000000e+00> : vector<2x128xf32>
    %109 = tpu.matmul %106, %2, %cst_26 {dimension_numbers = #tpu.dot_dimension_numbers<[1], [0], [0], [1], [0, 0, 1, 1], [], []>} : vector<2x32xf32>, vector<32x128xf32>, vector<2x128xf32> -> vector<2x128xf32>
    %110 = arith.addf %108, %109 : vector<2x128xf32>
    %111 = vector.extract_strided_slice %110 {offsets = [0, 0], sizes = [2, 32], strides = [1, 1]} : vector<2x128xf32> to vector<2x32xf32>
    %112 = arith.negf %111 : vector<2x32xf32>
    %113 = math.exp %112 : vector<2x32xf32>
    %cst_27 = arith.constant 1.000000e+00 : f32
    %114 = vector.broadcast %cst_27 : f32 to vector<2x32xf32>
    %115 = arith.addf %114, %113 : vector<2x32xf32>
    %116 = arith.divf %114, %115 : vector<2x32xf32>
    %117 = vector.extract_strided_slice %110 {offsets = [0, 32], sizes = [2, 32], strides = [1, 1]} : vector<2x128xf32> to vector<2x32xf32>
    %118 = arith.negf %117 : vector<2x32xf32>
    %119 = math.exp %118 : vector<2x32xf32>
    %cst_28 = arith.constant 1.000000e+00 : f32
    %120 = vector.broadcast %cst_28 : f32 to vector<2x32xf32>
    %121 = arith.addf %120, %119 : vector<2x32xf32>
    %122 = arith.divf %120, %121 : vector<2x32xf32>
    %123 = vector.extract_strided_slice %110 {offsets = [0, 64], sizes = [2, 32], strides = [1, 1]} : vector<2x128xf32> to vector<2x32xf32>
    %124 = math.tanh %123 : vector<2x32xf32>
    %125 = vector.extract_strided_slice %110 {offsets = [0, 96], sizes = [2, 32], strides = [1, 1]} : vector<2x128xf32> to vector<2x32xf32>
    %126 = arith.negf %125 : vector<2x32xf32>
    %127 = math.exp %126 : vector<2x32xf32>
    %cst_29 = arith.constant 1.000000e+00 : f32
    %128 = vector.broadcast %cst_29 : f32 to vector<2x32xf32>
    %129 = arith.addf %128, %127 : vector<2x32xf32>
    %130 = arith.divf %128, %129 : vector<2x32xf32>
    %131 = arith.mulf %122, %104 : vector<2x32xf32>
    %132 = arith.mulf %116, %124 : vector<2x32xf32>
    %133 = arith.addf %131, %132 : vector<2x32xf32>
    %134 = math.tanh %133 : vector<2x32xf32>
    %135 = arith.mulf %130, %134 : vector<2x32xf32>
    %136 = vector.extract_strided_slice %17 {offsets = [4, 0, 0], sizes = [1, 2, 128], strides = [1, 1, 1]} : vector<16x2x128xf32> to vector<1x2x128xf32>
    %137 = vector.shape_cast %136 : vector<1x2x128xf32> to vector<2x128xf32>
    %cst_30 = arith.constant dense<0.000000e+00> : vector<2x128xf32>
    %138 = tpu.matmul %135, %2, %cst_30 {dimension_numbers = #tpu.dot_dimension_numbers<[1], [0], [0], [1], [0, 0, 1, 1], [], []>} : vector<2x32xf32>, vector<32x128xf32>, vector<2x128xf32> -> vector<2x128xf32>
    %139 = arith.addf %137, %138 : vector<2x128xf32>
    %140 = vector.extract_strided_slice %139 {offsets = [0, 0], sizes = [2, 32], strides = [1, 1]} : vector<2x128xf32> to vector<2x32xf32>
    %141 = arith.negf %140 : vector<2x32xf32>
    %142 = math.exp %141 : vector<2x32xf32>
    %cst_31 = arith.constant 1.000000e+00 : f32
    %143 = vector.broadcast %cst_31 : f32 to vector<2x32xf32>
    %144 = arith.addf %143, %142 : vector<2x32xf32>
    %145 = arith.divf %143, %144 : vector<2x32xf32>
    %146 = vector.extract_strided_slice %139 {offsets = [0, 32], sizes = [2, 32], strides = [1, 1]} : vector<2x128xf32> to vector<2x32xf32>
    %147 = arith.negf %146 : vector<2x32xf32>
    %148 = math.exp %147 : vector<2x32xf32>
    %cst_32 = arith.constant 1.000000e+00 : f32
    %149 = vector.broadcast %cst_32 : f32 to vector<2x32xf32>
    %150 = arith.addf %149, %148 : vector<2x32xf32>
    %151 = arith.divf %149, %150 : vector<2x32xf32>
    %152 = vector.extract_strided_slice %139 {offsets = [0, 64], sizes = [2, 32], strides = [1, 1]} : vector<2x128xf32> to vector<2x32xf32>
    %153 = math.tanh %152 : vector<2x32xf32>
    %154 = vector.extract_strided_slice %139 {offsets = [0, 96], sizes = [2, 32], strides = [1, 1]} : vector<2x128xf32> to vector<2x32xf32>
    %155 = arith.negf %154 : vector<2x32xf32>
    %156 = math.exp %155 : vector<2x32xf32>
    %cst_33 = arith.constant 1.000000e+00 : f32
    %157 = vector.broadcast %cst_33 : f32 to vector<2x32xf32>
    %158 = arith.addf %157, %156 : vector<2x32xf32>
    %159 = arith.divf %157, %158 : vector<2x32xf32>
    %160 = arith.mulf %151, %133 : vector<2x32xf32>
    %161 = arith.mulf %145, %153 : vector<2x32xf32>
    %162 = arith.addf %160, %161 : vector<2x32xf32>
    %163 = math.tanh %162 : vector<2x32xf32>
    %164 = arith.mulf %159, %163 : vector<2x32xf32>
    %165 = vector.extract_strided_slice %17 {offsets = [5, 0, 0], sizes = [1, 2, 128], strides = [1, 1, 1]} : vector<16x2x128xf32> to vector<1x2x128xf32>
    %166 = vector.shape_cast %165 : vector<1x2x128xf32> to vector<2x128xf32>
    %cst_34 = arith.constant dense<0.000000e+00> : vector<2x128xf32>
    %167 = tpu.matmul %164, %2, %cst_34 {dimension_numbers = #tpu.dot_dimension_numbers<[1], [0], [0], [1], [0, 0, 1, 1], [], []>} : vector<2x32xf32>, vector<32x128xf32>, vector<2x128xf32> -> vector<2x128xf32>
    %168 = arith.addf %166, %167 : vector<2x128xf32>
    %169 = vector.extract_strided_slice %168 {offsets = [0, 0], sizes = [2, 32], strides = [1, 1]} : vector<2x128xf32> to vector<2x32xf32>
    %170 = arith.negf %169 : vector<2x32xf32>
    %171 = math.exp %170 : vector<2x32xf32>
    %cst_35 = arith.constant 1.000000e+00 : f32
    %172 = vector.broadcast %cst_35 : f32 to vector<2x32xf32>
    %173 = arith.addf %172, %171 : vector<2x32xf32>
    %174 = arith.divf %172, %173 : vector<2x32xf32>
    %175 = vector.extract_strided_slice %168 {offsets = [0, 32], sizes = [2, 32], strides = [1, 1]} : vector<2x128xf32> to vector<2x32xf32>
    %176 = arith.negf %175 : vector<2x32xf32>
    %177 = math.exp %176 : vector<2x32xf32>
    %cst_36 = arith.constant 1.000000e+00 : f32
    %178 = vector.broadcast %cst_36 : f32 to vector<2x32xf32>
    %179 = arith.addf %178, %177 : vector<2x32xf32>
    %180 = arith.divf %178, %179 : vector<2x32xf32>
    %181 = vector.extract_strided_slice %168 {offsets = [0, 64], sizes = [2, 32], strides = [1, 1]} : vector<2x128xf32> to vector<2x32xf32>
    %182 = math.tanh %181 : vector<2x32xf32>
    %183 = vector.extract_strided_slice %168 {offsets = [0, 96], sizes = [2, 32], strides = [1, 1]} : vector<2x128xf32> to vector<2x32xf32>
    %184 = arith.negf %183 : vector<2x32xf32>
    %185 = math.exp %184 : vector<2x32xf32>
    %cst_37 = arith.constant 1.000000e+00 : f32
    %186 = vector.broadcast %cst_37 : f32 to vector<2x32xf32>
    %187 = arith.addf %186, %185 : vector<2x32xf32>
    %188 = arith.divf %186, %187 : vector<2x32xf32>
    %189 = arith.mulf %180, %162 : vector<2x32xf32>
    %190 = arith.mulf %174, %182 : vector<2x32xf32>
    %191 = arith.addf %189, %190 : vector<2x32xf32>
    %192 = math.tanh %191 : vector<2x32xf32>
    %193 = arith.mulf %188, %192 : vector<2x32xf32>
    %194 = vector.extract_strided_slice %17 {offsets = [6, 0, 0], sizes = [1, 2, 128], strides = [1, 1, 1]} : vector<16x2x128xf32> to vector<1x2x128xf32>
    %195 = vector.shape_cast %194 : vector<1x2x128xf32> to vector<2x128xf32>
    %cst_38 = arith.constant dense<0.000000e+00> : vector<2x128xf32>
    %196 = tpu.matmul %193, %2, %cst_38 {dimension_numbers = #tpu.dot_dimension_numbers<[1], [0], [0], [1], [0, 0, 1, 1], [], []>} : vector<2x32xf32>, vector<32x128xf32>, vector<2x128xf32> -> vector<2x128xf32>
    %197 = arith.addf %195, %196 : vector<2x128xf32>
    %198 = vector.extract_strided_slice %197 {offsets = [0, 0], sizes = [2, 32], strides = [1, 1]} : vector<2x128xf32> to vector<2x32xf32>
    %199 = arith.negf %198 : vector<2x32xf32>
    %200 = math.exp %199 : vector<2x32xf32>
    %cst_39 = arith.constant 1.000000e+00 : f32
    %201 = vector.broadcast %cst_39 : f32 to vector<2x32xf32>
    %202 = arith.addf %201, %200 : vector<2x32xf32>
    %203 = arith.divf %201, %202 : vector<2x32xf32>
    %204 = vector.extract_strided_slice %197 {offsets = [0, 32], sizes = [2, 32], strides = [1, 1]} : vector<2x128xf32> to vector<2x32xf32>
    %205 = arith.negf %204 : vector<2x32xf32>
    %206 = math.exp %205 : vector<2x32xf32>
    %cst_40 = arith.constant 1.000000e+00 : f32
    %207 = vector.broadcast %cst_40 : f32 to vector<2x32xf32>
    %208 = arith.addf %207, %206 : vector<2x32xf32>
    %209 = arith.divf %207, %208 : vector<2x32xf32>
    %210 = vector.extract_strided_slice %197 {offsets = [0, 64], sizes = [2, 32], strides = [1, 1]} : vector<2x128xf32> to vector<2x32xf32>
    %211 = math.tanh %210 : vector<2x32xf32>
    %212 = vector.extract_strided_slice %197 {offsets = [0, 96], sizes = [2, 32], strides = [1, 1]} : vector<2x128xf32> to vector<2x32xf32>
    %213 = arith.negf %212 : vector<2x32xf32>
    %214 = math.exp %213 : vector<2x32xf32>
    %cst_41 = arith.constant 1.000000e+00 : f32
    %215 = vector.broadcast %cst_41 : f32 to vector<2x32xf32>
    %216 = arith.addf %215, %214 : vector<2x32xf32>
    %217 = arith.divf %215, %216 : vector<2x32xf32>
    %218 = arith.mulf %209, %191 : vector<2x32xf32>
    %219 = arith.mulf %203, %211 : vector<2x32xf32>
    %220 = arith.addf %218, %219 : vector<2x32xf32>
    %221 = math.tanh %220 : vector<2x32xf32>
    %222 = arith.mulf %217, %221 : vector<2x32xf32>
    %223 = vector.extract_strided_slice %17 {offsets = [7, 0, 0], sizes = [1, 2, 128], strides = [1, 1, 1]} : vector<16x2x128xf32> to vector<1x2x128xf32>
    %224 = vector.shape_cast %223 : vector<1x2x128xf32> to vector<2x128xf32>
    %cst_42 = arith.constant dense<0.000000e+00> : vector<2x128xf32>
    %225 = tpu.matmul %222, %2, %cst_42 {dimension_numbers = #tpu.dot_dimension_numbers<[1], [0], [0], [1], [0, 0, 1, 1], [], []>} : vector<2x32xf32>, vector<32x128xf32>, vector<2x128xf32> -> vector<2x128xf32>
    %226 = arith.addf %224, %225 : vector<2x128xf32>
    %227 = vector.extract_strided_slice %226 {offsets = [0, 0], sizes = [2, 32], strides = [1, 1]} : vector<2x128xf32> to vector<2x32xf32>
    %228 = arith.negf %227 : vector<2x32xf32>
    %229 = math.exp %228 : vector<2x32xf32>
    %cst_43 = arith.constant 1.000000e+00 : f32
    %230 = vector.broadcast %cst_43 : f32 to vector<2x32xf32>
    %231 = arith.addf %230, %229 : vector<2x32xf32>
    %232 = arith.divf %230, %231 : vector<2x32xf32>
    %233 = vector.extract_strided_slice %226 {offsets = [0, 32], sizes = [2, 32], strides = [1, 1]} : vector<2x128xf32> to vector<2x32xf32>
    %234 = arith.negf %233 : vector<2x32xf32>
    %235 = math.exp %234 : vector<2x32xf32>
    %cst_44 = arith.constant 1.000000e+00 : f32
    %236 = vector.broadcast %cst_44 : f32 to vector<2x32xf32>
    %237 = arith.addf %236, %235 : vector<2x32xf32>
    %238 = arith.divf %236, %237 : vector<2x32xf32>
    %239 = vector.extract_strided_slice %226 {offsets = [0, 64], sizes = [2, 32], strides = [1, 1]} : vector<2x128xf32> to vector<2x32xf32>
    %240 = math.tanh %239 : vector<2x32xf32>
    %241 = vector.extract_strided_slice %226 {offsets = [0, 96], sizes = [2, 32], strides = [1, 1]} : vector<2x128xf32> to vector<2x32xf32>
    %242 = arith.negf %241 : vector<2x32xf32>
    %243 = math.exp %242 : vector<2x32xf32>
    %cst_45 = arith.constant 1.000000e+00 : f32
    %244 = vector.broadcast %cst_45 : f32 to vector<2x32xf32>
    %245 = arith.addf %244, %243 : vector<2x32xf32>
    %246 = arith.divf %244, %245 : vector<2x32xf32>
    %247 = arith.mulf %238, %220 : vector<2x32xf32>
    %248 = arith.mulf %232, %240 : vector<2x32xf32>
    %249 = arith.addf %247, %248 : vector<2x32xf32>
    %250 = math.tanh %249 : vector<2x32xf32>
    %251 = arith.mulf %246, %250 : vector<2x32xf32>
    %252 = vector.extract_strided_slice %17 {offsets = [8, 0, 0], sizes = [1, 2, 128], strides = [1, 1, 1]} : vector<16x2x128xf32> to vector<1x2x128xf32>
    %253 = vector.shape_cast %252 : vector<1x2x128xf32> to vector<2x128xf32>
    %cst_46 = arith.constant dense<0.000000e+00> : vector<2x128xf32>
    %254 = tpu.matmul %251, %2, %cst_46 {dimension_numbers = #tpu.dot_dimension_numbers<[1], [0], [0], [1], [0, 0, 1, 1], [], []>} : vector<2x32xf32>, vector<32x128xf32>, vector<2x128xf32> -> vector<2x128xf32>
    %255 = arith.addf %253, %254 : vector<2x128xf32>
    %256 = vector.extract_strided_slice %255 {offsets = [0, 0], sizes = [2, 32], strides = [1, 1]} : vector<2x128xf32> to vector<2x32xf32>
    %257 = arith.negf %256 : vector<2x32xf32>
    %258 = math.exp %257 : vector<2x32xf32>
    %cst_47 = arith.constant 1.000000e+00 : f32
    %259 = vector.broadcast %cst_47 : f32 to vector<2x32xf32>
    %260 = arith.addf %259, %258 : vector<2x32xf32>
    %261 = arith.divf %259, %260 : vector<2x32xf32>
    %262 = vector.extract_strided_slice %255 {offsets = [0, 32], sizes = [2, 32], strides = [1, 1]} : vector<2x128xf32> to vector<2x32xf32>
    %263 = arith.negf %262 : vector<2x32xf32>
    %264 = math.exp %263 : vector<2x32xf32>
    %cst_48 = arith.constant 1.000000e+00 : f32
    %265 = vector.broadcast %cst_48 : f32 to vector<2x32xf32>
    %266 = arith.addf %265, %264 : vector<2x32xf32>
    %267 = arith.divf %265, %266 : vector<2x32xf32>
    %268 = vector.extract_strided_slice %255 {offsets = [0, 64], sizes = [2, 32], strides = [1, 1]} : vector<2x128xf32> to vector<2x32xf32>
    %269 = math.tanh %268 : vector<2x32xf32>
    %270 = vector.extract_strided_slice %255 {offsets = [0, 96], sizes = [2, 32], strides = [1, 1]} : vector<2x128xf32> to vector<2x32xf32>
    %271 = arith.negf %270 : vector<2x32xf32>
    %272 = math.exp %271 : vector<2x32xf32>
    %cst_49 = arith.constant 1.000000e+00 : f32
    %273 = vector.broadcast %cst_49 : f32 to vector<2x32xf32>
    %274 = arith.addf %273, %272 : vector<2x32xf32>
    %275 = arith.divf %273, %274 : vector<2x32xf32>
    %276 = arith.mulf %267, %249 : vector<2x32xf32>
    %277 = arith.mulf %261, %269 : vector<2x32xf32>
    %278 = arith.addf %276, %277 : vector<2x32xf32>
    %279 = math.tanh %278 : vector<2x32xf32>
    %280 = arith.mulf %275, %279 : vector<2x32xf32>
    %281 = vector.extract_strided_slice %17 {offsets = [9, 0, 0], sizes = [1, 2, 128], strides = [1, 1, 1]} : vector<16x2x128xf32> to vector<1x2x128xf32>
    %282 = vector.shape_cast %281 : vector<1x2x128xf32> to vector<2x128xf32>
    %cst_50 = arith.constant dense<0.000000e+00> : vector<2x128xf32>
    %283 = tpu.matmul %280, %2, %cst_50 {dimension_numbers = #tpu.dot_dimension_numbers<[1], [0], [0], [1], [0, 0, 1, 1], [], []>} : vector<2x32xf32>, vector<32x128xf32>, vector<2x128xf32> -> vector<2x128xf32>
    %284 = arith.addf %282, %283 : vector<2x128xf32>
    %285 = vector.extract_strided_slice %284 {offsets = [0, 0], sizes = [2, 32], strides = [1, 1]} : vector<2x128xf32> to vector<2x32xf32>
    %286 = arith.negf %285 : vector<2x32xf32>
    %287 = math.exp %286 : vector<2x32xf32>
    %cst_51 = arith.constant 1.000000e+00 : f32
    %288 = vector.broadcast %cst_51 : f32 to vector<2x32xf32>
    %289 = arith.addf %288, %287 : vector<2x32xf32>
    %290 = arith.divf %288, %289 : vector<2x32xf32>
    %291 = vector.extract_strided_slice %284 {offsets = [0, 32], sizes = [2, 32], strides = [1, 1]} : vector<2x128xf32> to vector<2x32xf32>
    %292 = arith.negf %291 : vector<2x32xf32>
    %293 = math.exp %292 : vector<2x32xf32>
    %cst_52 = arith.constant 1.000000e+00 : f32
    %294 = vector.broadcast %cst_52 : f32 to vector<2x32xf32>
    %295 = arith.addf %294, %293 : vector<2x32xf32>
    %296 = arith.divf %294, %295 : vector<2x32xf32>
    %297 = vector.extract_strided_slice %284 {offsets = [0, 64], sizes = [2, 32], strides = [1, 1]} : vector<2x128xf32> to vector<2x32xf32>
    %298 = math.tanh %297 : vector<2x32xf32>
    %299 = vector.extract_strided_slice %284 {offsets = [0, 96], sizes = [2, 32], strides = [1, 1]} : vector<2x128xf32> to vector<2x32xf32>
    %300 = arith.negf %299 : vector<2x32xf32>
    %301 = math.exp %300 : vector<2x32xf32>
    %cst_53 = arith.constant 1.000000e+00 : f32
    %302 = vector.broadcast %cst_53 : f32 to vector<2x32xf32>
    %303 = arith.addf %302, %301 : vector<2x32xf32>
    %304 = arith.divf %302, %303 : vector<2x32xf32>
    %305 = arith.mulf %296, %278 : vector<2x32xf32>
    %306 = arith.mulf %290, %298 : vector<2x32xf32>
    %307 = arith.addf %305, %306 : vector<2x32xf32>
    %308 = math.tanh %307 : vector<2x32xf32>
    %309 = arith.mulf %304, %308 : vector<2x32xf32>
    %310 = vector.extract_strided_slice %17 {offsets = [10, 0, 0], sizes = [1, 2, 128], strides = [1, 1, 1]} : vector<16x2x128xf32> to vector<1x2x128xf32>
    %311 = vector.shape_cast %310 : vector<1x2x128xf32> to vector<2x128xf32>
    %cst_54 = arith.constant dense<0.000000e+00> : vector<2x128xf32>
    %312 = tpu.matmul %309, %2, %cst_54 {dimension_numbers = #tpu.dot_dimension_numbers<[1], [0], [0], [1], [0, 0, 1, 1], [], []>} : vector<2x32xf32>, vector<32x128xf32>, vector<2x128xf32> -> vector<2x128xf32>
    %313 = arith.addf %311, %312 : vector<2x128xf32>
    %314 = vector.extract_strided_slice %313 {offsets = [0, 0], sizes = [2, 32], strides = [1, 1]} : vector<2x128xf32> to vector<2x32xf32>
    %315 = arith.negf %314 : vector<2x32xf32>
    %316 = math.exp %315 : vector<2x32xf32>
    %cst_55 = arith.constant 1.000000e+00 : f32
    %317 = vector.broadcast %cst_55 : f32 to vector<2x32xf32>
    %318 = arith.addf %317, %316 : vector<2x32xf32>
    %319 = arith.divf %317, %318 : vector<2x32xf32>
    %320 = vector.extract_strided_slice %313 {offsets = [0, 32], sizes = [2, 32], strides = [1, 1]} : vector<2x128xf32> to vector<2x32xf32>
    %321 = arith.negf %320 : vector<2x32xf32>
    %322 = math.exp %321 : vector<2x32xf32>
    %cst_56 = arith.constant 1.000000e+00 : f32
    %323 = vector.broadcast %cst_56 : f32 to vector<2x32xf32>
    %324 = arith.addf %323, %322 : vector<2x32xf32>
    %325 = arith.divf %323, %324 : vector<2x32xf32>
    %326 = vector.extract_strided_slice %313 {offsets = [0, 64], sizes = [2, 32], strides = [1, 1]} : vector<2x128xf32> to vector<2x32xf32>
    %327 = math.tanh %326 : vector<2x32xf32>
    %328 = vector.extract_strided_slice %313 {offsets = [0, 96], sizes = [2, 32], strides = [1, 1]} : vector<2x128xf32> to vector<2x32xf32>
    %329 = arith.negf %328 : vector<2x32xf32>
    %330 = math.exp %329 : vector<2x32xf32>
    %cst_57 = arith.constant 1.000000e+00 : f32
    %331 = vector.broadcast %cst_57 : f32 to vector<2x32xf32>
    %332 = arith.addf %331, %330 : vector<2x32xf32>
    %333 = arith.divf %331, %332 : vector<2x32xf32>
    %334 = arith.mulf %325, %307 : vector<2x32xf32>
    %335 = arith.mulf %319, %327 : vector<2x32xf32>
    %336 = arith.addf %334, %335 : vector<2x32xf32>
    %337 = math.tanh %336 : vector<2x32xf32>
    %338 = arith.mulf %333, %337 : vector<2x32xf32>
    %339 = vector.extract_strided_slice %17 {offsets = [11, 0, 0], sizes = [1, 2, 128], strides = [1, 1, 1]} : vector<16x2x128xf32> to vector<1x2x128xf32>
    %340 = vector.shape_cast %339 : vector<1x2x128xf32> to vector<2x128xf32>
    %cst_58 = arith.constant dense<0.000000e+00> : vector<2x128xf32>
    %341 = tpu.matmul %338, %2, %cst_58 {dimension_numbers = #tpu.dot_dimension_numbers<[1], [0], [0], [1], [0, 0, 1, 1], [], []>} : vector<2x32xf32>, vector<32x128xf32>, vector<2x128xf32> -> vector<2x128xf32>
    %342 = arith.addf %340, %341 : vector<2x128xf32>
    %343 = vector.extract_strided_slice %342 {offsets = [0, 0], sizes = [2, 32], strides = [1, 1]} : vector<2x128xf32> to vector<2x32xf32>
    %344 = arith.negf %343 : vector<2x32xf32>
    %345 = math.exp %344 : vector<2x32xf32>
    %cst_59 = arith.constant 1.000000e+00 : f32
    %346 = vector.broadcast %cst_59 : f32 to vector<2x32xf32>
    %347 = arith.addf %346, %345 : vector<2x32xf32>
    %348 = arith.divf %346, %347 : vector<2x32xf32>
    %349 = vector.extract_strided_slice %342 {offsets = [0, 32], sizes = [2, 32], strides = [1, 1]} : vector<2x128xf32> to vector<2x32xf32>
    %350 = arith.negf %349 : vector<2x32xf32>
    %351 = math.exp %350 : vector<2x32xf32>
    %cst_60 = arith.constant 1.000000e+00 : f32
    %352 = vector.broadcast %cst_60 : f32 to vector<2x32xf32>
    %353 = arith.addf %352, %351 : vector<2x32xf32>
    %354 = arith.divf %352, %353 : vector<2x32xf32>
    %355 = vector.extract_strided_slice %342 {offsets = [0, 64], sizes = [2, 32], strides = [1, 1]} : vector<2x128xf32> to vector<2x32xf32>
    %356 = math.tanh %355 : vector<2x32xf32>
    %357 = vector.extract_strided_slice %342 {offsets = [0, 96], sizes = [2, 32], strides = [1, 1]} : vector<2x128xf32> to vector<2x32xf32>
    %358 = arith.negf %357 : vector<2x32xf32>
    %359 = math.exp %358 : vector<2x32xf32>
    %cst_61 = arith.constant 1.000000e+00 : f32
    %360 = vector.broadcast %cst_61 : f32 to vector<2x32xf32>
    %361 = arith.addf %360, %359 : vector<2x32xf32>
    %362 = arith.divf %360, %361 : vector<2x32xf32>
    %363 = arith.mulf %354, %336 : vector<2x32xf32>
    %364 = arith.mulf %348, %356 : vector<2x32xf32>
    %365 = arith.addf %363, %364 : vector<2x32xf32>
    %366 = math.tanh %365 : vector<2x32xf32>
    %367 = arith.mulf %362, %366 : vector<2x32xf32>
    %368 = vector.extract_strided_slice %17 {offsets = [12, 0, 0], sizes = [1, 2, 128], strides = [1, 1, 1]} : vector<16x2x128xf32> to vector<1x2x128xf32>
    %369 = vector.shape_cast %368 : vector<1x2x128xf32> to vector<2x128xf32>
    %cst_62 = arith.constant dense<0.000000e+00> : vector<2x128xf32>
    %370 = tpu.matmul %367, %2, %cst_62 {dimension_numbers = #tpu.dot_dimension_numbers<[1], [0], [0], [1], [0, 0, 1, 1], [], []>} : vector<2x32xf32>, vector<32x128xf32>, vector<2x128xf32> -> vector<2x128xf32>
    %371 = arith.addf %369, %370 : vector<2x128xf32>
    %372 = vector.extract_strided_slice %371 {offsets = [0, 0], sizes = [2, 32], strides = [1, 1]} : vector<2x128xf32> to vector<2x32xf32>
    %373 = arith.negf %372 : vector<2x32xf32>
    %374 = math.exp %373 : vector<2x32xf32>
    %cst_63 = arith.constant 1.000000e+00 : f32
    %375 = vector.broadcast %cst_63 : f32 to vector<2x32xf32>
    %376 = arith.addf %375, %374 : vector<2x32xf32>
    %377 = arith.divf %375, %376 : vector<2x32xf32>
    %378 = vector.extract_strided_slice %371 {offsets = [0, 32], sizes = [2, 32], strides = [1, 1]} : vector<2x128xf32> to vector<2x32xf32>
    %379 = arith.negf %378 : vector<2x32xf32>
    %380 = math.exp %379 : vector<2x32xf32>
    %cst_64 = arith.constant 1.000000e+00 : f32
    %381 = vector.broadcast %cst_64 : f32 to vector<2x32xf32>
    %382 = arith.addf %381, %380 : vector<2x32xf32>
    %383 = arith.divf %381, %382 : vector<2x32xf32>
    %384 = vector.extract_strided_slice %371 {offsets = [0, 64], sizes = [2, 32], strides = [1, 1]} : vector<2x128xf32> to vector<2x32xf32>
    %385 = math.tanh %384 : vector<2x32xf32>
    %386 = vector.extract_strided_slice %371 {offsets = [0, 96], sizes = [2, 32], strides = [1, 1]} : vector<2x128xf32> to vector<2x32xf32>
    %387 = arith.negf %386 : vector<2x32xf32>
    %388 = math.exp %387 : vector<2x32xf32>
    %cst_65 = arith.constant 1.000000e+00 : f32
    %389 = vector.broadcast %cst_65 : f32 to vector<2x32xf32>
    %390 = arith.addf %389, %388 : vector<2x32xf32>
    %391 = arith.divf %389, %390 : vector<2x32xf32>
    %392 = arith.mulf %383, %365 : vector<2x32xf32>
    %393 = arith.mulf %377, %385 : vector<2x32xf32>
    %394 = arith.addf %392, %393 : vector<2x32xf32>
    %395 = math.tanh %394 : vector<2x32xf32>
    %396 = arith.mulf %391, %395 : vector<2x32xf32>
    %397 = vector.extract_strided_slice %17 {offsets = [13, 0, 0], sizes = [1, 2, 128], strides = [1, 1, 1]} : vector<16x2x128xf32> to vector<1x2x128xf32>
    %398 = vector.shape_cast %397 : vector<1x2x128xf32> to vector<2x128xf32>
    %cst_66 = arith.constant dense<0.000000e+00> : vector<2x128xf32>
    %399 = tpu.matmul %396, %2, %cst_66 {dimension_numbers = #tpu.dot_dimension_numbers<[1], [0], [0], [1], [0, 0, 1, 1], [], []>} : vector<2x32xf32>, vector<32x128xf32>, vector<2x128xf32> -> vector<2x128xf32>
    %400 = arith.addf %398, %399 : vector<2x128xf32>
    %401 = vector.extract_strided_slice %400 {offsets = [0, 0], sizes = [2, 32], strides = [1, 1]} : vector<2x128xf32> to vector<2x32xf32>
    %402 = arith.negf %401 : vector<2x32xf32>
    %403 = math.exp %402 : vector<2x32xf32>
    %cst_67 = arith.constant 1.000000e+00 : f32
    %404 = vector.broadcast %cst_67 : f32 to vector<2x32xf32>
    %405 = arith.addf %404, %403 : vector<2x32xf32>
    %406 = arith.divf %404, %405 : vector<2x32xf32>
    %407 = vector.extract_strided_slice %400 {offsets = [0, 32], sizes = [2, 32], strides = [1, 1]} : vector<2x128xf32> to vector<2x32xf32>
    %408 = arith.negf %407 : vector<2x32xf32>
    %409 = math.exp %408 : vector<2x32xf32>
    %cst_68 = arith.constant 1.000000e+00 : f32
    %410 = vector.broadcast %cst_68 : f32 to vector<2x32xf32>
    %411 = arith.addf %410, %409 : vector<2x32xf32>
    %412 = arith.divf %410, %411 : vector<2x32xf32>
    %413 = vector.extract_strided_slice %400 {offsets = [0, 64], sizes = [2, 32], strides = [1, 1]} : vector<2x128xf32> to vector<2x32xf32>
    %414 = math.tanh %413 : vector<2x32xf32>
    %415 = vector.extract_strided_slice %400 {offsets = [0, 96], sizes = [2, 32], strides = [1, 1]} : vector<2x128xf32> to vector<2x32xf32>
    %416 = arith.negf %415 : vector<2x32xf32>
    %417 = math.exp %416 : vector<2x32xf32>
    %cst_69 = arith.constant 1.000000e+00 : f32
    %418 = vector.broadcast %cst_69 : f32 to vector<2x32xf32>
    %419 = arith.addf %418, %417 : vector<2x32xf32>
    %420 = arith.divf %418, %419 : vector<2x32xf32>
    %421 = arith.mulf %412, %394 : vector<2x32xf32>
    %422 = arith.mulf %406, %414 : vector<2x32xf32>
    %423 = arith.addf %421, %422 : vector<2x32xf32>
    %424 = math.tanh %423 : vector<2x32xf32>
    %425 = arith.mulf %420, %424 : vector<2x32xf32>
    %426 = vector.extract_strided_slice %17 {offsets = [14, 0, 0], sizes = [1, 2, 128], strides = [1, 1, 1]} : vector<16x2x128xf32> to vector<1x2x128xf32>
    %427 = vector.shape_cast %426 : vector<1x2x128xf32> to vector<2x128xf32>
    %cst_70 = arith.constant dense<0.000000e+00> : vector<2x128xf32>
    %428 = tpu.matmul %425, %2, %cst_70 {dimension_numbers = #tpu.dot_dimension_numbers<[1], [0], [0], [1], [0, 0, 1, 1], [], []>} : vector<2x32xf32>, vector<32x128xf32>, vector<2x128xf32> -> vector<2x128xf32>
    %429 = arith.addf %427, %428 : vector<2x128xf32>
    %430 = vector.extract_strided_slice %429 {offsets = [0, 0], sizes = [2, 32], strides = [1, 1]} : vector<2x128xf32> to vector<2x32xf32>
    %431 = arith.negf %430 : vector<2x32xf32>
    %432 = math.exp %431 : vector<2x32xf32>
    %cst_71 = arith.constant 1.000000e+00 : f32
    %433 = vector.broadcast %cst_71 : f32 to vector<2x32xf32>
    %434 = arith.addf %433, %432 : vector<2x32xf32>
    %435 = arith.divf %433, %434 : vector<2x32xf32>
    %436 = vector.extract_strided_slice %429 {offsets = [0, 32], sizes = [2, 32], strides = [1, 1]} : vector<2x128xf32> to vector<2x32xf32>
    %437 = arith.negf %436 : vector<2x32xf32>
    %438 = math.exp %437 : vector<2x32xf32>
    %cst_72 = arith.constant 1.000000e+00 : f32
    %439 = vector.broadcast %cst_72 : f32 to vector<2x32xf32>
    %440 = arith.addf %439, %438 : vector<2x32xf32>
    %441 = arith.divf %439, %440 : vector<2x32xf32>
    %442 = vector.extract_strided_slice %429 {offsets = [0, 64], sizes = [2, 32], strides = [1, 1]} : vector<2x128xf32> to vector<2x32xf32>
    %443 = math.tanh %442 : vector<2x32xf32>
    %444 = vector.extract_strided_slice %429 {offsets = [0, 96], sizes = [2, 32], strides = [1, 1]} : vector<2x128xf32> to vector<2x32xf32>
    %445 = arith.negf %444 : vector<2x32xf32>
    %446 = math.exp %445 : vector<2x32xf32>
    %cst_73 = arith.constant 1.000000e+00 : f32
    %447 = vector.broadcast %cst_73 : f32 to vector<2x32xf32>
    %448 = arith.addf %447, %446 : vector<2x32xf32>
    %449 = arith.divf %447, %448 : vector<2x32xf32>
    %450 = arith.mulf %441, %423 : vector<2x32xf32>
    %451 = arith.mulf %435, %443 : vector<2x32xf32>
    %452 = arith.addf %450, %451 : vector<2x32xf32>
    %453 = math.tanh %452 : vector<2x32xf32>
    %454 = arith.mulf %449, %453 : vector<2x32xf32>
    %455 = vector.extract_strided_slice %17 {offsets = [15, 0, 0], sizes = [1, 2, 128], strides = [1, 1, 1]} : vector<16x2x128xf32> to vector<1x2x128xf32>
    %456 = vector.shape_cast %455 : vector<1x2x128xf32> to vector<2x128xf32>
    %cst_74 = arith.constant dense<0.000000e+00> : vector<2x128xf32>
    %457 = tpu.matmul %454, %2, %cst_74 {dimension_numbers = #tpu.dot_dimension_numbers<[1], [0], [0], [1], [0, 0, 1, 1], [], []>} : vector<2x32xf32>, vector<32x128xf32>, vector<2x128xf32> -> vector<2x128xf32>
    %458 = arith.addf %456, %457 : vector<2x128xf32>
    %459 = vector.extract_strided_slice %458 {offsets = [0, 0], sizes = [2, 32], strides = [1, 1]} : vector<2x128xf32> to vector<2x32xf32>
    %460 = arith.negf %459 : vector<2x32xf32>
    %461 = math.exp %460 : vector<2x32xf32>
    %cst_75 = arith.constant 1.000000e+00 : f32
    %462 = vector.broadcast %cst_75 : f32 to vector<2x32xf32>
    %463 = arith.addf %462, %461 : vector<2x32xf32>
    %464 = arith.divf %462, %463 : vector<2x32xf32>
    %465 = vector.extract_strided_slice %458 {offsets = [0, 32], sizes = [2, 32], strides = [1, 1]} : vector<2x128xf32> to vector<2x32xf32>
    %466 = arith.negf %465 : vector<2x32xf32>
    %467 = math.exp %466 : vector<2x32xf32>
    %cst_76 = arith.constant 1.000000e+00 : f32
    %468 = vector.broadcast %cst_76 : f32 to vector<2x32xf32>
    %469 = arith.addf %468, %467 : vector<2x32xf32>
    %470 = arith.divf %468, %469 : vector<2x32xf32>
    %471 = vector.extract_strided_slice %458 {offsets = [0, 64], sizes = [2, 32], strides = [1, 1]} : vector<2x128xf32> to vector<2x32xf32>
    %472 = math.tanh %471 : vector<2x32xf32>
    %473 = vector.extract_strided_slice %458 {offsets = [0, 96], sizes = [2, 32], strides = [1, 1]} : vector<2x128xf32> to vector<2x32xf32>
    %474 = arith.negf %473 : vector<2x32xf32>
    %475 = math.exp %474 : vector<2x32xf32>
    %cst_77 = arith.constant 1.000000e+00 : f32
    %476 = vector.broadcast %cst_77 : f32 to vector<2x32xf32>
    %477 = arith.addf %476, %475 : vector<2x32xf32>
    %478 = arith.divf %476, %477 : vector<2x32xf32>
    %479 = arith.mulf %470, %452 : vector<2x32xf32>
    %480 = arith.mulf %464, %472 : vector<2x32xf32>
    %481 = arith.addf %479, %480 : vector<2x32xf32>
    %482 = math.tanh %481 : vector<2x32xf32>
    %483 = arith.mulf %478, %482 : vector<2x32xf32>
    %484 = vector.shape_cast %48 : vector<2x32xf32> to vector<2x1x32xf32>
    %485 = vector.shape_cast %77 : vector<2x32xf32> to vector<2x1x32xf32>
    %486 = vector.shape_cast %106 : vector<2x32xf32> to vector<2x1x32xf32>
    %487 = vector.shape_cast %135 : vector<2x32xf32> to vector<2x1x32xf32>
    %488 = vector.shape_cast %164 : vector<2x32xf32> to vector<2x1x32xf32>
    %489 = vector.shape_cast %193 : vector<2x32xf32> to vector<2x1x32xf32>
    %490 = vector.shape_cast %222 : vector<2x32xf32> to vector<2x1x32xf32>
    %491 = vector.shape_cast %251 : vector<2x32xf32> to vector<2x1x32xf32>
    %492 = vector.shape_cast %280 : vector<2x32xf32> to vector<2x1x32xf32>
    %493 = vector.shape_cast %309 : vector<2x32xf32> to vector<2x1x32xf32>
    %494 = vector.shape_cast %338 : vector<2x32xf32> to vector<2x1x32xf32>
    %495 = vector.shape_cast %367 : vector<2x32xf32> to vector<2x1x32xf32>
    %496 = vector.shape_cast %396 : vector<2x32xf32> to vector<2x1x32xf32>
    %497 = vector.shape_cast %425 : vector<2x32xf32> to vector<2x1x32xf32>
    %498 = vector.shape_cast %454 : vector<2x32xf32> to vector<2x1x32xf32>
    %499 = vector.shape_cast %483 : vector<2x32xf32> to vector<2x1x32xf32>
    %500 = tpu.concatenate %484, %485, %486, %487, %488, %489, %490, %491, %492, %493, %494, %495, %496, %497, %498, %499 in 1 : vector<2x1x32xf32>, vector<2x1x32xf32>, vector<2x1x32xf32>, vector<2x1x32xf32>, vector<2x1x32xf32>, vector<2x1x32xf32>, vector<2x1x32xf32>, vector<2x1x32xf32>, vector<2x1x32xf32>, vector<2x1x32xf32>, vector<2x1x32xf32>, vector<2x1x32xf32>, vector<2x1x32xf32>, vector<2x1x32xf32>, vector<2x1x32xf32>, vector<2x1x32xf32> -> vector<2x16x32xf32>
    %501 = vector.shape_cast %4 : vector<1x32xf32> to vector<1x1x32xf32>
    %502 = vector.broadcast %501 : vector<1x1x32xf32> to vector<2x16x32xf32>
    %503 = arith.mulf %500, %502 : vector<2x16x32xf32>
    %cst_78 = arith.constant dense<0.000000e+00> : vector<2x16xf32>
    %504 = vector.multi_reduction <add>, %503, %cst_78 [2] : vector<2x16x32xf32> to vector<2x16xf32>
    %505 = vector.broadcast %5 : f32 to vector<2x16xf32>
    %506 = arith.addf %504, %505 : vector<2x16xf32>
    %507 = arith.negf %506 : vector<2x16xf32>
    %508 = math.exp %507 : vector<2x16xf32>
    %cst_79 = arith.constant 1.000000e+00 : f32
    %509 = vector.broadcast %cst_79 : f32 to vector<2x16xf32>
    %510 = arith.addf %509, %508 : vector<2x16xf32>
    %511 = arith.divf %509, %510 : vector<2x16xf32>
    %c0_80 = arith.constant 0 : index
    %c0_81 = arith.constant 0 : index
    %512 = vector.load %arg6[%c0_80, %c0_81] : memref<2x16xf32, #tpu.memory_space<vmem>>, vector<2x16xf32>
    tpu.vector_store %arg6[%c0_80, %c0_81], %511 {strides = array<i32>} : memref<2x16xf32, #tpu.memory_space<vmem>>, vector<2x16xf32>,
    return
  }
}

</mosaic_0001>

<llo_original>
// kernel: tpu_custom_call.1
$region0: #{tpu_custom_call.1}
  #allocation0 [shape = 'u32[]', space=smem, size = 0x4, offset = 0x4, fixed_abs, tag = 'smem constant byte address 0x4 - core index']
  #allocation1 [shape = 'u32[144,128]{1,0:T(1,128)}', space=vmem, size = 0x12000, scoped, tag = 'internal scratch']
  #allocation2 [shape = 'f32[1]{0:T(128)S(6)}', space=smem, size = 0x200, scoped, tag = 'scoped memory for tpu_custom_call.1']
  %s0 = inlined_call_operand.vmem [shape: f32[2,16,8], index: 0, kind: input, shape index: {}]
  %s1 = inlined_call_operand.vmem [shape: f32[8,128], index: 1, kind: input, shape index: {}]
  %s2 = inlined_call_operand.vmem [shape: f32[32,128], index: 2, kind: input, shape index: {}]
  %s3 = inlined_call_operand.vmem [shape: f32[1,128], index: 3, kind: input, shape index: {}]
  %s4 = inlined_call_operand.vmem [shape: f32[1,32], index: 4, kind: input, shape index: {}]
  %s5 = inlined_call_operand.<no memory space> [shape: f32[1], index: 5, kind: input, shape index: {}]
  %s6 = inlined_call_operand.hbm [shape: f32[2,16], index: 6, kind: output, shape index: {}]
  %s7 = sld [smem:[#allocation0]]
  $region34: #{tpu_custom_call.1} parent=0
    _
  %s9 = ssub.s32 1, %s7
  %s10 = scalar_select 0, %s9, %s7
  %11 = sst [smem:[#allocation2]] %s5
  $region1: #{tpu_custom_call.1} parent=0
    #allocation3 [shape = 'u8[1024]{0}', space=vmem, size = 0x400, scoped, tag = 'output window, operand 0, single buffered']
    #allocation4 [shape = 's32[1]{0}', space=sflag, size = 0x4, scoped, tag = 'scoped memory for tpu_custom_call.1']
    %12 = vsyncpa [#allocation4], 0
    // Predicated region
    $region2: #{tpu_custom_call.1} parent=1 // pred_check
      _
    $region3: #{tpu_custom_call.1} parent=1 // pred_check_branch
      %14 = sbr.rel (0) target = $region5
    $region4: #{tpu_custom_call.1} parent=1 // pred_region
      _
    $region5: #{tpu_custom_call.1} parent=1 // pred_fallthru
      _
    // Predicated region
    $region6: #{tpu_custom_call.1} parent=1 // pred_check
      _
    $region7: #{tpu_custom_call.1} parent=1 // pred_check_branch
      %16 = sbr.rel (0) target = $region9
    $region8: #{tpu_custom_call.1} parent=1 // pred_region
      _
    $region9: #{tpu_custom_call.1} parent=1 // pred_fallthru
      _
    // Predicated region
    $region10: #{tpu_custom_call.1} parent=1 // pred_check
      _
    $region11: #{tpu_custom_call.1} parent=1 // pred_check_branch
      %18 = sbr.rel (0) target = $region13
    $region12: #{tpu_custom_call.1} parent=1 // pred_region
      _
    $region13: #{tpu_custom_call.1} parent=1 // pred_fallthru
      _
    // Predicated region
    $region14: #{tpu_custom_call.1} parent=1 // pred_check
      _
    $region15: #{tpu_custom_call.1} parent=1 // pred_check_branch
      %20 = sbr.rel (0) target = $region17
    $region16: #{tpu_custom_call.1} parent=1 // pred_region
      _
    $region17: #{tpu_custom_call.1} parent=1 // pred_fallthru
      _
    // Predicated region
    $region18: #{tpu_custom_call.1} parent=1 // pred_check
      _
    $region19: #{tpu_custom_call.1} parent=1 // pred_check_branch
      %22 = sbr.rel (0) target = $region21
    $region20: #{tpu_custom_call.1} parent=1 // pred_region
      _
    $region21: #{tpu_custom_call.1} parent=1 // pred_fallthru
      _
    // Predicated region
    $region22: #{tpu_custom_call.1} parent=1 // pred_check
      _
    $region23: #{tpu_custom_call.1} parent=1 // pred_check_branch
      %24 = sbr.rel (0) target = $region25
    $region24: #{tpu_custom_call.1} parent=1 // pred_region
      _
    $region25: #{tpu_custom_call.1} parent=1 // pred_fallthru
      _
    %v25 = vld [vmem:[%s0] sm:$0xff]
    %v26 = vld [vmem:[%s0 + $0x8] sm:$0xff]
    %v27 = vld [vmem:[%s0 + $0x10] sm:$0xff]
    %v28 = vld [vmem:[%s0 + $0x18] sm:$0xff]
    %v29 = vld [vmem:[%s1] sm:$0xff]
    %v30 = vld [vmem:[%s2] sm:$0xff]
    %v31 = vld [vmem:[%s2 + $0x8] sm:$0xff]
    %v32 = vld [vmem:[%s2 + $0x10] sm:$0xff]
    %v33 = vld [vmem:[%s2 + $0x18] sm:$0xff]
    %v34 = vld [vmem:[%s3] sm:$0x1]
    %v35 = vld [vmem:[%s4] sm:$0x1]
    %s36 = sld [smem:[#allocation2]]
    %vm37 = vcmask 64512
    %v39 = vsel %vm37, %v25, 0
    %v42 = vsel %vm37, %v26, 0
    %44 = vmatprep.subr.mxu0 0.0
    %45 = vmatpush1.msra.mxu0 0.0
    %46 = vmatprep.subr.mxu0 0.0
    %47 = vmatpush1.msra.mxu0 0.0
    %48 = vmatprep.subr.mxu0 0.0
    %49 = vmatpush1.msra.mxu0 0.0
    %50 = vmatprep.subr.mxu0 0.0
    %51 = vmatpush1.msra.mxu0 0.0
    %52 = vmatprep.subr.mxu0 0.0
    %53 = vmatpush1.msra.mxu0 0.0
    %54 = vmatprep.subr.mxu0 0.0
    %55 = vmatpush1.msra.mxu0 0.0
    %56 = vmatprep.subr.mxu0 0.0
    %57 = vmatpush1.msra.mxu0 0.0
    %58 = vmatprep.subr.mxu0 0.0
    %59 = vmatpush1.msra.mxu0 0.0
    %60 = vmatprep.subr.mxu0 0.0
    %61 = vmatpush1.msra.mxu0 0.0
    %62 = vmatprep.subr.mxu0 0.0
    %63 = vmatpush1.msra.mxu0 0.0
    %64 = vmatprep.subr.mxu0 0.0
    %65 = vmatpush1.msra.mxu0 0.0
    %66 = vmatprep.subr.mxu0 0.0
    %67 = vmatpush1.msra.mxu0 0.0
    %68 = vmatprep.subr.mxu0 0.0
    %69 = vmatpush1.msra.mxu0 0.0
    %70 = vmatprep.subr.mxu0 0.0
    %71 = vmatpush1.msra.mxu0 0.0
    %72 = vmatprep.subr.mxu0 0.0
    %73 = vmatpush1.msra.mxu0 0.0
    %74 = vmatprep.subr.mxu0 0.0
    %75 = vmatpush1.msra.mxu0 %v29
    %76 = vmatprep.subr.mxu0 0.0
    %77 = vmatpush2.msra.mxu0 0.0
    %78 = vmatprep.subr.mxu0 0.0
    %79 = vmatpush2.msra.mxu0 0.0
    %80 = vmatprep.subr.mxu0 0.0
    %81 = vmatpush2.msra.mxu0 0.0
    %82 = vmatprep.subr.mxu0 0.0
    %83 = vmatpush2.msra.mxu0 0.0
    %84 = vmatprep.subr.mxu0 0.0
    %85 = vmatpush2.msra.mxu0 0.0
    %86 = vmatprep.subr.mxu0 0.0
    %87 = vmatpush2.msra.mxu0 0.0
    %88 = vmatprep.subr.mxu0 0.0
    %89 = vmatpush2.msra.mxu0 0.0
    %90 = vmatprep.subr.mxu0 0.0
    %91 = vmatpush2.msra.mxu0 0.0
    %92 = vmatprep.subr.mxu0 0.0
    %93 = vmatpush2.msra.mxu0 0.0
    %94 = vmatprep.subr.mxu0 0.0
    %95 = vmatpush2.msra.mxu0 0.0
    %96 = vmatprep.subr.mxu0 0.0
    %97 = vmatpush2.msra.mxu0 0.0
    %98 = vmatprep.subr.mxu0 0.0
    %99 = vmatpush2.msra.mxu0 0.0
    %100 = vmatprep.subr.mxu0 0.0
    %101 = vmatpush2.msra.mxu0 0.0
    %102 = vmatprep.subr.mxu0 0.0
    %103 = vmatpush2.msra.mxu0 0.0
    %104 = vmatprep.subr.mxu0 0.0
    %105 = vmatpush2.msra.mxu0 0.0
    %106 = vmatprep.subr.mxu0 0.0
    %107 = vmatpush2.msra.mxu0 0.0
    %108 = vmatprep.mubr.f32.mxu0 0.0
    %109 = vmatmul.mubr.f32.gmra.mxu0 %v39
    %v110 = vpop.f32.mrf.mxu0
    %v111 = vadd.f32 0.0, %v110
    %v112 = vpop.f32.mrf.mxu0
    %113 = vmatprep.mubr.f32.mxu0 0.0
    %114 = vmatmul.mubr.f32.gmra.mxu0 %v42
    %v115 = vpop.f32.mrf.mxu0
    %v116 = vadd.f32 0.0, %v115
    %v117 = vpop.f32.mrf.mxu0
    %118 = vdwg.mxu0
    %v120 = vsel %vm37, %v27, 0
    %v123 = vsel %vm37, %v28, 0
    %125 = vmatprep.subr.mxu0 0.0
    %126 = vmatpush1.msra.mxu0 0.0
    %127 = vmatprep.subr.mxu0 0.0
    %128 = vmatpush1.msra.mxu0 0.0
    %129 = vmatprep.subr.mxu0 0.0
    %130 = vmatpush1.msra.mxu0 0.0
    %131 = vmatprep.subr.mxu0 0.0
    %132 = vmatpush1.msra.mxu0 0.0
    %133 = vmatprep.subr.mxu0 0.0
    %134 = vmatpush1.msra.mxu0 0.0
    %135 = vmatprep.subr.mxu0 0.0
    %136 = vmatpush1.msra.mxu0 0.0
    %137 = vmatprep.subr.mxu0 0.0
    %138 = vmatpush1.msra.mxu0 0.0
    %139 = vmatprep.subr.mxu0 0.0
    %140 = vmatpush1.msra.mxu0 0.0
    %141 = vmatprep.subr.mxu0 0.0
    %142 = vmatpush1.msra.mxu0 0.0
    %143 = vmatprep.subr.mxu0 0.0
    %144 = vmatpush1.msra.mxu0 0.0
    %145 = vmatprep.subr.mxu0 0.0
    %146 = vmatpush1.msra.mxu0 0.0
    %147 = vmatprep.subr.mxu0 0.0
    %148 = vmatpush1.msra.mxu0 0.0
    %149 = vmatprep.subr.mxu0 0.0
    %150 = vmatpush1.msra.mxu0 0.0
    %151 = vmatprep.subr.mxu0 0.0
    %152 = vmatpush1.msra.mxu0 0.0
    %153 = vmatprep.subr.mxu0 0.0
    %154 = vmatpush1.msra.mxu0 0.0
    %155 = vmatprep.subr.mxu0 0.0
    %156 = vmatpush1.msra.mxu0 %v29
    %157 = vmatprep.subr.mxu0 0.0
    %158 = vmatpush2.msra.mxu0 0.0
    %159 = vmatprep.subr.mxu0 0.0
    %160 = vmatpush2.msra.mxu0 0.0
    %161 = vmatprep.subr.mxu0 0.0
    %162 = vmatpush2.msra.mxu0 0.0
    %163 = vmatprep.subr.mxu0 0.0
    %164 = vmatpush2.msra.mxu0 0.0
    %165 = vmatprep.subr.mxu0 0.0
    %166 = vmatpush2.msra.mxu0 0.0
    %167 = vmatprep.subr.mxu0 0.0
    %168 = vmatpush2.msra.mxu0 0.0
    %169 = vmatprep.subr.mxu0 0.0
    %170 = vmatpush2.msra.mxu0 0.0
    %171 = vmatprep.subr.mxu0 0.0
    %172 = vmatpush2.msra.mxu0 0.0
    %173 = vmatprep.subr.mxu0 0.0
    %174 = vmatpush2.msra.mxu0 0.0
    %175 = vmatprep.subr.mxu0 0.0
    %176 = vmatpush2.msra.mxu0 0.0
    %177 = vmatprep.subr.mxu0 0.0
    %178 = vmatpush2.msra.mxu0 0.0
    %179 = vmatprep.subr.mxu0 0.0
    %180 = vmatpush2.msra.mxu0 0.0
    %181 = vmatprep.subr.mxu0 0.0
    %182 = vmatpush2.msra.mxu0 0.0
    %183 = vmatprep.subr.mxu0 0.0
    %184 = vmatpush2.msra.mxu0 0.0
    %185 = vmatprep.subr.mxu0 0.0
    %186 = vmatpush2.msra.mxu0 0.0
    %187 = vmatprep.subr.mxu0 0.0
    %188 = vmatpush2.msra.mxu0 0.0
    %189 = vmatprep.mubr.f32.mxu0 0.0
    %190 = vmatmul.mubr.f32.gmra.mxu0 %v120
    %v191 = vpop.f32.mrf.mxu0
    %v192 = vadd.f32 0.0, %v191
    %v193 = vpop.f32.mrf.mxu0
    %194 = vmatprep.mubr.f32.mxu0 0.0
    %195 = vmatmul.mubr.f32.gmra.mxu0 %v123
    %v196 = vpop.f32.mrf.mxu0
    %v197 = vadd.f32 0.0, %v196
    %v198 = vpop.f32.mrf.mxu0
    %199 = vdwg.mxu0
    %v202 = vcombine.high %v111, %v111
    %v204 = vunpack.c.l.s4 1966171168
    %v205 = vunpack.c.0.s8 %v204
    %v206 = vlaneseq
    %v207 = vshrl.u32 %v206, 7
    %v208 = vsub.s32 %v205, %v207
    %v209 = vrot.slane %v111, %v208
    %v211 = vunpack.c.l.s4 1966171168
    %v212 = vunpack.c.0.s8 %v211
    %v213 = vlaneseq
    %v214 = vshrl.u32 %v213, 7
    %v215 = vsub.s32 %v212, %v214
    %v216 = vrot.slane %v202, %v215
    %v217 = vcombine.high %v209, %v209
    %v218 = vcombine.high %v216, %v216
    %v220 = vunpack.c.l.s4 1966171168
    %v221 = vunpack.c.0.s8 %v220
    %v222 = vlaneseq
    %v223 = vshrl.u32 %v222, 7
    %v224 = vsub.s32 %v221, %v223
    %v225 = vrot.slane %v209, %v224
    %v227 = vunpack.c.l.s4 1966171168
    %v228 = vunpack.c.0.s8 %v227
    %v229 = vlaneseq
    %v230 = vshrl.u32 %v229, 7
    %v231 = vsub.s32 %v228, %v230
    %v232 = vrot.slane %v216, %v231
    %v234 = vunpack.c.l.s4 1966171168
    %v235 = vunpack.c.0.s8 %v234
    %v236 = vlaneseq
    %v237 = vshrl.u32 %v236, 7
    %v238 = vsub.s32 %v235, %v237
    %v239 = vrot.slane %v217, %v238
    %v241 = vunpack.c.l.s4 1966171168
    %v242 = vunpack.c.0.s8 %v241
    %v243 = vlaneseq
    %v244 = vshrl.u32 %v243, 7
    %v245 = vsub.s32 %v242, %v244
    %v246 = vrot.slane %v218, %v245
    %v247 = vcombine.high %v225, %v225
    %v248 = vcombine.high %v232, %v232
    %v249 = vcombine.high %v239, %v239
    %v250 = vcombine.high %v246, %v246
    %v251 = vcombine.high %v116, %v116
    %v253 = vunpack.c.l.s4 1966171168
    %v254 = vunpack.c.0.s8 %v253
    %v255 = vlaneseq
    %v256 = vshrl.u32 %v255, 7
    %v257 = vsub.s32 %v254, %v256
    %v258 = vrot.slane %v116, %v257
    %v260 = vunpack.c.l.s4 1966171168
    %v261 = vunpack.c.0.s8 %v260
    %v262 = vlaneseq
    %v263 = vshrl.u32 %v262, 7
    %v264 = vsub.s32 %v261, %v263
    %v265 = vrot.slane %v251, %v264
    %v266 = vcombine.high %v258, %v258
    %v267 = vcombine.high %v265, %v265
    %v269 = vunpack.c.l.s4 1966171168
    %v270 = vunpack.c.0.s8 %v269
    %v271 = vlaneseq
    %v272 = vshrl.u32 %v271, 7
    %v273 = vsub.s32 %v270, %v272
    %v274 = vrot.slane %v258, %v273
    %v276 = vunpack.c.l.s4 1966171168
    %v277 = vunpack.c.0.s8 %v276
    %v278 = vlaneseq
    %v279 = vshrl.u32 %v278, 7
    %v280 = vsub.s32 %v277, %v279
    %v281 = vrot.slane %v265, %v280
    %v283 = vunpack.c.l.s4 1966171168
    %v284 = vunpack.c.0.s8 %v283
    %v285 = vlaneseq
    %v286 = vshrl.u32 %v285, 7
    %v287 = vsub.s32 %v284, %v286
    %v288 = vrot.slane %v266, %v287
    %v290 = vunpack.c.l.s4 1966171168
    %v291 = vunpack.c.0.s8 %v290
    %v292 = vlaneseq
    %v293 = vshrl.u32 %v292, 7
    %v294 = vsub.s32 %v291, %v293
    %v295 = vrot.slane %v267, %v294
    %v296 = vcombine.high %v274, %v274
    %v297 = vcombine.high %v281, %v281
    %v298 = vcombine.high %v288, %v288
    %v299 = vcombine.high %v295, %v295
    %v318 = vcombine.high %v192, %v192
    %v320 = vunpack.c.l.s4 1966171168
    %v321 = vunpack.c.0.s8 %v320
    %v322 = vlaneseq
    %v323 = vshrl.u32 %v322, 7
    %v324 = vsub.s32 %v321, %v323
    %v325 = vrot.slane %v192, %v324
    %v327 = vunpack.c.l.s4 1966171168
    %v328 = vunpack.c.0.s8 %v327
    %v329 = vlaneseq
    %v330 = vshrl.u32 %v329, 7
    %v331 = vsub.s32 %v328, %v330
    %v332 = vrot.slane %v318, %v331
    %v333 = vcombine.high %v325, %v325
    %v334 = vcombine.high %v332, %v332
    %v336 = vunpack.c.l.s4 1966171168
    %v337 = vunpack.c.0.s8 %v336
    %v338 = vlaneseq
    %v339 = vshrl.u32 %v338, 7
    %v340 = vsub.s32 %v337, %v339
    %v341 = vrot.slane %v325, %v340
    %v343 = vunpack.c.l.s4 1966171168
    %v344 = vunpack.c.0.s8 %v343
    %v345 = vlaneseq
    %v346 = vshrl.u32 %v345, 7
    %v347 = vsub.s32 %v344, %v346
    %v348 = vrot.slane %v332, %v347
    %v350 = vunpack.c.l.s4 1966171168
    %v351 = vunpack.c.0.s8 %v350
    %v352 = vlaneseq
    %v353 = vshrl.u32 %v352, 7
    %v354 = vsub.s32 %v351, %v353
    %v355 = vrot.slane %v333, %v354
    %v357 = vunpack.c.l.s4 1966171168
    %v358 = vunpack.c.0.s8 %v357
    %v359 = vlaneseq
    %v360 = vshrl.u32 %v359, 7
    %v361 = vsub.s32 %v358, %v360
    %v362 = vrot.slane %v334, %v361
    %v363 = vcombine.high %v341, %v341
    %v364 = vcombine.high %v348, %v348
    %v365 = vcombine.high %v355, %v355
    %v366 = vcombine.high %v362, %v362
    %v367 = vcombine.high %v197, %v197
    %v369 = vunpack.c.l.s4 1966171168
    %v370 = vunpack.c.0.s8 %v369
    %v371 = vlaneseq
    %v372 = vshrl.u32 %v371, 7
    %v373 = vsub.s32 %v370, %v372
    %v374 = vrot.slane %v197, %v373
    %v376 = vunpack.c.l.s4 1966171168
    %v377 = vunpack.c.0.s8 %v376
    %v378 = vlaneseq
    %v379 = vshrl.u32 %v378, 7
    %v380 = vsub.s32 %v377, %v379
    %v381 = vrot.slane %v367, %v380
    %v382 = vcombine.high %v374, %v374
    %v383 = vcombine.high %v381, %v381
    %v385 = vunpack.c.l.s4 1966171168
    %v386 = vunpack.c.0.s8 %v385
    %v387 = vlaneseq
    %v388 = vshrl.u32 %v387, 7
    %v389 = vsub.s32 %v386, %v388
    %v390 = vrot.slane %v374, %v389
    %v392 = vunpack.c.l.s4 1966171168
    %v393 = vunpack.c.0.s8 %v392
    %v394 = vlaneseq
    %v395 = vshrl.u32 %v394, 7
    %v396 = vsub.s32 %v393, %v395
    %v397 = vrot.slane %v381, %v396
    %v399 = vunpack.c.l.s4 1966171168
    %v400 = vunpack.c.0.s8 %v399
    %v401 = vlaneseq
    %v402 = vshrl.u32 %v401, 7
    %v403 = vsub.s32 %v400, %v402
    %v404 = vrot.slane %v382, %v403
    %v406 = vunpack.c.l.s4 1966171168
    %v407 = vunpack.c.0.s8 %v406
    %v408 = vlaneseq
    %v409 = vshrl.u32 %v408, 7
    %v410 = vsub.s32 %v407, %v409
    %v411 = vrot.slane %v383, %v410
    %v412 = vcombine.high %v390, %v390
    %v413 = vcombine.high %v397, %v397
    %v414 = vcombine.high %v404, %v404
    %v415 = vcombine.high %v411, %v411
    %v416 = vlaneseq
    %v417 = vshrl.u32 %v416, 7
    %v418 = vsub.s32 0, %v417
    %v419 = vrot.slane %v341, %v418
    %v420 = vlaneseq
    %v421 = vshrl.u32 %v420, 7
    %v422 = vsub.s32 0, %v421
    %v423 = vrot.slane %v355, %v422
    %v424 = vlaneseq
    %v425 = vshrl.u32 %v424, 7
    %v426 = vsub.s32 0, %v425
    %v427 = vrot.slane %v363, %v426
    %v428 = vlaneseq
    %v429 = vshrl.u32 %v428, 7
    %v430 = vsub.s32 0, %v429
    %v431 = vrot.slane %v365, %v430
    %v432 = vlaneseq
    %v433 = vshrl.u32 %v432, 7
    %v434 = vsub.s32 0, %v433
    %v435 = vrot.slane %v348, %v434
    %v436 = vlaneseq
    %v437 = vshrl.u32 %v436, 7
    %v438 = vsub.s32 0, %v437
    %v439 = vrot.slane %v362, %v438
    %v440 = vlaneseq
    %v441 = vshrl.u32 %v440, 7
    %v442 = vsub.s32 0, %v441
    %v443 = vrot.slane %v364, %v442
    %v444 = vlaneseq
    %v445 = vshrl.u32 %v444, 7
    %v446 = vsub.s32 0, %v445
    %v447 = vrot.slane %v366, %v446
    %v448 = vlaneseq
    %v449 = vshrl.u32 %v448, 7
    %v450 = vsub.s32 0, %v449
    %v451 = vrot.slane %v390, %v450
    %v452 = vlaneseq
    %v453 = vshrl.u32 %v452, 7
    %v454 = vsub.s32 0, %v453
    %v455 = vrot.slane %v404, %v454
    %v456 = vlaneseq
    %v457 = vshrl.u32 %v456, 7
    %v458 = vsub.s32 0, %v457
    %v459 = vrot.slane %v412, %v458
    %v460 = vlaneseq
    %v461 = vshrl.u32 %v460, 7
    %v462 = vsub.s32 0, %v461
    %v463 = vrot.slane %v414, %v462
    %v464 = vlaneseq
    %v465 = vshrl.u32 %v464, 7
    %v466 = vsub.s32 0, %v465
    %v467 = vrot.slane %v397, %v466
    %v468 = vlaneseq
    %v469 = vshrl.u32 %v468, 7
    %v470 = vsub.s32 0, %v469
    %v471 = vrot.slane %v411, %v470
    %v472 = vlaneseq
    %v473 = vshrl.u32 %v472, 7
    %v474 = vsub.s32 0, %v473
    %v475 = vrot.slane %v413, %v474
    %v476 = vlaneseq
    %v477 = vshrl.u32 %v476, 7
    %v478 = vsub.s32 0, %v477
    %v479 = vrot.slane %v415, %v478
    %vm496 = vcmask 1040384
    %v497 = vsel %vm496, %v225, %v419
    %v498 = vsel %vm496, %v239, %v423
    %v499 = vsel %vm496, %v247, %v427
    %v500 = vsel %vm496, %v249, %v431
    %v501 = vsel %vm496, %v232, %v435
    %v502 = vsel %vm496, %v246, %v439
    %v503 = vsel %vm496, %v248, %v443
    %v504 = vsel %vm496, %v250, %v447
    %v505 = vsel %vm496, %v274, %v451
    %v506 = vsel %vm496, %v288, %v455
    %v507 = vsel %vm496, %v296, %v459
    %v508 = vsel %vm496, %v298, %v463
    %v509 = vsel %vm496, %v281, %v467
    %v510 = vsel %vm496, %v295, %v471
    %v511 = vsel %vm496, %v297, %v475
    %v512 = vsel %vm496, %v299, %v479
    %v514 = vlaneseq
    %v515 = vshrl.u32 %v514, 7
    %v516 = vsub.s32 0, %v515
    %v517 = vrot.slane %v34, %v516
    %v519 = vadd.f32 %v497, %v517
    %v520 = vadd.f32 %v498, %v517
    %v521 = vadd.f32 %v499, %v517
    %v522 = vadd.f32 %v500, %v517
    %v523 = vadd.f32 %v501, %v517
    %v524 = vadd.f32 %v502, %v517
    %v525 = vadd.f32 %v503, %v517
    %v526 = vadd.f32 %v504, %v517
    %v527 = vadd.f32 %v505, %v517
    %v528 = vadd.f32 %v506, %v517
    %v529 = vadd.f32 %v507, %v517
    %v530 = vadd.f32 %v508, %v517
    %v531 = vadd.f32 %v509, %v517
    %v532 = vadd.f32 %v510, %v517
    %v533 = vadd.f32 %v511, %v517
    %v534 = vadd.f32 %v512, %v517
    %vm535 = vcmask 261120
    %v537 = vsel %vm535, 0.0, 0
    %539 = vmatprep.subr.mxu0 0.0
    %540 = vmatpush1.msra.mxu0 0.0
    %541 = vmatprep.subr.mxu0 0.0
    %542 = vmatpush1.msra.mxu0 0.0
    %543 = vmatprep.subr.mxu0 0.0
    %544 = vmatpush1.msra.mxu0 0.0
    %545 = vmatprep.subr.mxu0 0.0
    %546 = vmatpush1.msra.mxu0 0.0
    %547 = vmatprep.subr.mxu0 0.0
    %548 = vmatpush1.msra.mxu0 0.0
    %549 = vmatprep.subr.mxu0 0.0
    %550 = vmatpush1.msra.mxu0 0.0
    %551 = vmatprep.subr.mxu0 0.0
    %552 = vmatpush1.msra.mxu0 0.0
    %553 = vmatprep.subr.mxu0 0.0
    %554 = vmatpush1.msra.mxu0 0.0
    %555 = vmatprep.subr.mxu0 0.0
    %556 = vmatpush1.msra.mxu0 0.0
    %557 = vmatprep.subr.mxu0 0.0
    %558 = vmatpush1.msra.mxu0 0.0
    %559 = vmatprep.subr.mxu0 0.0
    %560 = vmatpush1.msra.mxu0 0.0
    %561 = vmatprep.subr.mxu0 0.0
    %562 = vmatpush1.msra.mxu0 0.0
    %563 = vmatprep.subr.mxu0 0.0
    %564 = vmatpush1.msra.mxu0 %v33
    %565 = vmatprep.subr.mxu0 0.0
    %566 = vmatpush1.msra.mxu0 %v32
    %567 = vmatprep.subr.mxu0 0.0
    %568 = vmatpush1.msra.mxu0 %v31
    %569 = vmatprep.subr.mxu0 0.0
    %570 = vmatpush1.msra.mxu0 %v30
    %571 = vmatprep.subr.mxu0 0.0
    %572 = vmatpush2.msra.mxu0 0.0
    %573 = vmatprep.subr.mxu0 0.0
    %574 = vmatpush2.msra.mxu0 0.0
    %575 = vmatprep.subr.mxu0 0.0
    %576 = vmatpush2.msra.mxu0 0.0
    %577 = vmatprep.subr.mxu0 0.0
    %578 = vmatpush2.msra.mxu0 0.0
    %579 = vmatprep.subr.mxu0 0.0
    %580 = vmatpush2.msra.mxu0 0.0
    %581 = vmatprep.subr.mxu0 0.0
    %582 = vmatpush2.msra.mxu0 0.0
    %583 = vmatprep.subr.mxu0 0.0
    %584 = vmatpush2.msra.mxu0 0.0
    %585 = vmatprep.subr.mxu0 0.0
    %586 = vmatpush2.msra.mxu0 0.0
    %587 = vmatprep.subr.mxu0 0.0
    %588 = vmatpush2.msra.mxu0 0.0
    %589 = vmatprep.subr.mxu0 0.0
    %590 = vmatpush2.msra.mxu0 0.0
    %591 = vmatprep.subr.mxu0 0.0
    %592 = vmatpush2.msra.mxu0 0.0
    %593 = vmatprep.subr.mxu0 0.0
    %594 = vmatpush2.msra.mxu0 0.0
    %595 = vmatprep.subr.mxu0 0.0
    %596 = vmatpush2.msra.mxu0 0.0
    %597 = vmatprep.subr.mxu0 0.0
    %598 = vmatpush2.msra.mxu0 0.0
    %599 = vmatprep.subr.mxu0 0.0
    %600 = vmatpush2.msra.mxu0 0.0
    %601 = vmatprep.subr.mxu0 0.0
    %602 = vmatpush2.msra.mxu0 0.0
    %603 = vmatprep.mubr.f32.mxu0 0.0
    %604 = vmatmul.mubr.f32.gmra.mxu0 %v537
    %v605 = vpop.f32.mrf.mxu0
    %v606 = vadd.f32 0.0, %v605
    %v607 = vpop.f32.mrf.mxu0
    %608 = vdwg.mxu0
    %v609 = vadd.f32 %v519, %v606
    %v610 = vxor.u32 %v609, 2147483648
    %v611 = vmul.f32 %v610, 1.442695
    %v612 = vpow.pop %v611
    %v613 = vadd.f32 %v612, 1.0
    %v614 = vrcp.pop %v613
    %v615 = vmul.f32 1.0, %v614
    %v616 = vtanh.pop %v609
    %v617 = vmul.f32 %v615, 0.0
    %619 = vrot.lane.b32.xlu0 %v616, 64
    %v620 = vpop.permute.xlu0 %619
    %v622 = vmul.f32 %v615, %v620
    %624 = vrot.lane.b32.xlu0 %v622, 32
    %v625 = vpop.permute.xlu0 %624
    %v627 = vadd.f32 %v617, %v625
    %v628 = vtanh.pop %v627
    %630 = vrot.lane.b32.xlu0 %v628, 64
    %v631 = vpop.permute.xlu0 %630
    %v633 = vmul.f32 %v615, %v631
    %635 = vrot.lane.b32.xlu0 %v633, 32
    %v636 = vpop.permute.xlu0 %635
    %v637 = vsel %vm535, %v636, 0
    %639 = vmatprep.subr.mxu0 0.0
    %640 = vmatpush1.msra.mxu0 0.0
    %641 = vmatprep.subr.mxu0 0.0
    %642 = vmatpush1.msra.mxu0 0.0
    %643 = vmatprep.subr.mxu0 0.0
    %644 = vmatpush1.msra.mxu0 0.0
    %645 = vmatprep.subr.mxu0 0.0
    %646 = vmatpush1.msra.mxu0 0.0
    %647 = vmatprep.subr.mxu0 0.0
    %648 = vmatpush1.msra.mxu0 0.0
    %649 = vmatprep.subr.mxu0 0.0
    %650 = vmatpush1.msra.mxu0 0.0
    %651 = vmatprep.subr.mxu0 0.0
    %652 = vmatpush1.msra.mxu0 0.0
    %653 = vmatprep.subr.mxu0 0.0
    %654 = vmatpush1.msra.mxu0 0.0
    %655 = vmatprep.subr.mxu0 0.0
    %656 = vmatpush1.msra.mxu0 0.0
    %657 = vmatprep.subr.mxu0 0.0
    %658 = vmatpush1.msra.mxu0 0.0
    %659 = vmatprep.subr.mxu0 0.0
    %660 = vmatpush1.msra.mxu0 0.0
    %661 = vmatprep.subr.mxu0 0.0
    %662 = vmatpush1.msra.mxu0 0.0
    %663 = vmatprep.subr.mxu0 0.0
    %664 = vmatpush1.msra.mxu0 %v33
    %665 = vmatprep.subr.mxu0 0.0
    %666 = vmatpush1.msra.mxu0 %v32
    %667 = vmatprep.subr.mxu0 0.0
    %668 = vmatpush1.msra.mxu0 %v31
    %669 = vmatprep.subr.mxu0 0.0
    %670 = vmatpush1.msra.mxu0 %v30
    %671 = vmatprep.subr.mxu0 0.0
    %672 = vmatpush2.msra.mxu0 0.0
    %673 = vmatprep.subr.mxu0 0.0
    %674 = vmatpush2.msra.mxu0 0.0
    %675 = vmatprep.subr.mxu0 0.0
    %676 = vmatpush2.msra.mxu0 0.0
    %677 = vmatprep.subr.mxu0 0.0
    %678 = vmatpush2.msra.mxu0 0.0
    %679 = vmatprep.subr.mxu0 0.0
    %680 = vmatpush2.msra.mxu0 0.0
    %681 = vmatprep.subr.mxu0 0.0
    %682 = vmatpush2.msra.mxu0 0.0
    %683 = vmatprep.subr.mxu0 0.0
    %684 = vmatpush2.msra.mxu0 0.0
    %685 = vmatprep.subr.mxu0 0.0
    %686 = vmatpush2.msra.mxu0 0.0
    %687 = vmatprep.subr.mxu0 0.0
    %688 = vmatpush2.msra.mxu0 0.0
    %689 = vmatprep.subr.mxu0 0.0
    %690 = vmatpush2.msra.mxu0 0.0
    %691 = vmatprep.subr.mxu0 0.0
    %692 = vmatpush2.msra.mxu0 0.0
    %693 = vmatprep.subr.mxu0 0.0
    %694 = vmatpush2.msra.mxu0 0.0
    %695 = vmatprep.subr.mxu0 0.0
    %696 = vmatpush2.msra.mxu0 0.0
    %697 = vmatprep.subr.mxu0 0.0
    %698 = vmatpush2.msra.mxu0 0.0
    %699 = vmatprep.subr.mxu0 0.0
    %700 = vmatpush2.msra.mxu0 0.0
    %701 = vmatprep.subr.mxu0 0.0
    %702 = vmatpush2.msra.mxu0 0.0
    %703 = vmatprep.mubr.f32.mxu0 0.0
    %704 = vmatmul.mubr.f32.gmra.mxu0 %v637
    %v705 = vpop.f32.mrf.mxu0
    %v706 = vadd.f32 0.0, %v705
    %v707 = vpop.f32.mrf.mxu0
    %708 = vdwg.mxu0
    %v709 = vadd.f32 %v520, %v706
    %v710 = vxor.u32 %v709, 2147483648
    %v711 = vmul.f32 %v710, 1.442695
    %v712 = vpow.pop %v711
    %v713 = vadd.f32 %v712, 1.0
    %v714 = vrcp.pop %v713
    %v715 = vmul.f32 1.0, %v714
    %v716 = vtanh.pop %v709
    %v717 = vmul.f32 %v715, %v627
    %719 = vrot.lane.b32.xlu0 %v716, 64
    %v720 = vpop.permute.xlu0 %719
    %v722 = vmul.f32 %v715, %v720
    %724 = vrot.lane.b32.xlu0 %v722, 32
    %v725 = vpop.permute.xlu0 %724
    %v727 = vadd.f32 %v717, %v725
    %v728 = vtanh.pop %v727
    %730 = vrot.lane.b32.xlu0 %v728, 64
    %v731 = vpop.permute.xlu0 %730
    %v733 = vmul.f32 %v715, %v731
    %735 = vrot.lane.b32.xlu0 %v733, 32
    %v736 = vpop.permute.xlu0 %735
    %v737 = vsel %vm535, %v736, 0
    %739 = vmatprep.subr.mxu0 0.0
    %740 = vmatpush1.msra.mxu0 0.0
    %741 = vmatprep.subr.mxu0 0.0
    %742 = vmatpush1.msra.mxu0 0.0
    %743 = vmatprep.subr.mxu0 0.0
    %744 = vmatpush1.msra.mxu0 0.0
    %745 = vmatprep.subr.mxu0 0.0
    %746 = vmatpush1.msra.mxu0 0.0
    %747 = vmatprep.subr.mxu0 0.0
    %748 = vmatpush1.msra.mxu0 0.0
    %749 = vmatprep.subr.mxu0 0.0
    %750 = vmatpush1.msra.mxu0 0.0
    %751 = vmatprep.subr.mxu0 0.0
    %752 = vmatpush1.msra.mxu0 0.0
    %753 = vmatprep.subr.mxu0 0.0
    %754 = vmatpush1.msra.mxu0 0.0
    %755 = vmatprep.subr.mxu0 0.0
    %756 = vmatpush1.msra.mxu0 0.0
    %757 = vmatprep.subr.mxu0 0.0
    %758 = vmatpush1.msra.mxu0 0.0
    %759 = vmatprep.subr.mxu0 0.0
    %760 = vmatpush1.msra.mxu0 0.0
    %761 = vmatprep.subr.mxu0 0.0
    %762 = vmatpush1.msra.mxu0 0.0
    %763 = vmatprep.subr.mxu0 0.0
    %764 = vmatpush1.msra.mxu0 %v33
    %765 = vmatprep.subr.mxu0 0.0
    %766 = vmatpush1.msra.mxu0 %v32
    %767 = vmatprep.subr.mxu0 0.0
    %768 = vmatpush1.msra.mxu0 %v31
    %769 = vmatprep.subr.mxu0 0.0
    %770 = vmatpush1.msra.mxu0 %v30
    %771 = vmatprep.subr.mxu0 0.0
    %772 = vmatpush2.msra.mxu0 0.0
    %773 = vmatprep.subr.mxu0 0.0
    %774 = vmatpush2.msra.mxu0 0.0
    %775 = vmatprep.subr.mxu0 0.0
    %776 = vmatpush2.msra.mxu0 0.0
    %777 = vmatprep.subr.mxu0 0.0
    %778 = vmatpush2.msra.mxu0 0.0
    %779 = vmatprep.subr.mxu0 0.0
    %780 = vmatpush2.msra.mxu0 0.0
    %781 = vmatprep.subr.mxu0 0.0
    %782 = vmatpush2.msra.mxu0 0.0
    %783 = vmatprep.subr.mxu0 0.0
    %784 = vmatpush2.msra.mxu0 0.0
    %785 = vmatprep.subr.mxu0 0.0
    %786 = vmatpush2.msra.mxu0 0.0
    %787 = vmatprep.subr.mxu0 0.0
    %788 = vmatpush2.msra.mxu0 0.0
    %789 = vmatprep.subr.mxu0 0.0
    %790 = vmatpush2.msra.mxu0 0.0
    %791 = vmatprep.subr.mxu0 0.0
    %792 = vmatpush2.msra.mxu0 0.0
    %793 = vmatprep.subr.mxu0 0.0
    %794 = vmatpush2.msra.mxu0 0.0
    %795 = vmatprep.subr.mxu0 0.0
    %796 = vmatpush2.msra.mxu0 0.0
    %797 = vmatprep.subr.mxu0 0.0
    %798 = vmatpush2.msra.mxu0 0.0
    %799 = vmatprep.subr.mxu0 0.0
    %800 = vmatpush2.msra.mxu0 0.0
    %801 = vmatprep.subr.mxu0 0.0
    %802 = vmatpush2.msra.mxu0 0.0
    %803 = vmatprep.mubr.f32.mxu0 0.0
    %804 = vmatmul.mubr.f32.gmra.mxu0 %v737
    %v805 = vpop.f32.mrf.mxu0
    %v806 = vadd.f32 0.0, %v805
    %v807 = vpop.f32.mrf.mxu0
    %808 = vdwg.mxu0
    %v809 = vadd.f32 %v521, %v806
    %v810 = vxor.u32 %v809, 2147483648
    %v811 = vmul.f32 %v810, 1.442695
    %v812 = vpow.pop %v811
    %v813 = vadd.f32 %v812, 1.0
    %v814 = vrcp.pop %v813
    %v815 = vmul.f32 1.0, %v814
    %v816 = vtanh.pop %v809
    %v817 = vmul.f32 %v815, %v727
    %819 = vrot.lane.b32.xlu0 %v816, 64
    %v820 = vpop.permute.xlu0 %819
    %v822 = vmul.f32 %v815, %v820
    %824 = vrot.lane.b32.xlu0 %v822, 32
    %v825 = vpop.permute.xlu0 %824
    %v827 = vadd.f32 %v817, %v825
    %v828 = vtanh.pop %v827
    %830 = vrot.lane.b32.xlu0 %v828, 64
    %v831 = vpop.permute.xlu0 %830
    %v833 = vmul.f32 %v815, %v831
    %835 = vrot.lane.b32.xlu0 %v833, 32
    %v836 = vpop.permute.xlu0 %835
    %v837 = vsel %vm535, %v836, 0
    %839 = vmatprep.subr.mxu0 0.0
    %840 = vmatpush1.msra.mxu0 0.0
    %841 = vmatprep.subr.mxu0 0.0
    %842 = vmatpush1.msra.mxu0 0.0
    %843 = vmatprep.subr.mxu0 0.0
    %844 = vmatpush1.msra.mxu0 0.0
    %845 = vmatprep.subr.mxu0 0.0
    %846 = vmatpush1.msra.mxu0 0.0
    %847 = vmatprep.subr.mxu0 0.0
    %848 = vmatpush1.msra.mxu0 0.0
    %849 = vmatprep.subr.mxu0 0.0
    %850 = vmatpush1.msra.mxu0 0.0
    %851 = vmatprep.subr.mxu0 0.0
    %852 = vmatpush1.msra.mxu0 0.0
    %853 = vmatprep.subr.mxu0 0.0
    %854 = vmatpush1.msra.mxu0 0.0
    %855 = vmatprep.subr.mxu0 0.0
    %856 = vmatpush1.msra.mxu0 0.0
    %857 = vmatprep.subr.mxu0 0.0
    %858 = vmatpush1.msra.mxu0 0.0
    %859 = vmatprep.subr.mxu0 0.0
    %860 = vmatpush1.msra.mxu0 0.0
    %861 = vmatprep.subr.mxu0 0.0
    %862 = vmatpush1.msra.mxu0 0.0
    %863 = vmatprep.subr.mxu0 0.0
    %864 = vmatpush1.msra.mxu0 %v33
    %865 = vmatprep.subr.mxu0 0.0
    %866 = vmatpush1.msra.mxu0 %v32
    %867 = vmatprep.subr.mxu0 0.0
    %868 = vmatpush1.msra.mxu0 %v31
    %869 = vmatprep.subr.mxu0 0.0
    %870 = vmatpush1.msra.mxu0 %v30
    %871 = vmatprep.subr.mxu0 0.0
    %872 = vmatpush2.msra.mxu0 0.0
    %873 = vmatprep.subr.mxu0 0.0
    %874 = vmatpush2.msra.mxu0 0.0
    %875 = vmatprep.subr.mxu0 0.0
    %876 = vmatpush2.msra.mxu0 0.0
    %877 = vmatprep.subr.mxu0 0.0
    %878 = vmatpush2.msra.mxu0 0.0
    %879 = vmatprep.subr.mxu0 0.0
    %880 = vmatpush2.msra.mxu0 0.0
    %881 = vmatprep.subr.mxu0 0.0
    %882 = vmatpush2.msra.mxu0 0.0
    %883 = vmatprep.subr.mxu0 0.0
    %884 = vmatpush2.msra.mxu0 0.0
    %885 = vmatprep.subr.mxu0 0.0
    %886 = vmatpush2.msra.mxu0 0.0
    %887 = vmatprep.subr.mxu0 0.0
    %888 = vmatpush2.msra.mxu0 0.0
    %889 = vmatprep.subr.mxu0 0.0
    %890 = vmatpush2.msra.mxu0 0.0
    %891 = vmatprep.subr.mxu0 0.0
    %892 = vmatpush2.msra.mxu0 0.0
    %893 = vmatprep.subr.mxu0 0.0
    %894 = vmatpush2.msra.mxu0 0.0
    %895 = vmatprep.subr.mxu0 0.0
    %896 = vmatpush2.msra.mxu0 0.0
    %897 = vmatprep.subr.mxu0 0.0
    %898 = vmatpush2.msra.mxu0 0.0
    %899 = vmatprep.subr.mxu0 0.0
    %900 = vmatpush2.msra.mxu0 0.0
    %901 = vmatprep.subr.mxu0 0.0
    %902 = vmatpush2.msra.mxu0 0.0
    %903 = vmatprep.mubr.f32.mxu0 0.0
    %904 = vmatmul.mubr.f32.gmra.mxu0 %v837
    %v905 = vpop.f32.mrf.mxu0
    %v906 = vadd.f32 0.0, %v905
    %v907 = vpop.f32.mrf.mxu0
    %908 = vdwg.mxu0
    %v909 = vadd.f32 %v522, %v906
    %v910 = vxor.u32 %v909, 2147483648
    %v911 = vmul.f32 %v910, 1.442695
    %v912 = vpow.pop %v911
    %v913 = vadd.f32 %v912, 1.0
    %v914 = vrcp.pop %v913
    %v915 = vmul.f32 1.0, %v914
    %v916 = vtanh.pop %v909
    %v917 = vmul.f32 %v915, %v827
    %919 = vrot.lane.b32.xlu0 %v916, 64
    %v920 = vpop.permute.xlu0 %919
    %v922 = vmul.f32 %v915, %v920
    %924 = vrot.lane.b32.xlu0 %v922, 32
    %v925 = vpop.permute.xlu0 %924
    %v927 = vadd.f32 %v917, %v925
    %v928 = vtanh.pop %v927
    %930 = vrot.lane.b32.xlu0 %v928, 64
    %v931 = vpop.permute.xlu0 %930
    %v933 = vmul.f32 %v915, %v931
    %935 = vrot.lane.b32.xlu0 %v933, 32
    %v936 = vpop.permute.xlu0 %935
    %v937 = vsel %vm535, %v936, 0
    %939 = vmatprep.subr.mxu0 0.0
    %940 = vmatpush1.msra.mxu0 0.0
    %941 = vmatprep.subr.mxu0 0.0
    %942 = vmatpush1.msra.mxu0 0.0
    %943 = vmatprep.subr.mxu0 0.0
    %944 = vmatpush1.msra.mxu0 0.0
    %945 = vmatprep.subr.mxu0 0.0
    %946 = vmatpush1.msra.mxu0 0.0
    %947 = vmatprep.subr.mxu0 0.0
    %948 = vmatpush1.msra.mxu0 0.0
    %949 = vmatprep.subr.mxu0 0.0
    %950 = vmatpush1.msra.mxu0 0.0
    %951 = vmatprep.subr.mxu0 0.0
    %952 = vmatpush1.msra.mxu0 0.0
    %953 = vmatprep.subr.mxu0 0.0
    %954 = vmatpush1.msra.mxu0 0.0
    %955 = vmatprep.subr.mxu0 0.0
    %956 = vmatpush1.msra.mxu0 0.0
    %957 = vmatprep.subr.mxu0 0.0
    %958 = vmatpush1.msra.mxu0 0.0
    %959 = vmatprep.subr.mxu0 0.0
    %960 = vmatpush1.msra.mxu0 0.0
    %961 = vmatprep.subr.mxu0 0.0
    %962 = vmatpush1.msra.mxu0 0.0
    %963 = vmatprep.subr.mxu0 0.0
    %964 = vmatpush1.msra.mxu0 %v33
    %965 = vmatprep.subr.mxu0 0.0
    %966 = vmatpush1.msra.mxu0 %v32
    %967 = vmatprep.subr.mxu0 0.0
    %968 = vmatpush1.msra.mxu0 %v31
    %969 = vmatprep.subr.mxu0 0.0
    %970 = vmatpush1.msra.mxu0 %v30
    %971 = vmatprep.subr.mxu0 0.0
    %972 = vmatpush2.msra.mxu0 0.0
    %973 = vmatprep.subr.mxu0 0.0
    %974 = vmatpush2.msra.mxu0 0.0
    %975 = vmatprep.subr.mxu0 0.0
    %976 = vmatpush2.msra.mxu0 0.0
    %977 = vmatprep.subr.mxu0 0.0
    %978 = vmatpush2.msra.mxu0 0.0
    %979 = vmatprep.subr.mxu0 0.0
    %980 = vmatpush2.msra.mxu0 0.0
    %981 = vmatprep.subr.mxu0 0.0
    %982 = vmatpush2.msra.mxu0 0.0
    %983 = vmatprep.subr.mxu0 0.0
    %984 = vmatpush2.msra.mxu0 0.0
    %985 = vmatprep.subr.mxu0 0.0
    %986 = vmatpush2.msra.mxu0 0.0
    %987 = vmatprep.subr.mxu0 0.0
    %988 = vmatpush2.msra.mxu0 0.0
    %989 = vmatprep.subr.mxu0 0.0
    %990 = vmatpush2.msra.mxu0 0.0
    %991 = vmatprep.subr.mxu0 0.0
    %992 = vmatpush2.msra.mxu0 0.0
    %993 = vmatprep.subr.mxu0 0.0
    %994 = vmatpush2.msra.mxu0 0.0
    %995 = vmatprep.subr.mxu0 0.0
    %996 = vmatpush2.msra.mxu0 0.0
    %997 = vmatprep.subr.mxu0 0.0
    %998 = vmatpush2.msra.mxu0 0.0
    %999 = vmatprep.subr.mxu0 0.0
    %1000 = vmatpush2.msra.mxu0 0.0
    %1001 = vmatprep.subr.mxu0 0.0
    %1002 = vmatpush2.msra.mxu0 0.0
    %1003 = vmatprep.mubr.f32.mxu0 0.0
    %1004 = vmatmul.mubr.f32.gmra.mxu0 %v937
    %v1005 = vpop.f32.mrf.mxu0
    %v1006 = vadd.f32 0.0, %v1005
    %v1007 = vpop.f32.mrf.mxu0
    %1008 = vdwg.mxu0
    %v1009 = vadd.f32 %v523, %v1006
    %v1010 = vxor.u32 %v1009, 2147483648
    %v1011 = vmul.f32 %v1010, 1.442695
    %v1012 = vpow.pop %v1011
    %v1013 = vadd.f32 %v1012, 1.0
    %v1014 = vrcp.pop %v1013
    %v1015 = vmul.f32 1.0, %v1014
    %v1016 = vtanh.pop %v1009
    %v1017 = vmul.f32 %v1015, %v927
    %1019 = vrot.lane.b32.xlu0 %v1016, 64
    %v1020 = vpop.permute.xlu0 %1019
    %v1022 = vmul.f32 %v1015, %v1020
    %1024 = vrot.lane.b32.xlu0 %v1022, 32
    %v1025 = vpop.permute.xlu0 %1024
    %v1027 = vadd.f32 %v1017, %v1025
    %v1028 = vtanh.pop %v1027
    %1030 = vrot.lane.b32.xlu0 %v1028, 64
    %v1031 = vpop.permute.xlu0 %1030
    %v1033 = vmul.f32 %v1015, %v1031
    %1035 = vrot.lane.b32.xlu0 %v1033, 32
    %v1036 = vpop.permute.xlu0 %1035
    %v1037 = vsel %vm535, %v1036, 0
    %1039 = vmatprep.subr.mxu0 0.0
    %1040 = vmatpush1.msra.mxu0 0.0
    %1041 = vmatprep.subr.mxu0 0.0
    %1042 = vmatpush1.msra.mxu0 0.0
    %1043 = vmatprep.subr.mxu0 0.0
    %1044 = vmatpush1.msra.mxu0 0.0
    %1045 = vmatprep.subr.mxu0 0.0
    %1046 = vmatpush1.msra.mxu0 0.0
    %1047 = vmatprep.subr.mxu0 0.0
    %1048 = vmatpush1.msra.mxu0 0.0
    %1049 = vmatprep.subr.mxu0 0.0
    %1050 = vmatpush1.msra.mxu0 0.0
    %1051 = vmatprep.subr.mxu0 0.0
    %1052 = vmatpush1.msra.mxu0 0.0
    %1053 = vmatprep.subr.mxu0 0.0
    %1054 = vmatpush1.msra.mxu0 0.0
    %1055 = vmatprep.subr.mxu0 0.0
    %1056 = vmatpush1.msra.mxu0 0.0
    %1057 = vmatprep.subr.mxu0 0.0
    %1058 = vmatpush1.msra.mxu0 0.0
    %1059 = vmatprep.subr.mxu0 0.0
    %1060 = vmatpush1.msra.mxu0 0.0
    %1061 = vmatprep.subr.mxu0 0.0
    %1062 = vmatpush1.msra.mxu0 0.0
    %1063 = vmatprep.subr.mxu0 0.0
    %1064 = vmatpush1.msra.mxu0 %v33
    %1065 = vmatprep.subr.mxu0 0.0
    %1066 = vmatpush1.msra.mxu0 %v32
    %1067 = vmatprep.subr.mxu0 0.0
    %1068 = vmatpush1.msra.mxu0 %v31
    %1069 = vmatprep.subr.mxu0 0.0
    %1070 = vmatpush1.msra.mxu0 %v30
    %1071 = vmatprep.subr.mxu0 0.0
    %1072 = vmatpush2.msra.mxu0 0.0
    %1073 = vmatprep.subr.mxu0 0.0
    %1074 = vmatpush2.msra.mxu0 0.0
    %1075 = vmatprep.subr.mxu0 0.0
    %1076 = vmatpush2.msra.mxu0 0.0
    %1077 = vmatprep.subr.mxu0 0.0
    %1078 = vmatpush2.msra.mxu0 0.0
    %1079 = vmatprep.subr.mxu0 0.0
    %1080 = vmatpush2.msra.mxu0 0.0
    %1081 = vmatprep.subr.mxu0 0.0
    %1082 = vmatpush2.msra.mxu0 0.0
    %1083 = vmatprep.subr.mxu0 0.0
    %1084 = vmatpush2.msra.mxu0 0.0
    %1085 = vmatprep.subr.mxu0 0.0
    %1086 = vmatpush2.msra.mxu0 0.0
    %1087 = vmatprep.subr.mxu0 0.0
    %1088 = vmatpush2.msra.mxu0 0.0
    %1089 = vmatprep.subr.mxu0 0.0
    %1090 = vmatpush2.msra.mxu0 0.0
    %1091 = vmatprep.subr.mxu0 0.0
    %1092 = vmatpush2.msra.mxu0 0.0
    %1093 = vmatprep.subr.mxu0 0.0
    %1094 = vmatpush2.msra.mxu0 0.0
    %1095 = vmatprep.subr.mxu0 0.0
    %1096 = vmatpush2.msra.mxu0 0.0
    %1097 = vmatprep.subr.mxu0 0.0
    %1098 = vmatpush2.msra.mxu0 0.0
    %1099 = vmatprep.subr.mxu0 0.0
    %1100 = vmatpush2.msra.mxu0 0.0
    %1101 = vmatprep.subr.mxu0 0.0
    %1102 = vmatpush2.msra.mxu0 0.0
    %1103 = vmatprep.mubr.f32.mxu0 0.0
    %1104 = vmatmul.mubr.f32.gmra.mxu0 %v1037
    %v1105 = vpop.f32.mrf.mxu0
    %v1106 = vadd.f32 0.0, %v1105
    %v1107 = vpop.f32.mrf.mxu0
    %1108 = vdwg.mxu0
    %v1109 = vadd.f32 %v524, %v1106
    %v1110 = vxor.u32 %v1109, 2147483648
    %v1111 = vmul.f32 %v1110, 1.442695
    %v1112 = vpow.pop %v1111
    %v1113 = vadd.f32 %v1112, 1.0
    %v1114 = vrcp.pop %v1113
    %v1115 = vmul.f32 1.0, %v1114
    %v1116 = vtanh.pop %v1109
    %v1117 = vmul.f32 %v1115, %v1027
    %1119 = vrot.lane.b32.xlu0 %v1116, 64
    %v1120 = vpop.permute.xlu0 %1119
    %v1122 = vmul.f32 %v1115, %v1120
    %1124 = vrot.lane.b32.xlu0 %v1122, 32
    %v1125 = vpop.permute.xlu0 %1124
    %v1127 = vadd.f32 %v1117, %v1125
    %v1128 = vtanh.pop %v1127
    %1130 = vrot.lane.b32.xlu0 %v1128, 64
    %v1131 = vpop.permute.xlu0 %1130
    %v1133 = vmul.f32 %v1115, %v1131
    %1135 = vrot.lane.b32.xlu0 %v1133, 32
    %v1136 = vpop.permute.xlu0 %1135
    %v1137 = vsel %vm535, %v1136, 0
    %1139 = vmatprep.subr.mxu0 0.0
    %1140 = vmatpush1.msra.mxu0 0.0
    %1141 = vmatprep.subr.mxu0 0.0
    %1142 = vmatpush1.msra.mxu0 0.0
    %1143 = vmatprep.subr.mxu0 0.0
    %1144 = vmatpush1.msra.mxu0 0.0
    %1145 = vmatprep.subr.mxu0 0.0
    %1146 = vmatpush1.msra.mxu0 0.0
    %1147 = vmatprep.subr.mxu0 0.0
    %1148 = vmatpush1.msra.mxu0 0.0
    %1149 = vmatprep.subr.mxu0 0.0
    %1150 = vmatpush1.msra.mxu0 0.0
    %1151 = vmatprep.subr.mxu0 0.0
    %1152 = vmatpush1.msra.mxu0 0.0
    %1153 = vmatprep.subr.mxu0 0.0
    %1154 = vmatpush1.msra.mxu0 0.0
    %1155 = vmatprep.subr.mxu0 0.0
    %1156 = vmatpush1.msra.mxu0 0.0
    %1157 = vmatprep.subr.mxu0 0.0
    %1158 = vmatpush1.msra.mxu0 0.0
    %1159 = vmatprep.subr.mxu0 0.0
    %1160 = vmatpush1.msra.mxu0 0.0
    %1161 = vmatprep.subr.mxu0 0.0
    %1162 = vmatpush1.msra.mxu0 0.0
    %1163 = vmatprep.subr.mxu0 0.0
    %1164 = vmatpush1.msra.mxu0 %v33
    %1165 = vmatprep.subr.mxu0 0.0
    %1166 = vmatpush1.msra.mxu0 %v32
    %1167 = vmatprep.subr.mxu0 0.0
    %1168 = vmatpush1.msra.mxu0 %v31
    %1169 = vmatprep.subr.mxu0 0.0
    %1170 = vmatpush1.msra.mxu0 %v30
    %1171 = vmatprep.subr.mxu0 0.0
    %1172 = vmatpush2.msra.mxu0 0.0
    %1173 = vmatprep.subr.mxu0 0.0
    %1174 = vmatpush2.msra.mxu0 0.0
    %1175 = vmatprep.subr.mxu0 0.0
    %1176 = vmatpush2.msra.mxu0 0.0
    %1177 = vmatprep.subr.mxu0 0.0
    %1178 = vmatpush2.msra.mxu0 0.0
    %1179 = vmatprep.subr.mxu0 0.0
    %1180 = vmatpush2.msra.mxu0 0.0
    %1181 = vmatprep.subr.mxu0 0.0
    %1182 = vmatpush2.msra.mxu0 0.0
    %1183 = vmatprep.subr.mxu0 0.0
    %1184 = vmatpush2.msra.mxu0 0.0
    %1185 = vmatprep.subr.mxu0 0.0
    %1186 = vmatpush2.msra.mxu0 0.0
    %1187 = vmatprep.subr.mxu0 0.0
    %1188 = vmatpush2.msra.mxu0 0.0
    %1189 = vmatprep.subr.mxu0 0.0
    %1190 = vmatpush2.msra.mxu0 0.0
    %1191 = vmatprep.subr.mxu0 0.0
    %1192 = vmatpush2.msra.mxu0 0.0
    %1193 = vmatprep.subr.mxu0 0.0
    %1194 = vmatpush2.msra.mxu0 0.0
    %1195 = vmatprep.subr.mxu0 0.0
    %1196 = vmatpush2.msra.mxu0 0.0
    %1197 = vmatprep.subr.mxu0 0.0
    %1198 = vmatpush2.msra.mxu0 0.0
    %1199 = vmatprep.subr.mxu0 0.0
    %1200 = vmatpush2.msra.mxu0 0.0
    %1201 = vmatprep.subr.mxu0 0.0
    %1202 = vmatpush2.msra.mxu0 0.0
    %1203 = vmatprep.mubr.f32.mxu0 0.0
    %1204 = vmatmul.mubr.f32.gmra.mxu0 %v1137
    %v1205 = vpop.f32.mrf.mxu0
    %v1206 = vadd.f32 0.0, %v1205
    %v1207 = vpop.f32.mrf.mxu0
    %1208 = vdwg.mxu0
    %v1209 = vadd.f32 %v525, %v1206
    %v1210 = vxor.u32 %v1209, 2147483648
    %v1211 = vmul.f32 %v1210, 1.442695
    %v1212 = vpow.pop %v1211
    %v1213 = vadd.f32 %v1212, 1.0
    %v1214 = vrcp.pop %v1213
    %v1215 = vmul.f32 1.0, %v1214
    %v1216 = vtanh.pop %v1209
    %v1217 = vmul.f32 %v1215, %v1127
    %1219 = vrot.lane.b32.xlu0 %v1216, 64
    %v1220 = vpop.permute.xlu0 %1219
    %v1222 = vmul.f32 %v1215, %v1220
    %1224 = vrot.lane.b32.xlu0 %v1222, 32
    %v1225 = vpop.permute.xlu0 %1224
    %v1227 = vadd.f32 %v1217, %v1225
    %v1228 = vtanh.pop %v1227
    %1230 = vrot.lane.b32.xlu0 %v1228, 64
    %v1231 = vpop.permute.xlu0 %1230
    %v1233 = vmul.f32 %v1215, %v1231
    %1235 = vrot.lane.b32.xlu0 %v1233, 32
    %v1236 = vpop.permute.xlu0 %1235
    %v1237 = vsel %vm535, %v1236, 0
    %1239 = vmatprep.subr.mxu0 0.0
    %1240 = vmatpush1.msra.mxu0 0.0
    %1241 = vmatprep.subr.mxu0 0.0
    %1242 = vmatpush1.msra.mxu0 0.0
    %1243 = vmatprep.subr.mxu0 0.0
    %1244 = vmatpush1.msra.mxu0 0.0
    %1245 = vmatprep.subr.mxu0 0.0
    %1246 = vmatpush1.msra.mxu0 0.0
    %1247 = vmatprep.subr.mxu0 0.0
    %1248 = vmatpush1.msra.mxu0 0.0
    %1249 = vmatprep.subr.mxu0 0.0
    %1250 = vmatpush1.msra.mxu0 0.0
    %1251 = vmatprep.subr.mxu0 0.0
    %1252 = vmatpush1.msra.mxu0 0.0
    %1253 = vmatprep.subr.mxu0 0.0
    %1254 = vmatpush1.msra.mxu0 0.0
    %1255 = vmatprep.subr.mxu0 0.0
    %1256 = vmatpush1.msra.mxu0 0.0
    %1257 = vmatprep.subr.mxu0 0.0
    %1258 = vmatpush1.msra.mxu0 0.0
    %1259 = vmatprep.subr.mxu0 0.0
    %1260 = vmatpush1.msra.mxu0 0.0
    %1261 = vmatprep.subr.mxu0 0.0
    %1262 = vmatpush1.msra.mxu0 0.0
    %1263 = vmatprep.subr.mxu0 0.0
    %1264 = vmatpush1.msra.mxu0 %v33
    %1265 = vmatprep.subr.mxu0 0.0
    %1266 = vmatpush1.msra.mxu0 %v32
    %1267 = vmatprep.subr.mxu0 0.0
    %1268 = vmatpush1.msra.mxu0 %v31
    %1269 = vmatprep.subr.mxu0 0.0
    %1270 = vmatpush1.msra.mxu0 %v30
    %1271 = vmatprep.subr.mxu0 0.0
    %1272 = vmatpush2.msra.mxu0 0.0
    %1273 = vmatprep.subr.mxu0 0.0
    %1274 = vmatpush2.msra.mxu0 0.0
    %1275 = vmatprep.subr.mxu0 0.0
    %1276 = vmatpush2.msra.mxu0 0.0
    %1277 = vmatprep.subr.mxu0 0.0
    %1278 = vmatpush2.msra.mxu0 0.0
    %1279 = vmatprep.subr.mxu0 0.0
    %1280 = vmatpush2.msra.mxu0 0.0
    %1281 = vmatprep.subr.mxu0 0.0
    %1282 = vmatpush2.msra.mxu0 0.0
    %1283 = vmatprep.subr.mxu0 0.0
    %1284 = vmatpush2.msra.mxu0 0.0
    %1285 = vmatprep.subr.mxu0 0.0
    %1286 = vmatpush2.msra.mxu0 0.0
    %1287 = vmatprep.subr.mxu0 0.0
    %1288 = vmatpush2.msra.mxu0 0.0
    %1289 = vmatprep.subr.mxu0 0.0
    %1290 = vmatpush2.msra.mxu0 0.0
    %1291 = vmatprep.subr.mxu0 0.0
    %1292 = vmatpush2.msra.mxu0 0.0
    %1293 = vmatprep.subr.mxu0 0.0
    %1294 = vmatpush2.msra.mxu0 0.0
    %1295 = vmatprep.subr.mxu0 0.0
    %1296 = vmatpush2.msra.mxu0 0.0
    %1297 = vmatprep.subr.mxu0 0.0
    %1298 = vmatpush2.msra.mxu0 0.0
    %1299 = vmatprep.subr.mxu0 0.0
    %1300 = vmatpush2.msra.mxu0 0.0
    %1301 = vmatprep.subr.mxu0 0.0
    %1302 = vmatpush2.msra.mxu0 0.0
    %1303 = vmatprep.mubr.f32.mxu0 0.0
    %1304 = vmatmul.mubr.f32.gmra.mxu0 %v1237
    %v1305 = vpop.f32.mrf.mxu0
    %v1306 = vadd.f32 0.0, %v1305
    %v1307 = vpop.f32.mrf.mxu0
    %1308 = vdwg.mxu0
    %v1309 = vadd.f32 %v526, %v1306
    %v1310 = vxor.u32 %v1309, 2147483648
    %v1311 = vmul.f32 %v1310, 1.442695
    %v1312 = vpow.pop %v1311
    %v1313 = vadd.f32 %v1312, 1.0
    %v1314 = vrcp.pop %v1313
    %v1315 = vmul.f32 1.0, %v1314
    %v1316 = vtanh.pop %v1309
    %v1317 = vmul.f32 %v1315, %v1227
    %1319 = vrot.lane.b32.xlu0 %v1316, 64
    %v1320 = vpop.permute.xlu0 %1319
    %v1322 = vmul.f32 %v1315, %v1320
    %1324 = vrot.lane.b32.xlu0 %v1322, 32
    %v1325 = vpop.permute.xlu0 %1324
    %v1327 = vadd.f32 %v1317, %v1325
    %v1328 = vtanh.pop %v1327
    %1330 = vrot.lane.b32.xlu0 %v1328, 64
    %v1331 = vpop.permute.xlu0 %1330
    %v1333 = vmul.f32 %v1315, %v1331
    %1335 = vrot.lane.b32.xlu0 %v1333, 32
    %v1336 = vpop.permute.xlu0 %1335
    %v1337 = vsel %vm535, %v1336, 0
    %1339 = vmatprep.subr.mxu0 0.0
    %1340 = vmatpush1.msra.mxu0 0.0
    %1341 = vmatprep.subr.mxu0 0.0
    %1342 = vmatpush1.msra.mxu0 0.0
    %1343 = vmatprep.subr.mxu0 0.0
    %1344 = vmatpush1.msra.mxu0 0.0
    %1345 = vmatprep.subr.mxu0 0.0
    %1346 = vmatpush1.msra.mxu0 0.0
    %1347 = vmatprep.subr.mxu0 0.0
    %1348 = vmatpush1.msra.mxu0 0.0
    %1349 = vmatprep.subr.mxu0 0.0
    %1350 = vmatpush1.msra.mxu0 0.0
    %1351 = vmatprep.subr.mxu0 0.0
    %1352 = vmatpush1.msra.mxu0 0.0
    %1353 = vmatprep.subr.mxu0 0.0
    %1354 = vmatpush1.msra.mxu0 0.0
    %1355 = vmatprep.subr.mxu0 0.0
    %1356 = vmatpush1.msra.mxu0 0.0
    %1357 = vmatprep.subr.mxu0 0.0
    %1358 = vmatpush1.msra.mxu0 0.0
    %1359 = vmatprep.subr.mxu0 0.0
    %1360 = vmatpush1.msra.mxu0 0.0
    %1361 = vmatprep.subr.mxu0 0.0
    %1362 = vmatpush1.msra.mxu0 0.0
    %1363 = vmatprep.subr.mxu0 0.0
    %1364 = vmatpush1.msra.mxu0 %v33
    %1365 = vmatprep.subr.mxu0 0.0
    %1366 = vmatpush1.msra.mxu0 %v32
    %1367 = vmatprep.subr.mxu0 0.0
    %1368 = vmatpush1.msra.mxu0 %v31
    %1369 = vmatprep.subr.mxu0 0.0
    %1370 = vmatpush1.msra.mxu0 %v30
    %1371 = vmatprep.subr.mxu0 0.0
    %1372 = vmatpush2.msra.mxu0 0.0
    %1373 = vmatprep.subr.mxu0 0.0
    %1374 = vmatpush2.msra.mxu0 0.0
    %1375 = vmatprep.subr.mxu0 0.0
    %1376 = vmatpush2.msra.mxu0 0.0
    %1377 = vmatprep.subr.mxu0 0.0
    %1378 = vmatpush2.msra.mxu0 0.0
    %1379 = vmatprep.subr.mxu0 0.0
    %1380 = vmatpush2.msra.mxu0 0.0
    %1381 = vmatprep.subr.mxu0 0.0
    %1382 = vmatpush2.msra.mxu0 0.0
    %1383 = vmatprep.subr.mxu0 0.0
    %1384 = vmatpush2.msra.mxu0 0.0
    %1385 = vmatprep.subr.mxu0 0.0
    %1386 = vmatpush2.msra.mxu0 0.0
    %1387 = vmatprep.subr.mxu0 0.0
    %1388 = vmatpush2.msra.mxu0 0.0
    %1389 = vmatprep.subr.mxu0 0.0
    %1390 = vmatpush2.msra.mxu0 0.0
    %1391 = vmatprep.subr.mxu0 0.0
    %1392 = vmatpush2.msra.mxu0 0.0
    %1393 = vmatprep.subr.mxu0 0.0
    %1394 = vmatpush2.msra.mxu0 0.0
    %1395 = vmatprep.subr.mxu0 0.0
    %1396 = vmatpush2.msra.mxu0 0.0
    %1397 = vmatprep.subr.mxu0 0.0
    %1398 = vmatpush2.msra.mxu0 0.0
    %1399 = vmatprep.subr.mxu0 0.0
    %1400 = vmatpush2.msra.mxu0 0.0
    %1401 = vmatprep.subr.mxu0 0.0
    %1402 = vmatpush2.msra.mxu0 0.0
    %1403 = vmatprep.mubr.f32.mxu0 0.0
    %1404 = vmatmul.mubr.f32.gmra.mxu0 %v1337
    %v1405 = vpop.f32.mrf.mxu0
    %v1406 = vadd.f32 0.0, %v1405
    %v1407 = vpop.f32.mrf.mxu0
    %1408 = vdwg.mxu0
    %v1409 = vadd.f32 %v527, %v1406
    %v1410 = vxor.u32 %v1409, 2147483648
    %v1411 = vmul.f32 %v1410, 1.442695
    %v1412 = vpow.pop %v1411
    %v1413 = vadd.f32 %v1412, 1.0
    %v1414 = vrcp.pop %v1413
    %v1415 = vmul.f32 1.0, %v1414
    %v1416 = vtanh.pop %v1409
    %v1417 = vmul.f32 %v1415, %v1327
    %1419 = vrot.lane.b32.xlu0 %v1416, 64
    %v1420 = vpop.permute.xlu0 %1419
    %v1422 = vmul.f32 %v1415, %v1420
    %1424 = vrot.lane.b32.xlu0 %v1422, 32
    %v1425 = vpop.permute.xlu0 %1424
    %v1427 = vadd.f32 %v1417, %v1425
    %v1428 = vtanh.pop %v1427
    %1430 = vrot.lane.b32.xlu0 %v1428, 64
    %v1431 = vpop.permute.xlu0 %1430
    %v1433 = vmul.f32 %v1415, %v1431
    %1435 = vrot.lane.b32.xlu0 %v1433, 32
    %v1436 = vpop.permute.xlu0 %1435
    %v1437 = vsel %vm535, %v1436, 0
    %1439 = vmatprep.subr.mxu0 0.0
    %1440 = vmatpush1.msra.mxu0 0.0
    %1441 = vmatprep.subr.mxu0 0.0
    %1442 = vmatpush1.msra.mxu0 0.0
    %1443 = vmatprep.subr.mxu0 0.0
    %1444 = vmatpush1.msra.mxu0 0.0
    %1445 = vmatprep.subr.mxu0 0.0
    %1446 = vmatpush1.msra.mxu0 0.0
    %1447 = vmatprep.subr.mxu0 0.0
    %1448 = vmatpush1.msra.mxu0 0.0
    %1449 = vmatprep.subr.mxu0 0.0
    %1450 = vmatpush1.msra.mxu0 0.0
    %1451 = vmatprep.subr.mxu0 0.0
    %1452 = vmatpush1.msra.mxu0 0.0
    %1453 = vmatprep.subr.mxu0 0.0
    %1454 = vmatpush1.msra.mxu0 0.0
    %1455 = vmatprep.subr.mxu0 0.0
    %1456 = vmatpush1.msra.mxu0 0.0
    %1457 = vmatprep.subr.mxu0 0.0
    %1458 = vmatpush1.msra.mxu0 0.0
    %1459 = vmatprep.subr.mxu0 0.0
    %1460 = vmatpush1.msra.mxu0 0.0
    %1461 = vmatprep.subr.mxu0 0.0
    %1462 = vmatpush1.msra.mxu0 0.0
    %1463 = vmatprep.subr.mxu0 0.0
    %1464 = vmatpush1.msra.mxu0 %v33
    %1465 = vmatprep.subr.mxu0 0.0
    %1466 = vmatpush1.msra.mxu0 %v32
    %1467 = vmatprep.subr.mxu0 0.0
    %1468 = vmatpush1.msra.mxu0 %v31
    %1469 = vmatprep.subr.mxu0 0.0
    %1470 = vmatpush1.msra.mxu0 %v30
    %1471 = vmatprep.subr.mxu0 0.0
    %1472 = vmatpush2.msra.mxu0 0.0
    %1473 = vmatprep.subr.mxu0 0.0
    %1474 = vmatpush2.msra.mxu0 0.0
    %1475 = vmatprep.subr.mxu0 0.0
    %1476 = vmatpush2.msra.mxu0 0.0
    %1477 = vmatprep.subr.mxu0 0.0
    %1478 = vmatpush2.msra.mxu0 0.0
    %1479 = vmatprep.subr.mxu0 0.0
    %1480 = vmatpush2.msra.mxu0 0.0
    %1481 = vmatprep.subr.mxu0 0.0
    %1482 = vmatpush2.msra.mxu0 0.0
    %1483 = vmatprep.subr.mxu0 0.0
    %1484 = vmatpush2.msra.mxu0 0.0
    %1485 = vmatprep.subr.mxu0 0.0
    %1486 = vmatpush2.msra.mxu0 0.0
    %1487 = vmatprep.subr.mxu0 0.0
    %1488 = vmatpush2.msra.mxu0 0.0
    %1489 = vmatprep.subr.mxu0 0.0
    %1490 = vmatpush2.msra.mxu0 0.0
    %1491 = vmatprep.subr.mxu0 0.0
    %1492 = vmatpush2.msra.mxu0 0.0
    %1493 = vmatprep.subr.mxu0 0.0
    %1494 = vmatpush2.msra.mxu0 0.0
    %1495 = vmatprep.subr.mxu0 0.0
    %1496 = vmatpush2.msra.mxu0 0.0
    %1497 = vmatprep.subr.mxu0 0.0
    %1498 = vmatpush2.msra.mxu0 0.0
    %1499 = vmatprep.subr.mxu0 0.0
    %1500 = vmatpush2.msra.mxu0 0.0
    %1501 = vmatprep.subr.mxu0 0.0
    %1502 = vmatpush2.msra.mxu0 0.0
    %1503 = vmatprep.mubr.f32.mxu0 0.0
    %1504 = vmatmul.mubr.f32.gmra.mxu0 %v1437
    %v1505 = vpop.f32.mrf.mxu0
    %v1506 = vadd.f32 0.0, %v1505
    %v1507 = vpop.f32.mrf.mxu0
    %1508 = vdwg.mxu0
    %v1509 = vadd.f32 %v528, %v1506
    %v1510 = vxor.u32 %v1509, 2147483648
    %v1511 = vmul.f32 %v1510, 1.442695
    %v1512 = vpow.pop %v1511
    %v1513 = vadd.f32 %v1512, 1.0
    %v1514 = vrcp.pop %v1513
    %v1515 = vmul.f32 1.0, %v1514
    %v1516 = vtanh.pop %v1509
    %v1517 = vmul.f32 %v1515, %v1427
    %1519 = vrot.lane.b32.xlu0 %v1516, 64
    %v1520 = vpop.permute.xlu0 %1519
    %v1522 = vmul.f32 %v1515, %v1520
    %1524 = vrot.lane.b32.xlu0 %v1522, 32
    %v1525 = vpop.permute.xlu0 %1524
    %v1527 = vadd.f32 %v1517, %v1525
    %v1528 = vtanh.pop %v1527
    %1530 = vrot.lane.b32.xlu0 %v1528, 64
    %v1531 = vpop.permute.xlu0 %1530
    %v1533 = vmul.f32 %v1515, %v1531
    %1535 = vrot.lane.b32.xlu0 %v1533, 32
    %v1536 = vpop.permute.xlu0 %1535
    %v1537 = vsel %vm535, %v1536, 0
    %1539 = vmatprep.subr.mxu0 0.0
    %1540 = vmatpush1.msra.mxu0 0.0
    %1541 = vmatprep.subr.mxu0 0.0
    %1542 = vmatpush1.msra.mxu0 0.0
    %1543 = vmatprep.subr.mxu0 0.0
    %1544 = vmatpush1.msra.mxu0 0.0
    %1545 = vmatprep.subr.mxu0 0.0
    %1546 = vmatpush1.msra.mxu0 0.0
    %1547 = vmatprep.subr.mxu0 0.0
    %1548 = vmatpush1.msra.mxu0 0.0
    %1549 = vmatprep.subr.mxu0 0.0
    %1550 = vmatpush1.msra.mxu0 0.0
    %1551 = vmatprep.subr.mxu0 0.0
    %1552 = vmatpush1.msra.mxu0 0.0
    %1553 = vmatprep.subr.mxu0 0.0
    %1554 = vmatpush1.msra.mxu0 0.0
    %1555 = vmatprep.subr.mxu0 0.0
    %1556 = vmatpush1.msra.mxu0 0.0
    %1557 = vmatprep.subr.mxu0 0.0
    %1558 = vmatpush1.msra.mxu0 0.0
    %1559 = vmatprep.subr.mxu0 0.0
    %1560 = vmatpush1.msra.mxu0 0.0
    %1561 = vmatprep.subr.mxu0 0.0
    %1562 = vmatpush1.msra.mxu0 0.0
    %1563 = vmatprep.subr.mxu0 0.0
    %1564 = vmatpush1.msra.mxu0 %v33
    %1565 = vmatprep.subr.mxu0 0.0
    %1566 = vmatpush1.msra.mxu0 %v32
    %1567 = vmatprep.subr.mxu0 0.0
    %1568 = vmatpush1.msra.mxu0 %v31
    %1569 = vmatprep.subr.mxu0 0.0
    %1570 = vmatpush1.msra.mxu0 %v30
    %1571 = vmatprep.subr.mxu0 0.0
    %1572 = vmatpush2.msra.mxu0 0.0
    %1573 = vmatprep.subr.mxu0 0.0
    %1574 = vmatpush2.msra.mxu0 0.0
    %1575 = vmatprep.subr.mxu0 0.0
    %1576 = vmatpush2.msra.mxu0 0.0
    %1577 = vmatprep.subr.mxu0 0.0
    %1578 = vmatpush2.msra.mxu0 0.0
    %1579 = vmatprep.subr.mxu0 0.0
    %1580 = vmatpush2.msra.mxu0 0.0
    %1581 = vmatprep.subr.mxu0 0.0
    %1582 = vmatpush2.msra.mxu0 0.0
    %1583 = vmatprep.subr.mxu0 0.0
    %1584 = vmatpush2.msra.mxu0 0.0
    %1585 = vmatprep.subr.mxu0 0.0
    %1586 = vmatpush2.msra.mxu0 0.0
    %1587 = vmatprep.subr.mxu0 0.0
    %1588 = vmatpush2.msra.mxu0 0.0
    %1589 = vmatprep.subr.mxu0 0.0
    %1590 = vmatpush2.msra.mxu0 0.0
    %1591 = vmatprep.subr.mxu0 0.0
    %1592 = vmatpush2.msra.mxu0 0.0
    %1593 = vmatprep.subr.mxu0 0.0
    %1594 = vmatpush2.msra.mxu0 0.0
    %1595 = vmatprep.subr.mxu0 0.0
    %1596 = vmatpush2.msra.mxu0 0.0
    %1597 = vmatprep.subr.mxu0 0.0
    %1598 = vmatpush2.msra.mxu0 0.0
    %1599 = vmatprep.subr.mxu0 0.0
    %1600 = vmatpush2.msra.mxu0 0.0
    %1601 = vmatprep.subr.mxu0 0.0
    %1602 = vmatpush2.msra.mxu0 0.0
    %1603 = vmatprep.mubr.f32.mxu0 0.0
    %1604 = vmatmul.mubr.f32.gmra.mxu0 %v1537
    %v1605 = vpop.f32.mrf.mxu0
    %v1606 = vadd.f32 0.0, %v1605
    %v1607 = vpop.f32.mrf.mxu0
    %1608 = vdwg.mxu0
    %v1609 = vadd.f32 %v529, %v1606
    %v1610 = vxor.u32 %v1609, 2147483648
    %v1611 = vmul.f32 %v1610, 1.442695
    %v1612 = vpow.pop %v1611
    %v1613 = vadd.f32 %v1612, 1.0
    %v1614 = vrcp.pop %v1613
    %v1615 = vmul.f32 1.0, %v1614
    %v1616 = vtanh.pop %v1609
    %v1617 = vmul.f32 %v1615, %v1527
    %1619 = vrot.lane.b32.xlu0 %v1616, 64
    %v1620 = vpop.permute.xlu0 %1619
    %v1622 = vmul.f32 %v1615, %v1620
    %1624 = vrot.lane.b32.xlu0 %v1622, 32
    %v1625 = vpop.permute.xlu0 %1624
    %v1627 = vadd.f32 %v1617, %v1625
    %v1628 = vtanh.pop %v1627
    %1630 = vrot.lane.b32.xlu0 %v1628, 64
    %v1631 = vpop.permute.xlu0 %1630
    %v1633 = vmul.f32 %v1615, %v1631
    %1635 = vrot.lane.b32.xlu0 %v1633, 32
    %v1636 = vpop.permute.xlu0 %1635
    %v1637 = vsel %vm535, %v1636, 0
    %1639 = vmatprep.subr.mxu0 0.0
    %1640 = vmatpush1.msra.mxu0 0.0
    %1641 = vmatprep.subr.mxu0 0.0
    %1642 = vmatpush1.msra.mxu0 0.0
    %1643 = vmatprep.subr.mxu0 0.0
    %1644 = vmatpush1.msra.mxu0 0.0
    %1645 = vmatprep.subr.mxu0 0.0
    %1646 = vmatpush1.msra.mxu0 0.0
    %1647 = vmatprep.subr.mxu0 0.0
    %1648 = vmatpush1.msra.mxu0 0.0
    %1649 = vmatprep.subr.mxu0 0.0
    %1650 = vmatpush1.msra.mxu0 0.0
    %1651 = vmatprep.subr.mxu0 0.0
    %1652 = vmatpush1.msra.mxu0 0.0
    %1653 = vmatprep.subr.mxu0 0.0
    %1654 = vmatpush1.msra.mxu0 0.0
    %1655 = vmatprep.subr.mxu0 0.0
    %1656 = vmatpush1.msra.mxu0 0.0
    %1657 = vmatprep.subr.mxu0 0.0
    %1658 = vmatpush1.msra.mxu0 0.0
    %1659 = vmatprep.subr.mxu0 0.0
    %1660 = vmatpush1.msra.mxu0 0.0
    %1661 = vmatprep.subr.mxu0 0.0
    %1662 = vmatpush1.msra.mxu0 0.0
    %1663 = vmatprep.subr.mxu0 0.0
    %1664 = vmatpush1.msra.mxu0 %v33
    %1665 = vmatprep.subr.mxu0 0.0
    %1666 = vmatpush1.msra.mxu0 %v32
    %1667 = vmatprep.subr.mxu0 0.0
    %1668 = vmatpush1.msra.mxu0 %v31
    %1669 = vmatprep.subr.mxu0 0.0
    %1670 = vmatpush1.msra.mxu0 %v30
    %1671 = vmatprep.subr.mxu0 0.0
    %1672 = vmatpush2.msra.mxu0 0.0
    %1673 = vmatprep.subr.mxu0 0.0
    %1674 = vmatpush2.msra.mxu0 0.0
    %1675 = vmatprep.subr.mxu0 0.0
    %1676 = vmatpush2.msra.mxu0 0.0
    %1677 = vmatprep.subr.mxu0 0.0
    %1678 = vmatpush2.msra.mxu0 0.0
    %1679 = vmatprep.subr.mxu0 0.0
    %1680 = vmatpush2.msra.mxu0 0.0
    %1681 = vmatprep.subr.mxu0 0.0
    %1682 = vmatpush2.msra.mxu0 0.0
    %1683 = vmatprep.subr.mxu0 0.0
    %1684 = vmatpush2.msra.mxu0 0.0
    %1685 = vmatprep.subr.mxu0 0.0
    %1686 = vmatpush2.msra.mxu0 0.0
    %1687 = vmatprep.subr.mxu0 0.0
    %1688 = vmatpush2.msra.mxu0 0.0
    %1689 = vmatprep.subr.mxu0 0.0
    %1690 = vmatpush2.msra.mxu0 0.0
    %1691 = vmatprep.subr.mxu0 0.0
    %1692 = vmatpush2.msra.mxu0 0.0
    %1693 = vmatprep.subr.mxu0 0.0
    %1694 = vmatpush2.msra.mxu0 0.0
    %1695 = vmatprep.subr.mxu0 0.0
    %1696 = vmatpush2.msra.mxu0 0.0
    %1697 = vmatprep.subr.mxu0 0.0
    %1698 = vmatpush2.msra.mxu0 0.0
    %1699 = vmatprep.subr.mxu0 0.0
    %1700 = vmatpush2.msra.mxu0 0.0
    %1701 = vmatprep.subr.mxu0 0.0
    %1702 = vmatpush2.msra.mxu0 0.0
    %1703 = vmatprep.mubr.f32.mxu0 0.0
    %1704 = vmatmul.mubr.f32.gmra.mxu0 %v1637
    %v1705 = vpop.f32.mrf.mxu0
    %v1706 = vadd.f32 0.0, %v1705
    %v1707 = vpop.f32.mrf.mxu0
    %1708 = vdwg.mxu0
    %v1709 = vadd.f32 %v530, %v1706
    %v1710 = vxor.u32 %v1709, 2147483648
    %v1711 = vmul.f32 %v1710, 1.442695
    %v1712 = vpow.pop %v1711
    %v1713 = vadd.f32 %v1712, 1.0
    %v1714 = vrcp.pop %v1713
    %v1715 = vmul.f32 1.0, %v1714
    %v1716 = vtanh.pop %v1709
    %v1717 = vmul.f32 %v1715, %v1627
    %1719 = vrot.lane.b32.xlu0 %v1716, 64
    %v1720 = vpop.permute.xlu0 %1719
    %v1722 = vmul.f32 %v1715, %v1720
    %1724 = vrot.lane.b32.xlu0 %v1722, 32
    %v1725 = vpop.permute.xlu0 %1724
    %v1727 = vadd.f32 %v1717, %v1725
    %v1728 = vtanh.pop %v1727
    %1730 = vrot.lane.b32.xlu0 %v1728, 64
    %v1731 = vpop.permute.xlu0 %1730
    %v1733 = vmul.f32 %v1715, %v1731
    %1735 = vrot.lane.b32.xlu0 %v1733, 32
    %v1736 = vpop.permute.xlu0 %1735
    %v1737 = vsel %vm535, %v1736, 0
    %1739 = vmatprep.subr.mxu0 0.0
    %1740 = vmatpush1.msra.mxu0 0.0
    %1741 = vmatprep.subr.mxu0 0.0
    %1742 = vmatpush1.msra.mxu0 0.0
    %1743 = vmatprep.subr.mxu0 0.0
    %1744 = vmatpush1.msra.mxu0 0.0
    %1745 = vmatprep.subr.mxu0 0.0
    %1746 = vmatpush1.msra.mxu0 0.0
    %1747 = vmatprep.subr.mxu0 0.0
    %1748 = vmatpush1.msra.mxu0 0.0
    %1749 = vmatprep.subr.mxu0 0.0
    %1750 = vmatpush1.msra.mxu0 0.0
    %1751 = vmatprep.subr.mxu0 0.0
    %1752 = vmatpush1.msra.mxu0 0.0
    %1753 = vmatprep.subr.mxu0 0.0
    %1754 = vmatpush1.msra.mxu0 0.0
    %1755 = vmatprep.subr.mxu0 0.0
    %1756 = vmatpush1.msra.mxu0 0.0
    %1757 = vmatprep.subr.mxu0 0.0
    %1758 = vmatpush1.msra.mxu0 0.0
    %1759 = vmatprep.subr.mxu0 0.0
    %1760 = vmatpush1.msra.mxu0 0.0
    %1761 = vmatprep.subr.mxu0 0.0
    %1762 = vmatpush1.msra.mxu0 0.0
    %1763 = vmatprep.subr.mxu0 0.0
    %1764 = vmatpush1.msra.mxu0 %v33
    %1765 = vmatprep.subr.mxu0 0.0
    %1766 = vmatpush1.msra.mxu0 %v32
    %1767 = vmatprep.subr.mxu0 0.0
    %1768 = vmatpush1.msra.mxu0 %v31
    %1769 = vmatprep.subr.mxu0 0.0
    %1770 = vmatpush1.msra.mxu0 %v30
    %1771 = vmatprep.subr.mxu0 0.0
    %1772 = vmatpush2.msra.mxu0 0.0
    %1773 = vmatprep.subr.mxu0 0.0
    %1774 = vmatpush2.msra.mxu0 0.0
    %1775 = vmatprep.subr.mxu0 0.0
    %1776 = vmatpush2.msra.mxu0 0.0
    %1777 = vmatprep.subr.mxu0 0.0
    %1778 = vmatpush2.msra.mxu0 0.0
    %1779 = vmatprep.subr.mxu0 0.0
    %1780 = vmatpush2.msra.mxu0 0.0
    %1781 = vmatprep.subr.mxu0 0.0
    %1782 = vmatpush2.msra.mxu0 0.0
    %1783 = vmatprep.subr.mxu0 0.0
    %1784 = vmatpush2.msra.mxu0 0.0
    %1785 = vmatprep.subr.mxu0 0.0
    %1786 = vmatpush2.msra.mxu0 0.0
    %1787 = vmatprep.subr.mxu0 0.0
    %1788 = vmatpush2.msra.mxu0 0.0
    %1789 = vmatprep.subr.mxu0 0.0
    %1790 = vmatpush2.msra.mxu0 0.0
    %1791 = vmatprep.subr.mxu0 0.0
    %1792 = vmatpush2.msra.mxu0 0.0
    %1793 = vmatprep.subr.mxu0 0.0
    %1794 = vmatpush2.msra.mxu0 0.0
    %1795 = vmatprep.subr.mxu0 0.0
    %1796 = vmatpush2.msra.mxu0 0.0
    %1797 = vmatprep.subr.mxu0 0.0
    %1798 = vmatpush2.msra.mxu0 0.0
    %1799 = vmatprep.subr.mxu0 0.0
    %1800 = vmatpush2.msra.mxu0 0.0
    %1801 = vmatprep.subr.mxu0 0.0
    %1802 = vmatpush2.msra.mxu0 0.0
    %1803 = vmatprep.mubr.f32.mxu0 0.0
    %1804 = vmatmul.mubr.f32.gmra.mxu0 %v1737
    %v1805 = vpop.f32.mrf.mxu0
    %v1806 = vadd.f32 0.0, %v1805
    %v1807 = vpop.f32.mrf.mxu0
    %1808 = vdwg.mxu0
    %v1809 = vadd.f32 %v531, %v1806
    %v1810 = vxor.u32 %v1809, 2147483648
    %v1811 = vmul.f32 %v1810, 1.442695
    %v1812 = vpow.pop %v1811
    %v1813 = vadd.f32 %v1812, 1.0
    %v1814 = vrcp.pop %v1813
    %v1815 = vmul.f32 1.0, %v1814
    %v1816 = vtanh.pop %v1809
    %v1817 = vmul.f32 %v1815, %v1727
    %1819 = vrot.lane.b32.xlu0 %v1816, 64
    %v1820 = vpop.permute.xlu0 %1819
    %v1822 = vmul.f32 %v1815, %v1820
    %1824 = vrot.lane.b32.xlu0 %v1822, 32
    %v1825 = vpop.permute.xlu0 %1824
    %v1827 = vadd.f32 %v1817, %v1825
    %v1828 = vtanh.pop %v1827
    %1830 = vrot.lane.b32.xlu0 %v1828, 64
    %v1831 = vpop.permute.xlu0 %1830
    %v1833 = vmul.f32 %v1815, %v1831
    %1835 = vrot.lane.b32.xlu0 %v1833, 32
    %v1836 = vpop.permute.xlu0 %1835
    %v1837 = vsel %vm535, %v1836, 0
    %1839 = vmatprep.subr.mxu0 0.0
    %1840 = vmatpush1.msra.mxu0 0.0
    %1841 = vmatprep.subr.mxu0 0.0
    %1842 = vmatpush1.msra.mxu0 0.0
    %1843 = vmatprep.subr.mxu0 0.0
    %1844 = vmatpush1.msra.mxu0 0.0
    %1845 = vmatprep.subr.mxu0 0.0
    %1846 = vmatpush1.msra.mxu0 0.0
    %1847 = vmatprep.subr.mxu0 0.0
    %1848 = vmatpush1.msra.mxu0 0.0
    %1849 = vmatprep.subr.mxu0 0.0
    %1850 = vmatpush1.msra.mxu0 0.0
    %1851 = vmatprep.subr.mxu0 0.0
    %1852 = vmatpush1.msra.mxu0 0.0
    %1853 = vmatprep.subr.mxu0 0.0
    %1854 = vmatpush1.msra.mxu0 0.0
    %1855 = vmatprep.subr.mxu0 0.0
    %1856 = vmatpush1.msra.mxu0 0.0
    %1857 = vmatprep.subr.mxu0 0.0
    %1858 = vmatpush1.msra.mxu0 0.0
    %1859 = vmatprep.subr.mxu0 0.0
    %1860 = vmatpush1.msra.mxu0 0.0
    %1861 = vmatprep.subr.mxu0 0.0
    %1862 = vmatpush1.msra.mxu0 0.0
    %1863 = vmatprep.subr.mxu0 0.0
    %1864 = vmatpush1.msra.mxu0 %v33
    %1865 = vmatprep.subr.mxu0 0.0
    %1866 = vmatpush1.msra.mxu0 %v32
    %1867 = vmatprep.subr.mxu0 0.0
    %1868 = vmatpush1.msra.mxu0 %v31
    %1869 = vmatprep.subr.mxu0 0.0
    %1870 = vmatpush1.msra.mxu0 %v30
    %1871 = vmatprep.subr.mxu0 0.0
    %1872 = vmatpush2.msra.mxu0 0.0
    %1873 = vmatprep.subr.mxu0 0.0
    %1874 = vmatpush2.msra.mxu0 0.0
    %1875 = vmatprep.subr.mxu0 0.0
    %1876 = vmatpush2.msra.mxu0 0.0
    %1877 = vmatprep.subr.mxu0 0.0
    %1878 = vmatpush2.msra.mxu0 0.0
    %1879 = vmatprep.subr.mxu0 0.0
    %1880 = vmatpush2.msra.mxu0 0.0
    %1881 = vmatprep.subr.mxu0 0.0
    %1882 = vmatpush2.msra.mxu0 0.0
    %1883 = vmatprep.subr.mxu0 0.0
    %1884 = vmatpush2.msra.mxu0 0.0
    %1885 = vmatprep.subr.mxu0 0.0
    %1886 = vmatpush2.msra.mxu0 0.0
    %1887 = vmatprep.subr.mxu0 0.0
    %1888 = vmatpush2.msra.mxu0 0.0
    %1889 = vmatprep.subr.mxu0 0.0
    %1890 = vmatpush2.msra.mxu0 0.0
    %1891 = vmatprep.subr.mxu0 0.0
    %1892 = vmatpush2.msra.mxu0 0.0
    %1893 = vmatprep.subr.mxu0 0.0
    %1894 = vmatpush2.msra.mxu0 0.0
    %1895 = vmatprep.subr.mxu0 0.0
    %1896 = vmatpush2.msra.mxu0 0.0
    %1897 = vmatprep.subr.mxu0 0.0
    %1898 = vmatpush2.msra.mxu0 0.0
    %1899 = vmatprep.subr.mxu0 0.0
    %1900 = vmatpush2.msra.mxu0 0.0
    %1901 = vmatprep.subr.mxu0 0.0
    %1902 = vmatpush2.msra.mxu0 0.0
    %1903 = vmatprep.mubr.f32.mxu0 0.0
    %1904 = vmatmul.mubr.f32.gmra.mxu0 %v1837
    %v1905 = vpop.f32.mrf.mxu0
    %v1906 = vadd.f32 0.0, %v1905
    %v1907 = vpop.f32.mrf.mxu0
    %1908 = vdwg.mxu0
    %v1909 = vadd.f32 %v532, %v1906
    %v1910 = vxor.u32 %v1909, 2147483648
    %v1911 = vmul.f32 %v1910, 1.442695
    %v1912 = vpow.pop %v1911
    %v1913 = vadd.f32 %v1912, 1.0
    %v1914 = vrcp.pop %v1913
    %v1915 = vmul.f32 1.0, %v1914
    %v1916 = vtanh.pop %v1909
    %v1917 = vmul.f32 %v1915, %v1827
    %1919 = vrot.lane.b32.xlu0 %v1916, 64
    %v1920 = vpop.permute.xlu0 %1919
    %v1922 = vmul.f32 %v1915, %v1920
    %1924 = vrot.lane.b32.xlu0 %v1922, 32
    %v1925 = vpop.permute.xlu0 %1924
    %v1927 = vadd.f32 %v1917, %v1925
    %v1928 = vtanh.pop %v1927
    %1930 = vrot.lane.b32.xlu0 %v1928, 64
    %v1931 = vpop.permute.xlu0 %1930
    %v1933 = vmul.f32 %v1915, %v1931
    %1935 = vrot.lane.b32.xlu0 %v1933, 32
    %v1936 = vpop.permute.xlu0 %1935
    %v1937 = vsel %vm535, %v1936, 0
    %1939 = vmatprep.subr.mxu0 0.0
    %1940 = vmatpush1.msra.mxu0 0.0
    %1941 = vmatprep.subr.mxu0 0.0
    %1942 = vmatpush1.msra.mxu0 0.0
    %1943 = vmatprep.subr.mxu0 0.0
    %1944 = vmatpush1.msra.mxu0 0.0
    %1945 = vmatprep.subr.mxu0 0.0
    %1946 = vmatpush1.msra.mxu0 0.0
    %1947 = vmatprep.subr.mxu0 0.0
    %1948 = vmatpush1.msra.mxu0 0.0
    %1949 = vmatprep.subr.mxu0 0.0
    %1950 = vmatpush1.msra.mxu0 0.0
    %1951 = vmatprep.subr.mxu0 0.0
    %1952 = vmatpush1.msra.mxu0 0.0
    %1953 = vmatprep.subr.mxu0 0.0
    %1954 = vmatpush1.msra.mxu0 0.0
    %1955 = vmatprep.subr.mxu0 0.0
    %1956 = vmatpush1.msra.mxu0 0.0
    %1957 = vmatprep.subr.mxu0 0.0
    %1958 = vmatpush1.msra.mxu0 0.0
    %1959 = vmatprep.subr.mxu0 0.0
    %1960 = vmatpush1.msra.mxu0 0.0
    %1961 = vmatprep.subr.mxu0 0.0
    %1962 = vmatpush1.msra.mxu0 0.0
    %1963 = vmatprep.subr.mxu0 0.0
    %1964 = vmatpush1.msra.mxu0 %v33
    %1965 = vmatprep.subr.mxu0 0.0
    %1966 = vmatpush1.msra.mxu0 %v32
    %1967 = vmatprep.subr.mxu0 0.0
    %1968 = vmatpush1.msra.mxu0 %v31
    %1969 = vmatprep.subr.mxu0 0.0
    %1970 = vmatpush1.msra.mxu0 %v30
    %1971 = vmatprep.subr.mxu0 0.0
    %1972 = vmatpush2.msra.mxu0 0.0
    %1973 = vmatprep.subr.mxu0 0.0
    %1974 = vmatpush2.msra.mxu0 0.0
    %1975 = vmatprep.subr.mxu0 0.0
    %1976 = vmatpush2.msra.mxu0 0.0
    %1977 = vmatprep.subr.mxu0 0.0
    %1978 = vmatpush2.msra.mxu0 0.0
    %1979 = vmatprep.subr.mxu0 0.0
    %1980 = vmatpush2.msra.mxu0 0.0
    %1981 = vmatprep.subr.mxu0 0.0
    %1982 = vmatpush2.msra.mxu0 0.0
    %1983 = vmatprep.subr.mxu0 0.0
    %1984 = vmatpush2.msra.mxu0 0.0
    %1985 = vmatprep.subr.mxu0 0.0
    %1986 = vmatpush2.msra.mxu0 0.0
    %1987 = vmatprep.subr.mxu0 0.0
    %1988 = vmatpush2.msra.mxu0 0.0
    %1989 = vmatprep.subr.mxu0 0.0
    %1990 = vmatpush2.msra.mxu0 0.0
    %1991 = vmatprep.subr.mxu0 0.0
    %1992 = vmatpush2.msra.mxu0 0.0
    %1993 = vmatprep.subr.mxu0 0.0
    %1994 = vmatpush2.msra.mxu0 0.0
    %1995 = vmatprep.subr.mxu0 0.0
    %1996 = vmatpush2.msra.mxu0 0.0
    %1997 = vmatprep.subr.mxu0 0.0
    %1998 = vmatpush2.msra.mxu0 0.0
    %1999 = vmatprep.subr.mxu0 0.0
    %2000 = vmatpush2.msra.mxu0 0.0
    %2001 = vmatprep.subr.mxu0 0.0
    %2002 = vmatpush2.msra.mxu0 0.0
    %2003 = vmatprep.mubr.f32.mxu0 0.0
    %2004 = vmatmul.mubr.f32.gmra.mxu0 %v1937
    %v2005 = vpop.f32.mrf.mxu0
    %v2006 = vadd.f32 0.0, %v2005
    %v2007 = vpop.f32.mrf.mxu0
    %2008 = vdwg.mxu0
    %v2009 = vadd.f32 %v533, %v2006
    %v2010 = vxor.u32 %v2009, 2147483648
    %v2011 = vmul.f32 %v2010, 1.442695
    %v2012 = vpow.pop %v2011
    %v2013 = vadd.f32 %v2012, 1.0
    %v2014 = vrcp.pop %v2013
    %v2015 = vmul.f32 1.0, %v2014
    %v2016 = vtanh.pop %v2009
    %v2017 = vmul.f32 %v2015, %v1927
    %2019 = vrot.lane.b32.xlu0 %v2016, 64
    %v2020 = vpop.permute.xlu0 %2019
    %v2022 = vmul.f32 %v2015, %v2020
    %2024 = vrot.lane.b32.xlu0 %v2022, 32
    %v2025 = vpop.permute.xlu0 %2024
    %v2027 = vadd.f32 %v2017, %v2025
    %v2028 = vtanh.pop %v2027
    %2030 = vrot.lane.b32.xlu0 %v2028, 64
    %v2031 = vpop.permute.xlu0 %2030
    %v2033 = vmul.f32 %v2015, %v2031
    %2035 = vrot.lane.b32.xlu0 %v2033, 32
    %v2036 = vpop.permute.xlu0 %2035
    %v2037 = vsel %vm535, %v2036, 0
    %2039 = vmatprep.subr.mxu0 0.0
    %2040 = vmatpush1.msra.mxu0 0.0
    %2041 = vmatprep.subr.mxu0 0.0
    %2042 = vmatpush1.msra.mxu0 0.0
    %2043 = vmatprep.subr.mxu0 0.0
    %2044 = vmatpush1.msra.mxu0 0.0
    %2045 = vmatprep.subr.mxu0 0.0
    %2046 = vmatpush1.msra.mxu0 0.0
    %2047 = vmatprep.subr.mxu0 0.0
    %2048 = vmatpush1.msra.mxu0 0.0
    %2049 = vmatprep.subr.mxu0 0.0
    %2050 = vmatpush1.msra.mxu0 0.0
    %2051 = vmatprep.subr.mxu0 0.0
    %2052 = vmatpush1.msra.mxu0 0.0
    %2053 = vmatprep.subr.mxu0 0.0
    %2054 = vmatpush1.msra.mxu0 0.0
    %2055 = vmatprep.subr.mxu0 0.0
    %2056 = vmatpush1.msra.mxu0 0.0
    %2057 = vmatprep.subr.mxu0 0.0
    %2058 = vmatpush1.msra.mxu0 0.0
    %2059 = vmatprep.subr.mxu0 0.0
    %2060 = vmatpush1.msra.mxu0 0.0
    %2061 = vmatprep.subr.mxu0 0.0
    %2062 = vmatpush1.msra.mxu0 0.0
    %2063 = vmatprep.subr.mxu0 0.0
    %2064 = vmatpush1.msra.mxu0 %v33
    %2065 = vmatprep.subr.mxu0 0.0
    %2066 = vmatpush1.msra.mxu0 %v32
    %2067 = vmatprep.subr.mxu0 0.0
    %2068 = vmatpush1.msra.mxu0 %v31
    %2069 = vmatprep.subr.mxu0 0.0
    %2070 = vmatpush1.msra.mxu0 %v30
    %2071 = vmatprep.subr.mxu0 0.0
    %2072 = vmatpush2.msra.mxu0 0.0
    %2073 = vmatprep.subr.mxu0 0.0
    %2074 = vmatpush2.msra.mxu0 0.0
    %2075 = vmatprep.subr.mxu0 0.0
    %2076 = vmatpush2.msra.mxu0 0.0
    %2077 = vmatprep.subr.mxu0 0.0
    %2078 = vmatpush2.msra.mxu0 0.0
    %2079 = vmatprep.subr.mxu0 0.0
    %2080 = vmatpush2.msra.mxu0 0.0
    %2081 = vmatprep.subr.mxu0 0.0
    %2082 = vmatpush2.msra.mxu0 0.0
    %2083 = vmatprep.subr.mxu0 0.0
    %2084 = vmatpush2.msra.mxu0 0.0
    %2085 = vmatprep.subr.mxu0 0.0
    %2086 = vmatpush2.msra.mxu0 0.0
    %2087 = vmatprep.subr.mxu0 0.0
    %2088 = vmatpush2.msra.mxu0 0.0
    %2089 = vmatprep.subr.mxu0 0.0
    %2090 = vmatpush2.msra.mxu0 0.0
    %2091 = vmatprep.subr.mxu0 0.0
    %2092 = vmatpush2.msra.mxu0 0.0
    %2093 = vmatprep.subr.mxu0 0.0
    %2094 = vmatpush2.msra.mxu0 0.0
    %2095 = vmatprep.subr.mxu0 0.0
    %2096 = vmatpush2.msra.mxu0 0.0
    %2097 = vmatprep.subr.mxu0 0.0
    %2098 = vmatpush2.msra.mxu0 0.0
    %2099 = vmatprep.subr.mxu0 0.0
    %2100 = vmatpush2.msra.mxu0 0.0
    %2101 = vmatprep.subr.mxu0 0.0
    %2102 = vmatpush2.msra.mxu0 0.0
    %2103 = vmatprep.mubr.f32.mxu0 0.0
    %2104 = vmatmul.mubr.f32.gmra.mxu0 %v2037
    %v2105 = vpop.f32.mrf.mxu0
    %v2106 = vadd.f32 0.0, %v2105
    %v2107 = vpop.f32.mrf.mxu0
    %2108 = vdwg.mxu0
    %v2109 = vadd.f32 %v534, %v2106
    %v2110 = vxor.u32 %v2109, 2147483648
    %v2111 = vmul.f32 %v2110, 1.442695
    %v2112 = vpow.pop %v2111
    %v2113 = vadd.f32 %v2112, 1.0
    %v2114 = vrcp.pop %v2113
    %v2115 = vmul.f32 1.0, %v2114
    %v2116 = vtanh.pop %v2109
    %v2117 = vmul.f32 %v2115, %v2027
    %2119 = vrot.lane.b32.xlu0 %v2116, 64
    %v2120 = vpop.permute.xlu0 %2119
    %v2122 = vmul.f32 %v2115, %v2120
    %2124 = vrot.lane.b32.xlu0 %v2122, 32
    %v2125 = vpop.permute.xlu0 %2124
    %v2127 = vadd.f32 %v2117, %v2125
    %v2128 = vtanh.pop %v2127
    %2130 = vrot.lane.b32.xlu0 %v2128, 64
    %v2131 = vpop.permute.xlu0 %2130
    %v2133 = vmul.f32 %v2115, %v2131
    %v2135 = vunpack.c.l.s4 1966171168
    %v2136 = vunpack.c.0.s8 %v2135
    %v2137 = vlaneseq
    %v2138 = vshrl.u32 %v2137, 7
    %v2139 = vsub.s32 %v2136, %v2138
    %v2140 = vrot.slane %v633, %v2139
    %v2141 = vcombine.high %v2140, %v2140
    %v2143 = vunpack.c.l.s4 1966171168
    %v2144 = vunpack.c.0.s8 %v2143
    %v2145 = vlaneseq
    %v2146 = vshrl.u32 %v2145, 7
    %v2147 = vsub.s32 %v2144, %v2146
    %v2148 = vrot.slane %v2140, %v2147
    %v2150 = vunpack.c.l.s4 1966171168
    %v2151 = vunpack.c.0.s8 %v2150
    %v2152 = vlaneseq
    %v2153 = vshrl.u32 %v2152, 7
    %v2154 = vsub.s32 %v2151, %v2153
    %v2155 = vrot.slane %v2141, %v2154
    %v2159 = vunpack.c.l.s4 1966171168
    %v2160 = vunpack.c.0.s8 %v2159
    %v2161 = vlaneseq
    %v2162 = vshrl.u32 %v2161, 7
    %v2163 = vsub.s32 %v2160, %v2162
    %v2164 = vrot.slane %v733, %v2163
    %v2165 = vcombine.high %v2164, %v2164
    %v2167 = vunpack.c.l.s4 1966171168
    %v2168 = vunpack.c.0.s8 %v2167
    %v2169 = vlaneseq
    %v2170 = vshrl.u32 %v2169, 7
    %v2171 = vsub.s32 %v2168, %v2170
    %v2172 = vrot.slane %v2164, %v2171
    %v2174 = vunpack.c.l.s4 1966171168
    %v2175 = vunpack.c.0.s8 %v2174
    %v2176 = vlaneseq
    %v2177 = vshrl.u32 %v2176, 7
    %v2178 = vsub.s32 %v2175, %v2177
    %v2179 = vrot.slane %v2165, %v2178
    %v2181 = vunpack.c.l.s4 1966171168
    %v2182 = vunpack.c.0.s8 %v2181
    %v2183 = vlaneseq
    %v2184 = vshrl.u32 %v2183, 7
    %v2185 = vsub.s32 %v2182, %v2184
    %v2186 = vrot.slane %v833, %v2185
    %v2187 = vcombine.high %v2186, %v2186
    %v2189 = vunpack.c.l.s4 1966171168
    %v2190 = vunpack.c.0.s8 %v2189
    %v2191 = vlaneseq
    %v2192 = vshrl.u32 %v2191, 7
    %v2193 = vsub.s32 %v2190, %v2192
    %v2194 = vrot.slane %v2186, %v2193
    %v2196 = vunpack.c.l.s4 1966171168
    %v2197 = vunpack.c.0.s8 %v2196
    %v2198 = vlaneseq
    %v2199 = vshrl.u32 %v2198, 7
    %v2200 = vsub.s32 %v2197, %v2199
    %v2201 = vrot.slane %v2187, %v2200
    %v2203 = vunpack.c.l.s4 1966171168
    %v2204 = vunpack.c.0.s8 %v2203
    %v2205 = vlaneseq
    %v2206 = vshrl.u32 %v2205, 7
    %v2207 = vsub.s32 %v2204, %v2206
    %v2208 = vrot.slane %v933, %v2207
    %v2209 = vcombine.high %v2208, %v2208
    %v2211 = vunpack.c.l.s4 1966171168
    %v2212 = vunpack.c.0.s8 %v2211
    %v2213 = vlaneseq
    %v2214 = vshrl.u32 %v2213, 7
    %v2215 = vsub.s32 %v2212, %v2214
    %v2216 = vrot.slane %v2208, %v2215
    %v2218 = vunpack.c.l.s4 1966171168
    %v2219 = vunpack.c.0.s8 %v2218
    %v2220 = vlaneseq
    %v2221 = vshrl.u32 %v2220, 7
    %v2222 = vsub.s32 %v2219, %v2221
    %v2223 = vrot.slane %v2209, %v2222
    %v2225 = vunpack.c.l.s4 1966171168
    %v2226 = vunpack.c.0.s8 %v2225
    %v2227 = vlaneseq
    %v2228 = vshrl.u32 %v2227, 7
    %v2229 = vsub.s32 %v2226, %v2228
    %v2230 = vrot.slane %v1033, %v2229
    %v2231 = vcombine.high %v2230, %v2230
    %v2233 = vunpack.c.l.s4 1966171168
    %v2234 = vunpack.c.0.s8 %v2233
    %v2235 = vlaneseq
    %v2236 = vshrl.u32 %v2235, 7
    %v2237 = vsub.s32 %v2234, %v2236
    %v2238 = vrot.slane %v2230, %v2237
    %v2240 = vunpack.c.l.s4 1966171168
    %v2241 = vunpack.c.0.s8 %v2240
    %v2242 = vlaneseq
    %v2243 = vshrl.u32 %v2242, 7
    %v2244 = vsub.s32 %v2241, %v2243
    %v2245 = vrot.slane %v2231, %v2244
    %v2247 = vunpack.c.l.s4 1966171168
    %v2248 = vunpack.c.0.s8 %v2247
    %v2249 = vlaneseq
    %v2250 = vshrl.u32 %v2249, 7
    %v2251 = vsub.s32 %v2248, %v2250
    %v2252 = vrot.slane %v1133, %v2251
    %v2253 = vcombine.high %v2252, %v2252
    %v2255 = vunpack.c.l.s4 1966171168
    %v2256 = vunpack.c.0.s8 %v2255
    %v2257 = vlaneseq
    %v2258 = vshrl.u32 %v2257, 7
    %v2259 = vsub.s32 %v2256, %v2258
    %v2260 = vrot.slane %v2252, %v2259
    %v2262 = vunpack.c.l.s4 1966171168
    %v2263 = vunpack.c.0.s8 %v2262
    %v2264 = vlaneseq
    %v2265 = vshrl.u32 %v2264, 7
    %v2266 = vsub.s32 %v2263, %v2265
    %v2267 = vrot.slane %v2253, %v2266
    %v2269 = vunpack.c.l.s4 1966171168
    %v2270 = vunpack.c.0.s8 %v2269
    %v2271 = vlaneseq
    %v2272 = vshrl.u32 %v2271, 7
    %v2273 = vsub.s32 %v2270, %v2272
    %v2274 = vrot.slane %v1233, %v2273
    %v2275 = vcombine.high %v2274, %v2274
    %v2277 = vunpack.c.l.s4 1966171168
    %v2278 = vunpack.c.0.s8 %v2277
    %v2279 = vlaneseq
    %v2280 = vshrl.u32 %v2279, 7
    %v2281 = vsub.s32 %v2278, %v2280
    %v2282 = vrot.slane %v2274, %v2281
    %v2284 = vunpack.c.l.s4 1966171168
    %v2285 = vunpack.c.0.s8 %v2284
    %v2286 = vlaneseq
    %v2287 = vshrl.u32 %v2286, 7
    %v2288 = vsub.s32 %v2285, %v2287
    %v2289 = vrot.slane %v2275, %v2288
    %v2291 = vunpack.c.l.s4 1966171168
    %v2292 = vunpack.c.0.s8 %v2291
    %v2293 = vlaneseq
    %v2294 = vshrl.u32 %v2293, 7
    %v2295 = vsub.s32 %v2292, %v2294
    %v2296 = vrot.slane %v1333, %v2295
    %v2297 = vcombine.high %v2296, %v2296
    %v2299 = vunpack.c.l.s4 1966171168
    %v2300 = vunpack.c.0.s8 %v2299
    %v2301 = vlaneseq
    %v2302 = vshrl.u32 %v2301, 7
    %v2303 = vsub.s32 %v2300, %v2302
    %v2304 = vrot.slane %v2296, %v2303
    %v2306 = vunpack.c.l.s4 1966171168
    %v2307 = vunpack.c.0.s8 %v2306
    %v2308 = vlaneseq
    %v2309 = vshrl.u32 %v2308, 7
    %v2310 = vsub.s32 %v2307, %v2309
    %v2311 = vrot.slane %v2297, %v2310
    %v2313 = vunpack.c.l.s4 1966171168
    %v2314 = vunpack.c.0.s8 %v2313
    %v2315 = vlaneseq
    %v2316 = vshrl.u32 %v2315, 7
    %v2317 = vsub.s32 %v2314, %v2316
    %v2318 = vrot.slane %v1433, %v2317
    %v2319 = vcombine.high %v2318, %v2318
    %v2321 = vunpack.c.l.s4 1966171168
    %v2322 = vunpack.c.0.s8 %v2321
    %v2323 = vlaneseq
    %v2324 = vshrl.u32 %v2323, 7
    %v2325 = vsub.s32 %v2322, %v2324
    %v2326 = vrot.slane %v2318, %v2325
    %v2328 = vunpack.c.l.s4 1966171168
    %v2329 = vunpack.c.0.s8 %v2328
    %v2330 = vlaneseq
    %v2331 = vshrl.u32 %v2330, 7
    %v2332 = vsub.s32 %v2329, %v2331
    %v2333 = vrot.slane %v2319, %v2332
    %v2337 = vunpack.c.l.s4 1966171168
    %v2338 = vunpack.c.0.s8 %v2337
    %v2339 = vlaneseq
    %v2340 = vshrl.u32 %v2339, 7
    %v2341 = vsub.s32 %v2338, %v2340
    %v2342 = vrot.slane %v1533, %v2341
    %v2343 = vcombine.high %v2342, %v2342
    %v2345 = vunpack.c.l.s4 1966171168
    %v2346 = vunpack.c.0.s8 %v2345
    %v2347 = vlaneseq
    %v2348 = vshrl.u32 %v2347, 7
    %v2349 = vsub.s32 %v2346, %v2348
    %v2350 = vrot.slane %v2342, %v2349
    %v2352 = vunpack.c.l.s4 1966171168
    %v2353 = vunpack.c.0.s8 %v2352
    %v2354 = vlaneseq
    %v2355 = vshrl.u32 %v2354, 7
    %v2356 = vsub.s32 %v2353, %v2355
    %v2357 = vrot.slane %v2343, %v2356
    %v2359 = vunpack.c.l.s4 1966171168
    %v2360 = vunpack.c.0.s8 %v2359
    %v2361 = vlaneseq
    %v2362 = vshrl.u32 %v2361, 7
    %v2363 = vsub.s32 %v2360, %v2362
    %v2364 = vrot.slane %v1633, %v2363
    %v2365 = vcombine.high %v2364, %v2364
    %v2367 = vunpack.c.l.s4 1966171168
    %v2368 = vunpack.c.0.s8 %v2367
    %v2369 = vlaneseq
    %v2370 = vshrl.u32 %v2369, 7
    %v2371 = vsub.s32 %v2368, %v2370
    %v2372 = vrot.slane %v2364, %v2371
    %v2374 = vunpack.c.l.s4 1966171168
    %v2375 = vunpack.c.0.s8 %v2374
    %v2376 = vlaneseq
    %v2377 = vshrl.u32 %v2376, 7
    %v2378 = vsub.s32 %v2375, %v2377
    %v2379 = vrot.slane %v2365, %v2378
    %v2381 = vunpack.c.l.s4 1966171168
    %v2382 = vunpack.c.0.s8 %v2381
    %v2383 = vlaneseq
    %v2384 = vshrl.u32 %v2383, 7
    %v2385 = vsub.s32 %v2382, %v2384
    %v2386 = vrot.slane %v1733, %v2385
    %v2387 = vcombine.high %v2386, %v2386
    %v2389 = vunpack.c.l.s4 1966171168
    %v2390 = vunpack.c.0.s8 %v2389
    %v2391 = vlaneseq
    %v2392 = vshrl.u32 %v2391, 7
    %v2393 = vsub.s32 %v2390, %v2392
    %v2394 = vrot.slane %v2386, %v2393
    %v2396 = vunpack.c.l.s4 1966171168
    %v2397 = vunpack.c.0.s8 %v2396
    %v2398 = vlaneseq
    %v2399 = vshrl.u32 %v2398, 7
    %v2400 = vsub.s32 %v2397, %v2399
    %v2401 = vrot.slane %v2387, %v2400
    %v2403 = vunpack.c.l.s4 1966171168
    %v2404 = vunpack.c.0.s8 %v2403
    %v2405 = vlaneseq
    %v2406 = vshrl.u32 %v2405, 7
    %v2407 = vsub.s32 %v2404, %v2406
    %v2408 = vrot.slane %v1833, %v2407
    %v2409 = vcombine.high %v2408, %v2408
    %v2411 = vunpack.c.l.s4 1966171168
    %v2412 = vunpack.c.0.s8 %v2411
    %v2413 = vlaneseq
    %v2414 = vshrl.u32 %v2413, 7
    %v2415 = vsub.s32 %v2412, %v2414
    %v2416 = vrot.slane %v2408, %v2415
    %v2418 = vunpack.c.l.s4 1966171168
    %v2419 = vunpack.c.0.s8 %v2418
    %v2420 = vlaneseq
    %v2421 = vshrl.u32 %v2420, 7
    %v2422 = vsub.s32 %v2419, %v2421
    %v2423 = vrot.slane %v2409, %v2422
    %v2425 = vunpack.c.l.s4 1966171168
    %v2426 = vunpack.c.0.s8 %v2425
    %v2427 = vlaneseq
    %v2428 = vshrl.u32 %v2427, 7
    %v2429 = vsub.s32 %v2426, %v2428
    %v2430 = vrot.slane %v1933, %v2429
    %v2431 = vcombine.high %v2430, %v2430
    %v2433 = vunpack.c.l.s4 1966171168
    %v2434 = vunpack.c.0.s8 %v2433
    %v2435 = vlaneseq
    %v2436 = vshrl.u32 %v2435, 7
    %v2437 = vsub.s32 %v2434, %v2436
    %v2438 = vrot.slane %v2430, %v2437
    %v2440 = vunpack.c.l.s4 1966171168
    %v2441 = vunpack.c.0.s8 %v2440
    %v2442 = vlaneseq
    %v2443 = vshrl.u32 %v2442, 7
    %v2444 = vsub.s32 %v2441, %v2443
    %v2445 = vrot.slane %v2431, %v2444
    %v2447 = vunpack.c.l.s4 1966171168
    %v2448 = vunpack.c.0.s8 %v2447
    %v2449 = vlaneseq
    %v2450 = vshrl.u32 %v2449, 7
    %v2451 = vsub.s32 %v2448, %v2450
    %v2452 = vrot.slane %v2033, %v2451
    %v2453 = vcombine.high %v2452, %v2452
    %v2455 = vunpack.c.l.s4 1966171168
    %v2456 = vunpack.c.0.s8 %v2455
    %v2457 = vlaneseq
    %v2458 = vshrl.u32 %v2457, 7
    %v2459 = vsub.s32 %v2456, %v2458
    %v2460 = vrot.slane %v2452, %v2459
    %v2462 = vunpack.c.l.s4 1966171168
    %v2463 = vunpack.c.0.s8 %v2462
    %v2464 = vlaneseq
    %v2465 = vshrl.u32 %v2464, 7
    %v2466 = vsub.s32 %v2463, %v2465
    %v2467 = vrot.slane %v2453, %v2466
    %v2470 = vunpack.c.l.s4 1966171168
    %v2471 = vunpack.c.0.s8 %v2470
    %v2472 = vlaneseq
    %v2473 = vshrl.u32 %v2472, 7
    %v2474 = vsub.s32 %v2471, %v2473
    %v2475 = vrot.slane %v2133, %v2474
    %v2476 = vcombine.high %v2475, %v2475
    %v2478 = vunpack.c.l.s4 1966171168
    %v2479 = vunpack.c.0.s8 %v2478
    %v2480 = vlaneseq
    %v2481 = vshrl.u32 %v2480, 7
    %v2482 = vsub.s32 %v2479, %v2481
    %v2483 = vrot.slane %v2475, %v2482
    %v2485 = vunpack.c.l.s4 1966171168
    %v2486 = vunpack.c.0.s8 %v2485
    %v2487 = vlaneseq
    %v2488 = vshrl.u32 %v2487, 7
    %v2489 = vsub.s32 %v2486, %v2488
    %v2490 = vrot.slane %v2476, %v2489
    %v2491 = vlaneseq
    %v2492 = vshrl.u32 %v2491, 7
    %v2493 = vsub.s32 0, %v2492
    %v2494 = vrot.slane %v2172, %v2493
    %v2495 = vlaneseq
    %v2496 = vshrl.u32 %v2495, 7
    %v2497 = vsub.s32 0, %v2496
    %v2498 = vrot.slane %v2179, %v2497
    %v2501 = vlaneseq
    %v2502 = vshrl.u32 %v2501, 7
    %v2503 = vsub.s32 0, %v2502
    %v2504 = vrot.slane %v2194, %v2503
    %v2505 = vlaneseq
    %v2506 = vshrl.u32 %v2505, 7
    %v2507 = vsub.s32 0, %v2506
    %v2508 = vrot.slane %v2201, %v2507
    %v2511 = vlaneseq
    %v2512 = vshrl.u32 %v2511, 7
    %v2513 = vsub.s32 0, %v2512
    %v2514 = vrot.slane %v2216, %v2513
    %v2515 = vlaneseq
    %v2516 = vshrl.u32 %v2515, 7
    %v2517 = vsub.s32 0, %v2516
    %v2518 = vrot.slane %v2223, %v2517
    %v2521 = vlaneseq
    %v2522 = vshrl.u32 %v2521, 7
    %v2523 = vsub.s32 0, %v2522
    %v2524 = vrot.slane %v2238, %v2523
    %v2525 = vlaneseq
    %v2526 = vshrl.u32 %v2525, 7
    %v2527 = vsub.s32 0, %v2526
    %v2528 = vrot.slane %v2245, %v2527
    %v2531 = vlaneseq
    %v2532 = vshrl.u32 %v2531, 7
    %v2533 = vsub.s32 0, %v2532
    %v2534 = vrot.slane %v2260, %v2533
    %v2535 = vlaneseq
    %v2536 = vshrl.u32 %v2535, 7
    %v2537 = vsub.s32 0, %v2536
    %v2538 = vrot.slane %v2267, %v2537
    %v2541 = vlaneseq
    %v2542 = vshrl.u32 %v2541, 7
    %v2543 = vsub.s32 0, %v2542
    %v2544 = vrot.slane %v2282, %v2543
    %v2545 = vlaneseq
    %v2546 = vshrl.u32 %v2545, 7
    %v2547 = vsub.s32 0, %v2546
    %v2548 = vrot.slane %v2289, %v2547
    %v2551 = vlaneseq
    %v2552 = vshrl.u32 %v2551, 7
    %v2553 = vsub.s32 0, %v2552
    %v2554 = vrot.slane %v2304, %v2553
    %v2555 = vlaneseq
    %v2556 = vshrl.u32 %v2555, 7
    %v2557 = vsub.s32 0, %v2556
    %v2558 = vrot.slane %v2311, %v2557
    %v2561 = vlaneseq
    %v2562 = vshrl.u32 %v2561, 7
    %v2563 = vsub.s32 0, %v2562
    %v2564 = vrot.slane %v2350, %v2563
    %v2565 = vlaneseq
    %v2566 = vshrl.u32 %v2565, 7
    %v2567 = vsub.s32 0, %v2566
    %v2568 = vrot.slane %v2357, %v2567
    %v2571 = vlaneseq
    %v2572 = vshrl.u32 %v2571, 7
    %v2573 = vsub.s32 0, %v2572
    %v2574 = vrot.slane %v2372, %v2573
    %v2575 = vlaneseq
    %v2576 = vshrl.u32 %v2575, 7
    %v2577 = vsub.s32 0, %v2576
    %v2578 = vrot.slane %v2379, %v2577
    %v2581 = vlaneseq
    %v2582 = vshrl.u32 %v2581, 7
    %v2583 = vsub.s32 0, %v2582
    %v2584 = vrot.slane %v2394, %v2583
    %v2585 = vlaneseq
    %v2586 = vshrl.u32 %v2585, 7
    %v2587 = vsub.s32 0, %v2586
    %v2588 = vrot.slane %v2401, %v2587
    %v2591 = vlaneseq
    %v2592 = vshrl.u32 %v2591, 7
    %v2593 = vsub.s32 0, %v2592
    %v2594 = vrot.slane %v2416, %v2593
    %v2595 = vlaneseq
    %v2596 = vshrl.u32 %v2595, 7
    %v2597 = vsub.s32 0, %v2596
    %v2598 = vrot.slane %v2423, %v2597
    %v2601 = vlaneseq
    %v2602 = vshrl.u32 %v2601, 7
    %v2603 = vsub.s32 0, %v2602
    %v2604 = vrot.slane %v2438, %v2603
    %v2605 = vlaneseq
    %v2606 = vshrl.u32 %v2605, 7
    %v2607 = vsub.s32 0, %v2606
    %v2608 = vrot.slane %v2445, %v2607
    %v2611 = vlaneseq
    %v2612 = vshrl.u32 %v2611, 7
    %v2613 = vsub.s32 0, %v2612
    %v2614 = vrot.slane %v2460, %v2613
    %v2615 = vlaneseq
    %v2616 = vshrl.u32 %v2615, 7
    %v2617 = vsub.s32 0, %v2616
    %v2618 = vrot.slane %v2467, %v2617
    %v2621 = vlaneseq
    %v2622 = vshrl.u32 %v2621, 7
    %v2623 = vsub.s32 0, %v2622
    %v2624 = vrot.slane %v2483, %v2623
    %v2625 = vlaneseq
    %v2626 = vshrl.u32 %v2625, 7
    %v2627 = vsub.s32 0, %v2626
    %v2628 = vrot.slane %v2490, %v2627
    %v2631 = vsel %vm496, %v2148, %v2494
    %v2632 = vsel %vm496, %v2155, %v2498
    %vm2633 = vcmask 1041408
    %v2634 = vsel %vm2633, %v2631, %v2504
    %v2635 = vsel %vm2633, %v2632, %v2508
    %vm2636 = vcmask 1042432
    %v2637 = vsel %vm2636, %v2634, %v2514
    %v2638 = vsel %vm2636, %v2635, %v2518
    %vm2639 = vcmask 1043456
    %v2640 = vsel %vm2639, %v2637, %v2524
    %v2641 = vsel %vm2639, %v2638, %v2528
    %vm2642 = vcmask 1044480
    %v2643 = vsel %vm2642, %v2640, %v2534
    %v2644 = vsel %vm2642, %v2641, %v2538
    %vm2645 = vcmask 1045504
    %v2646 = vsel %vm2645, %v2643, %v2544
    %v2647 = vsel %vm2645, %v2644, %v2548
    %vm2648 = vcmask 1046528
    %v2649 = vsel %vm2648, %v2646, %v2554
    %v2650 = vsel %vm2648, %v2647, %v2558
    %v2651 = vsel %vm496, %v2326, %v2564
    %v2652 = vsel %vm496, %v2333, %v2568
    %v2653 = vsel %vm2633, %v2651, %v2574
    %v2654 = vsel %vm2633, %v2652, %v2578
    %v2655 = vsel %vm2636, %v2653, %v2584
    %v2656 = vsel %vm2636, %v2654, %v2588
    %v2657 = vsel %vm2639, %v2655, %v2594
    %v2658 = vsel %vm2639, %v2656, %v2598
    %v2659 = vsel %vm2642, %v2657, %v2604
    %v2660 = vsel %vm2642, %v2658, %v2608
    %v2661 = vsel %vm2645, %v2659, %v2614
    %v2662 = vsel %vm2645, %v2660, %v2618
    %v2663 = vsel %vm2648, %v2661, %v2624
    %v2664 = vsel %vm2648, %v2662, %v2628
    %v2666 = vlaneseq
    %v2667 = vshrl.u32 %v2666, 7
    %v2668 = vsub.s32 0, %v2667
    %v2669 = vrot.slane %v35, %v2668
    %2670 = vrot.lane.b32.xlu0 %v2669, 96
    %v2671 = vpop.permute.xlu0 %2670
    %v2673 = vmul.f32 %v2649, %v2671
    %v2674 = vmul.f32 %v2663, %v2671
    %v2675 = vmul.f32 %v2650, %v2671
    %v2676 = vmul.f32 %v2664, %v2671
    %2681 = vrot.lane.b32.xlu0 %v2673, 32
    %v2682 = vpop.permute.xlu0 %2681
    %2683 = vrot.lane.b32.xlu0 %v2674, 32
    %v2684 = vpop.permute.xlu0 %2683
    %2685 = vrot.lane.b32.xlu0 %v2675, 32
    %v2686 = vpop.permute.xlu0 %2685
    %2687 = vrot.lane.b32.xlu0 %v2676, 32
    %v2688 = vpop.permute.xlu0 %2687
    %v2693 = vsel %vm535, %v2682, 0.0
    %2694 = vadd.xlane.f32.xlu0 %v2693
    %v2695 = vpop.xlane.xlu0 %2694
    %v2696 = vsel %vm535, %v2684, 0.0
    %2697 = vadd.xlane.f32.xlu0 %v2696
    %v2698 = vpop.xlane.xlu0 %2697
    %v2699 = vsel %vm535, %v2686, 0.0
    %2700 = vadd.xlane.f32.xlu0 %v2699
    %v2701 = vpop.xlane.xlu0 %2700
    %v2702 = vsel %vm535, %v2688, 0.0
    %2703 = vadd.xlane.f32.xlu0 %v2702
    %v2704 = vpop.xlane.xlu0 %2703
    %v2705 = vstv %s36
    %v2706 = vadd.f32 %v2695, %v2705
    %v2707 = vadd.f32 %v2698, %v2705
    %v2708 = vadd.f32 %v2701, %v2705
    %v2709 = vadd.f32 %v2704, %v2705
    %v2710 = vxor.u32 %v2706, 2147483648
    %v2711 = vxor.u32 %v2707, 2147483648
    %v2712 = vxor.u32 %v2708, 2147483648
    %v2713 = vxor.u32 %v2709, 2147483648
    %v2714 = vmul.f32 %v2710, 1.442695
    %v2715 = vpow.pop %v2714
    %v2716 = vmul.f32 %v2711, 1.442695
    %v2717 = vpow.pop %v2716
    %v2718 = vmul.f32 %v2712, 1.442695
    %v2719 = vpow.pop %v2718
    %v2720 = vmul.f32 %v2713, 1.442695
    %v2721 = vpow.pop %v2720
    %v2722 = vadd.f32 %v2715, 1.0
    %v2723 = vadd.f32 %v2717, 1.0
    %v2724 = vadd.f32 %v2719, 1.0
    %v2725 = vadd.f32 %v2721, 1.0
    %v2726 = vrcp.pop %v2722
    %v2727 = vmul.f32 1.0, %v2726
    %v2728 = vrcp.pop %v2723
    %v2729 = vmul.f32 1.0, %v2728
    %v2730 = vrcp.pop %v2724
    %v2731 = vmul.f32 1.0, %v2730
    %v2732 = vrcp.pop %v2725
    %v2733 = vmul.f32 1.0, %v2732
    %v2738 = vlaneseq
    %v2739 = vand.u32 %v2738, 127
    %v2740 = vlaneseq
    %v2741 = vshrl.u32 %v2740, 7
    %v2742 = vsub.s32 %v2739, %v2741
    %v2743 = vrot.slane %v2727, %v2742
    %v2744 = vadd.s32 %v2739, 4294967288
    %v2745 = vlaneseq
    %v2746 = vshrl.u32 %v2745, 7
    %v2747 = vsub.s32 %v2744, %v2746
    %v2748 = vrot.slane %v2729, %v2747
    %vm2749 = vcmask 130112
    %v2750 = vsel %vm2749, %v2748, %v2743
    %v2751 = vlaneseq
    %v2752 = vshrl.u32 %v2751, 7
    %v2753 = vsub.s32 %v2739, %v2752
    %v2754 = vrot.slane %v2731, %v2753
    %v2755 = vlaneseq
    %v2756 = vshrl.u32 %v2755, 7
    %v2757 = vsub.s32 %v2744, %v2756
    %v2758 = vrot.slane %v2733, %v2757
    %v2759 = vsel %vm2749, %v2758, %v2754
    %vm2760 = vcmask 1041409
    %v2761 = vsel %vm2760, %v2759, %v2750
    %vm2763 = vcmask 123904
    %2764 = vst.msk [vmem:[#allocation3] sm:$0x3] %vm2763, %v2761
    // Predicated region
    $region26: #{tpu_custom_call.1} parent=1 // pred_check
      _
    $region27: #{tpu_custom_call.1} parent=1 // pred_check_branch
      %2766 = sbr.rel (0) target = $region29
    $region28: #{tpu_custom_call.1} parent=1 // pred_region
      %s2768 = ssub.s32 32, 32
      %2769 = vsyncadd [#allocation4], %s2768
      %s2771 = sshll.u32 [#allocation3], 4
      %s2772 = int_to_ptr.vmem [resolvable:$true] %s2771
      %2774 = dma.vmem_to_hbm [thread:$0]  %s2772, 32, %s6, [#allocation4]
    $region29: #{tpu_custom_call.1} parent=1 // pred_fallthru
      _
    // Predicated region
    $region30: #{tpu_custom_call.1} parent=1 // pred_check
      _
    $region31: #{tpu_custom_call.1} parent=1 // pred_check_branch
      %2776 = sbr.rel (0) target = $region33
    $region32: #{tpu_custom_call.1} parent=1 // pred_region
      %2777 = dma.done [#allocation4], 32
    $region33: #{tpu_custom_call.1} parent=1 // pred_fallthru
      _
    %2778 = vsyncpa [#allocation4], 1

</llo_original>
